<compile_context>
chip_gen: v5e
topology: v5e:2x2
jax: 0.10.0
libtpu: 0.0.40
codegen_flags: <defaults>
</compile_context>

<pallas_src>
import functools

import numpy as np
import jax
import jax.numpy as jnp
from jax import lax
from jax.experimental import pallas as pl
from jax.experimental.pallas import tpu as pltpu

# Fixed MyCnn architecture.  Linear(32*22*4, 36) implies a 100x28 single-channel input.
C1, C2 = 16, 32                      # conv output channels
K = 5                                # 5x5 kernels, stride 1, VALID
H_IN, W_IN = 100, 28
OH1, OW1 = H_IN - K + 1, W_IN - K + 1        # 96, 24
PH1, PW1 = OH1 // 2, OW1 // 2                # 48, 12
OH2, OW2 = PH1 - K + 1, PW1 - K + 1          # 44, 8
PH2, PW2 = OH2 // 2, OW2 // 2                # 22, 4
OUT_FEATURES = 36
FLAT = C2 * PH2 * PW2                        # 2816

LANE1 = OW1 * C1                             # 384  (conv1 lanes: (ow, c1))
LANE1P = PW1 * C1                            # 192  (pooled conv1 lanes)
LANE2 = OW2 * C2                             # 256  (conv2 lanes: (ow, c2))
LANE2P = PW2 * C2                            # 128  (pooled conv2 lanes — lane-dense output)


# ------------------------------ Pallas kernel A: conv1+pool+conv2+pool ------------------------------

def _fused_conv_pool_kernel(x_ref, t_ref, bias1_ref, sa1_ref, sb1_ref, she1_ref, sho1_ref,
                            u_ref, bias2_ref, sa2_ref, sb2_ref, she2_ref, sho2_ref,
                            o_ref, y1p_ref):
    """One batch sample per grid step.  Everything stays in VMEM / vregs."""
    f32 = jnp.float32

    # ---- conv1 (+bias+ReLU): five banded GEMMs, one per kh tap.  lanes = (ow, c1). ----
    y1 = jnp.dot(x_ref[0, 0:OH1, :], t_ref[0], preferred_element_type=f32)
    for i in range(1, K):
        y1 = y1 + jnp.dot(x_ref[0, i:i + OH1, :], t_ref[i], preferred_element_type=f32)
    y1 = jnp.maximum(y1 + bias1_ref[...], 0.0)                                  # (96, 384)

    # ---- 2x2 max-pool #1: width via 0/1 lane-selection GEMMs, height via 0/1 row-selection GEMMs ----
    y1w = jnp.maximum(jnp.dot(y1, sa1_ref[...], preferred_element_type=f32),
                      jnp.dot(y1, sb1_ref[...], preferred_element_type=f32))    # (96, 192)
    y1p_ref[...] = jnp.maximum(jnp.dot(she1_ref[...], y1w, preferred_element_type=f32),
                               jnp.dot(sho1_ref[...], y1w, preferred_element_type=f32))  # (48, 192)

    # ---- conv2 (+bias+ReLU): five banded GEMMs over kh taps, taps sliced from VMEM scratch ----
    y2 = jnp.dot(y1p_ref[0:OH2, :], u_ref[0], preferred_element_type=f32)
    for i in range(1, K):
        y2 = y2 + jnp.dot(y1p_ref[i:i + OH2, :], u_ref[i], preferred_element_type=f32)
    y2 = jnp.maximum(y2 + bias2_ref[...], 0.0)                                  # (44, 256)

    # ---- 2x2 max-pool #2 ----
    y2w = jnp.maximum(jnp.dot(y2, sa2_ref[...], preferred_element_type=f32),
                      jnp.dot(y2, sb2_ref[...], preferred_element_type=f32))    # (44, 128)
    o_ref[0] = jnp.maximum(jnp.dot(she2_ref[...], y2w, preferred_element_type=f32),
                           jnp.dot(sho2_ref[...], y2w, preferred_element_type=f32))      # (22, 128)


def _fused_conv_pool(x0, prep):
    """x0: (B, 100, 28) -> pooled conv features (B, 22, 128) with lanes = (pw2, c2)."""
    B = x0.shape[0]
    consts = (prep["t"], prep["bias1"], prep["sa1"], prep["sb1"], prep["she1"], prep["sho1"],
              prep["u"], prep["bias2"], prep["sa2"], prep["sb2"], prep["she2"], prep["sho2"])

    def _const_spec(a):
        return pl.BlockSpec(a.shape, lambda b, _nd=a.ndim: (0,) * _nd)

    in_specs = [pl.BlockSpec((1, H_IN, W_IN), lambda b: (b, 0, 0))]
    in_specs += [_const_spec(a) for a in consts]

    return pl.pallas_call(
        _fused_conv_pool_kernel,
        out_shape=jax.ShapeDtypeStruct((B, PH2, LANE2P), jnp.float32),
        grid_spec=pltpu.PrefetchScalarGridSpec(
            num_scalar_prefetch=0,
            grid=(B,),
            in_specs=in_specs,
            out_specs=pl.BlockSpec((1, PH2, LANE2P), lambda b: (b, 0, 0)),
            scratch_shapes=[pltpu.VMEM((PH1, LANE1P), jnp.float32)],
        ),
        compiler_params=pltpu.CompilerParams(
            dimension_semantics=("parallel",)),   # shards batch across TCs on v7x
    )(x0, *consts)


# ------------------------------ Pallas kernel B: Linear(2816 -> 36) ------------------------------

def _linear_kernel(x_ref, w_ref, b_ref, o_ref):
    o_ref[...] = (jnp.dot(x_ref[...], w_ref[...], preferred_element_type=jnp.float32)
                  + b_ref[...]).astype(o_ref.dtype)


def _linear(flat, w3p, b3):
    B, Kd = flat.shape
    N = w3p.shape[1]
    return pl.pallas_call(
        _linear_kernel,
        out_shape=jax.ShapeDtypeStruct((B, N), jnp.float32),
        grid_spec=pltpu.PrefetchScalarGridSpec(
            num_scalar_prefetch=0,
            grid=(1,),
            in_specs=[pl.BlockSpec((B, Kd), lambda i: (0, 0)),
                      pl.BlockSpec((Kd, N), lambda i: (0, 0)),
                      pl.BlockSpec((1, N), lambda i: (0, 0))],
            out_specs=pl.BlockSpec((B, N), lambda i: (0, 0)),
        ),
        compiler_params=pltpu.CompilerParams(dimension_semantics=("arbitrary",)),
    )(flat, w3p, b3)


# ----------------------------------------- forward pass -----------------------------------------

@jax.jit
def my_cnn_forward(x, prep):
    """x: (B, 1, 100, 28) float32 NCHW like PyTorch. Returns logits (B, 36)."""
    B = x.shape[0]
    x0 = x[:, 0]                               # (B, 100, 28), in_channels == 1
    pooled = _fused_conv_pool(x0, prep)        # (B, 22, 128), lanes = (pw2, c2)
    flat = pooled.reshape(B, FLAT)             # contiguous -> zero-copy; ordering matched by w3p
    return _linear(flat, prep["w3p"], prep["b3"])


# -------------------------------- host-side one-time weight prep --------------------------------

def prepare_params(params):
    """Rearrange PyTorch-shaped parameters into GEMM-ready constants (done once, outside jit)."""
    w1 = np.asarray(params["w1"], np.float32).reshape(C1, K, K)     # (c1, kh, kw), in_ch == 1
    b1 = np.asarray(params["b1"], np.float32)
    w2 = np.asarray(params["w2"], np.float32)                       # (c2, c1, kh, kw)
    b2 = np.asarray(params["b2"], np.float32)
    w3 = np.asarray(params["w3"], np.float32)                       # (36, 2816), PyTorch order
    b3 = np.asarray(params["b3"], np.float32)

    # conv1 banded weights: one (W_IN, OW1*C1) matrix per kh tap.
    t = np.zeros((K, W_IN, LANE1), np.float32)
    for i in range(K):
        for j in range(K):
            for ow in range(OW1):
                t[i, ow + j, ow * C1:(ow + 1) * C1] = w1[:, i, j]

    # conv2 banded weights: one (PW1*C1, OW2*C2) matrix per kh tap.
    u = np.zeros((K, LANE1P, LANE2), np.float32)
    for i in range(K):
        for j in range(K):
            for ow in range(OW2):
                wp = ow + j
                u[i, wp * C1:(wp + 1) * C1, ow * C2:(ow + 1) * C2] = w2[:, :, i, j].T

    def lane_pool_sel(w_out, c, parity):
        s = np.zeros((2 * w_out * c, w_out * c), np.float32)
        for w in range(w_out):
            for ch in range(c):
                s[(2 * w + parity) * c + ch, w * c + ch] = 1.0
        return s

    def row_pool_sel(h_out, parity):
        s = np.zeros((h_out, 2 * h_out), np.float32)
        s[np.arange(h_out), 2 * np.arange(h_out) + parity] = 1.0
        return s

    # Linear weight reordered to the kernel's (h, w, c) flatten order and pre-transposed -> (2816, 36).
    w3p = w3.reshape(OUT_FEATURES, C2, PH2, PW2).transpose(2, 3, 1, 0).reshape(FLAT, OUT_FEATURES)

    return {
        "t": jnp.asarray(t),
        "bias1": jnp.asarray(np.tile(b1, OW1).reshape(1, LANE1)),
        "sa1": jnp.asarray(lane_pool_sel(PW1, C1, 0)),
        "sb1": jnp.asarray(lane_pool_sel(PW1, C1, 1)),
        "she1": jnp.asarray(row_pool_sel(PH1, 0)),
        "sho1": jnp.asarray(row_pool_sel(PH1, 1)),
        "u": jnp.asarray(u),
        "bias2": jnp.asarray(np.tile(b2, OW2).reshape(1, LANE2)),
        "sa2": jnp.asarray(lane_pool_sel(PW2, C2, 0)),
        "sb2": jnp.asarray(lane_pool_sel(PW2, C2, 1)),
        "she2": jnp.asarray(row_pool_sel(PH2, 0)),
        "sho2": jnp.asarray(row_pool_sel(PH2, 1)),
        "w3p": jnp.asarray(w3p),
        "b3": jnp.asarray(b3.reshape(1, OUT_FEATURES)),
    }


# -------------------------------------- params / reference --------------------------------------

def init_params(key):
    """Deterministic init mirroring the PyTorch module's parameter shapes."""
    ks = jax.random.split(key, 6)

    def u(k, shape, fan_in):
        s = 1.0 / jnp.sqrt(jnp.float32(fan_in))
        return jax.random.uniform(k, shape, jnp.float32, -s, s)

    return {
        "w1": u(ks[0], (C1, 1, K, K), 1 * K * K),
        "b1": u(ks[1], (C1,), 1 * K * K),
        "w2": u(ks[2], (C2, C1, K, K), C1 * K * K),
        "b2": u(ks[3], (C2,), C1 * K * K),
        "w3": u(ks[4], (OUT_FEATURES, FLAT), FLAT),
        "b3": u(ks[5], (OUT_FEATURES,), FLAT),
    }


def reference_forward(x, params):
    """Pure-JAX/XLA reference replicating the PyTorch MyCnn forward exactly."""
    dn = ("NCHW", "OIHW", "NCHW")
    y = lax.conv_general_dilated(x, params["w1"], (1, 1), "VALID", dimension_numbers=dn,
                                 precision=lax.Precision.HIGHEST)
    y = jnp.maximum(y + params["b1"][None, :, None, None], 0.0)
    y = lax.reduce_window(y, -jnp.inf, lax.max, (1, 1, 2, 2), (1, 1, 2, 2), "VALID")
    y = lax.conv_general_dilated(y, params["w2"], (1, 1), "VALID", dimension_numbers=dn,
                                 precision=lax.Precision.HIGHEST)
    y = jnp.maximum(y + params["b2"][None, :, None, None], 0.0)
    y = lax.reduce_window(y, -jnp.inf, lax.max, (1, 1, 2, 2), (1, 1, 2, 2), "VALID")
    y = y.reshape(y.shape[0], -1)
    return jnp.dot(y, params["w3"].T, precision=lax.Precision.HIGHEST) + params["b3"]


if __name__ == "__main__":
    key = jax.random.PRNGKey(0)
    k_param, k_x = jax.random.split(key)

    B = 2
    params = init_params(k_param)
    prep = prepare_params(params)
    x = jax.random.normal(k_x, (B, 1, H_IN, W_IN), jnp.float32)

    out = my_cnn_forward(x, prep)
    out = jax.block_until_ready(out)

    ref = reference_forward(x, params)
    assert out.shape == (B, OUT_FEATURES)
    # Tolerance leaves headroom for the MXU's f32 multi-pass rounding across the chained GEMMs.
    assert jnp.allclose(out, ref, atol=2e-3, rtol=2e-3), "mismatch vs JAX reference"

    print("KERNEL_OK")
</pallas_src>

<mosaic_0001>
module attributes {stable_mosaic.version = 11 : i64} {
  func.func @_fused_conv_pool_kernel(%arg0: i32, %arg1: memref<1x100x28xf32, #tpu.memory_space<vmem>>, %arg2: memref<5x28x384xf32, #tpu.memory_space<vmem>>, %arg3: memref<1x384xf32, #tpu.memory_space<vmem>>, %arg4: memref<384x192xf32, #tpu.memory_space<vmem>>, %arg5: memref<384x192xf32, #tpu.memory_space<vmem>>, %arg6: memref<48x96xf32, #tpu.memory_space<vmem>>, %arg7: memref<48x96xf32, #tpu.memory_space<vmem>>, %arg8: memref<5x192x256xf32, #tpu.memory_space<vmem>>, %arg9: memref<1x256xf32, #tpu.memory_space<vmem>>, %arg10: memref<256x128xf32, #tpu.memory_space<vmem>>, %arg11: memref<256x128xf32, #tpu.memory_space<vmem>>, %arg12: memref<22x44xf32, #tpu.memory_space<vmem>>, %arg13: memref<22x44xf32, #tpu.memory_space<vmem>>, %arg14: memref<1x22x128xf32, #tpu.memory_space<vmem>>, %arg15: memref<48x192xf32, #tpu.memory_space<vmem>>) attributes {dimension_semantics = [#tpu.dimension_semantics<parallel>], iteration_bounds = array<i64: 2>, scalar_prefetch = 0 : i64, scratch_operands = 1 : i64, tpu.core_type = #tpu.core_type<tc>, window_params = [{transform_indices = @transform_0, window_bounds = array<i64: 1, 100, 28>}, {pipeline_mode = #tpu.pipeline_mode<synchronous>, transform_indices = @transform_1, window_bounds = array<i64: 5, 28, 384>}, {pipeline_mode = #tpu.pipeline_mode<synchronous>, transform_indices = @transform_2, window_bounds = array<i64: 1, 384>}, {pipeline_mode = #tpu.pipeline_mode<synchronous>, transform_indices = @transform_3, window_bounds = array<i64: 384, 192>}, {pipeline_mode = #tpu.pipeline_mode<synchronous>, transform_indices = @transform_4, window_bounds = array<i64: 384, 192>}, {pipeline_mode = #tpu.pipeline_mode<synchronous>, transform_indices = @transform_5, window_bounds = array<i64: 48, 96>}, {pipeline_mode = #tpu.pipeline_mode<synchronous>, transform_indices = @transform_6, window_bounds = array<i64: 48, 96>}, {pipeline_mode = #tpu.pipeline_mode<synchronous>, transform_indices = @transform_7, window_bounds = array<i64: 5, 192, 256>}, {pipeline_mode = #tpu.pipeline_mode<synchronous>, transform_indices = @transform_8, window_bounds = array<i64: 1, 256>}, {pipeline_mode = #tpu.pipeline_mode<synchronous>, transform_indices = @transform_9, window_bounds = array<i64: 256, 128>}, {pipeline_mode = #tpu.pipeline_mode<synchronous>, transform_indices = @transform_10, window_bounds = array<i64: 256, 128>}, {pipeline_mode = #tpu.pipeline_mode<synchronous>, transform_indices = @transform_11, window_bounds = array<i64: 22, 44>}, {pipeline_mode = #tpu.pipeline_mode<synchronous>, transform_indices = @transform_12, window_bounds = array<i64: 22, 44>}, {transform_indices = @transform_13, window_bounds = array<i64: 1, 22, 128>}]} {
    %c0 = arith.constant 0 : index
    %c0_0 = arith.constant 0 : index
    %c0_1 = arith.constant 0 : index
    %0 = vector.load %arg1[%c0, %c0_0, %c0_1] : memref<1x100x28xf32, #tpu.memory_space<vmem>>, vector<1x96x28xf32>
    %1 = vector.shape_cast %0 : vector<1x96x28xf32> to vector<96x28xf32>
    %c0_2 = arith.constant 0 : index
    %c0_3 = arith.constant 0 : index
    %c0_4 = arith.constant 0 : index
    %2 = vector.load %arg2[%c0_2, %c0_3, %c0_4] : memref<5x28x384xf32, #tpu.memory_space<vmem>>, vector<1x28x384xf32>
    %3 = vector.shape_cast %2 : vector<1x28x384xf32> to vector<28x384xf32>
    %cst = arith.constant dense<0.000000e+00> : vector<96x384xf32>
    %4 = tpu.matmul %1, %3, %cst {dimension_numbers = #tpu.dot_dimension_numbers<[1], [0], [0], [1], [0, 0, 1, 1], [], []>} : vector<96x28xf32>, vector<28x384xf32>, vector<96x384xf32> -> vector<96x384xf32>
    %c0_5 = arith.constant 0 : index
    %c1 = arith.constant 1 : index
    %c0_6 = arith.constant 0 : index
    %5 = vector.load %arg1[%c0_5, %c1, %c0_6] : memref<1x100x28xf32, #tpu.memory_space<vmem>>, vector<1x96x28xf32>
    %6 = vector.shape_cast %5 : vector<1x96x28xf32> to vector<96x28xf32>
    %c1_7 = arith.constant 1 : index
    %c0_8 = arith.constant 0 : index
    %c0_9 = arith.constant 0 : index
    %7 = vector.load %arg2[%c1_7, %c0_8, %c0_9] : memref<5x28x384xf32, #tpu.memory_space<vmem>>, vector<1x28x384xf32>
    %8 = vector.shape_cast %7 : vector<1x28x384xf32> to vector<28x384xf32>
    %cst_10 = arith.constant dense<0.000000e+00> : vector<96x384xf32>
    %9 = tpu.matmul %6, %8, %cst_10 {dimension_numbers = #tpu.dot_dimension_numbers<[1], [0], [0], [1], [0, 0, 1, 1], [], []>} : vector<96x28xf32>, vector<28x384xf32>, vector<96x384xf32> -> vector<96x384xf32>
    %10 = arith.addf %4, %9 : vector<96x384xf32>
    %c0_11 = arith.constant 0 : index
    %c2 = arith.constant 2 : index
    %c0_12 = arith.constant 0 : index
    %11 = vector.load %arg1[%c0_11, %c2, %c0_12] : memref<1x100x28xf32, #tpu.memory_space<vmem>>, vector<1x96x28xf32>
    %12 = vector.shape_cast %11 : vector<1x96x28xf32> to vector<96x28xf32>
    %c2_13 = arith.constant 2 : index
    %c0_14 = arith.constant 0 : index
    %c0_15 = arith.constant 0 : index
    %13 = vector.load %arg2[%c2_13, %c0_14, %c0_15] : memref<5x28x384xf32, #tpu.memory_space<vmem>>, vector<1x28x384xf32>
    %14 = vector.shape_cast %13 : vector<1x28x384xf32> to vector<28x384xf32>
    %cst_16 = arith.constant dense<0.000000e+00> : vector<96x384xf32>
    %15 = tpu.matmul %12, %14, %cst_16 {dimension_numbers = #tpu.dot_dimension_numbers<[1], [0], [0], [1], [0, 0, 1, 1], [], []>} : vector<96x28xf32>, vector<28x384xf32>, vector<96x384xf32> -> vector<96x384xf32>
    %16 = arith.addf %10, %15 : vector<96x384xf32>
    %c0_17 = arith.constant 0 : index
    %c3 = arith.constant 3 : index
    %c0_18 = arith.constant 0 : index
    %17 = vector.load %arg1[%c0_17, %c3, %c0_18] : memref<1x100x28xf32, #tpu.memory_space<vmem>>, vector<1x96x28xf32>
    %18 = vector.shape_cast %17 : vector<1x96x28xf32> to vector<96x28xf32>
    %c3_19 = arith.constant 3 : index
    %c0_20 = arith.constant 0 : index
    %c0_21 = arith.constant 0 : index
    %19 = vector.load %arg2[%c3_19, %c0_20, %c0_21] : memref<5x28x384xf32, #tpu.memory_space<vmem>>, vector<1x28x384xf32>
    %20 = vector.shape_cast %19 : vector<1x28x384xf32> to vector<28x384xf32>
    %cst_22 = arith.constant dense<0.000000e+00> : vector<96x384xf32>
    %21 = tpu.matmul %18, %20, %cst_22 {dimension_numbers = #tpu.dot_dimension_numbers<[1], [0], [0], [1], [0, 0, 1, 1], [], []>} : vector<96x28xf32>, vector<28x384xf32>, vector<96x384xf32> -> vector<96x384xf32>
    %22 = arith.addf %16, %21 : vector<96x384xf32>
    %c0_23 = arith.constant 0 : index
    %c4 = arith.constant 4 : index
    %c0_24 = arith.constant 0 : index
    %23 = vector.load %arg1[%c0_23, %c4, %c0_24] : memref<1x100x28xf32, #tpu.memory_space<vmem>>, vector<1x96x28xf32>
    %24 = vector.shape_cast %23 : vector<1x96x28xf32> to vector<96x28xf32>
    %c4_25 = arith.constant 4 : index
    %c0_26 = arith.constant 0 : index
    %c0_27 = arith.constant 0 : index
    %25 = vector.load %arg2[%c4_25, %c0_26, %c0_27] : memref<5x28x384xf32, #tpu.memory_space<vmem>>, vector<1x28x384xf32>
    %26 = vector.shape_cast %25 : vector<1x28x384xf32> to vector<28x384xf32>
    %cst_28 = arith.constant dense<0.000000e+00> : vector<96x384xf32>
    %27 = tpu.matmul %24, %26, %cst_28 {dimension_numbers = #tpu.dot_dimension_numbers<[1], [0], [0], [1], [0, 0, 1, 1], [], []>} : vector<96x28xf32>, vector<28x384xf32>, vector<96x384xf32> -> vector<96x384xf32>
    %28 = arith.addf %22, %27 : vector<96x384xf32>
    %c0_29 = arith.constant 0 : index
    %c0_30 = arith.constant 0 : index
    %29 = vector.load %arg3[%c0_29, %c0_30] : memref<1x384xf32, #tpu.memory_space<vmem>>, vector<1x384xf32>
    %30 = vector.broadcast %29 : vector<1x384xf32> to vector<96x384xf32>
    %31 = arith.addf %28, %30 : vector<96x384xf32>
    %cst_31 = arith.constant 0.000000e+00 : f32
    %32 = vector.broadcast %cst_31 : f32 to vector<96x384xf32>
    %33 = arith.maximumf %31, %32 : vector<96x384xf32>
    %c0_32 = arith.constant 0 : index
    %c0_33 = arith.constant 0 : index
    %34 = vector.load %arg4[%c0_32, %c0_33] : memref<384x192xf32, #tpu.memory_space<vmem>>, vector<384x192xf32>
    %cst_34 = arith.constant dense<0.000000e+00> : vector<96x192xf32>
    %35 = tpu.matmul %33, %34, %cst_34 {dimension_numbers = #tpu.dot_dimension_numbers<[1], [0], [0], [1], [0, 0, 1, 1], [], []>} : vector<96x384xf32>, vector<384x192xf32>, vector<96x192xf32> -> vector<96x192xf32>
    %c0_35 = arith.constant 0 : index
    %c0_36 = arith.constant 0 : index
    %36 = vector.load %arg5[%c0_35, %c0_36] : memref<384x192xf32, #tpu.memory_space<vmem>>, vector<384x192xf32>
    %cst_37 = arith.constant dense<0.000000e+00> : vector<96x192xf32>
    %37 = tpu.matmul %33, %36, %cst_37 {dimension_numbers = #tpu.dot_dimension_numbers<[1], [0], [0], [1], [0, 0, 1, 1], [], []>} : vector<96x384xf32>, vector<384x192xf32>, vector<96x192xf32> -> vector<96x192xf32>
    %38 = arith.maximumf %35, %37 : vector<96x192xf32>
    %c0_38 = arith.constant 0 : index
    %c0_39 = arith.constant 0 : index
    %39 = vector.load %arg6[%c0_38, %c0_39] : memref<48x96xf32, #tpu.memory_space<vmem>>, vector<48x96xf32>
    %cst_40 = arith.constant dense<0.000000e+00> : vector<48x192xf32>
    %40 = tpu.matmul %39, %38, %cst_40 {dimension_numbers = #tpu.dot_dimension_numbers<[1], [0], [0], [1], [0, 0, 1, 1], [], []>} : vector<48x96xf32>, vector<96x192xf32>, vector<48x192xf32> -> vector<48x192xf32>
    %c0_41 = arith.constant 0 : index
    %c0_42 = arith.constant 0 : index
    %41 = vector.load %arg7[%c0_41, %c0_42] : memref<48x96xf32, #tpu.memory_space<vmem>>, vector<48x96xf32>
    %cst_43 = arith.constant dense<0.000000e+00> : vector<48x192xf32>
    %42 = tpu.matmul %41, %38, %cst_43 {dimension_numbers = #tpu.dot_dimension_numbers<[1], [0], [0], [1], [0, 0, 1, 1], [], []>} : vector<48x96xf32>, vector<96x192xf32>, vector<48x192xf32> -> vector<48x192xf32>
    %43 = arith.maximumf %40, %42 : vector<48x192xf32>
    %c0_44 = arith.constant 0 : index
    %c0_45 = arith.constant 0 : index
    %44 = vector.load %arg15[%c0_44, %c0_45] : memref<48x192xf32, #tpu.memory_space<vmem>>, vector<48x192xf32>
    tpu.vector_store %arg15[%c0_44, %c0_45], %43 {strides = array<i32>} : memref<48x192xf32, #tpu.memory_space<vmem>>, vector<48x192xf32>,
    %c0_46 = arith.constant 0 : index
    %c0_47 = arith.constant 0 : index
    %45 = vector.load %arg15[%c0_46, %c0_47] : memref<48x192xf32, #tpu.memory_space<vmem>>, vector<44x192xf32>
    %c0_48 = arith.constant 0 : index
    %c0_49 = arith.constant 0 : index
    %c0_50 = arith.constant 0 : index
    %46 = vector.load %arg8[%c0_48, %c0_49, %c0_50] : memref<5x192x256xf32, #tpu.memory_space<vmem>>, vector<1x192x256xf32>
    %47 = vector.shape_cast %46 : vector<1x192x256xf32> to vector<192x256xf32>
    %cst_51 = arith.constant dense<0.000000e+00> : vector<44x256xf32>
    %48 = tpu.matmul %45, %47, %cst_51 {dimension_numbers = #tpu.dot_dimension_numbers<[1], [0], [0], [1], [0, 0, 1, 1], [], []>} : vector<44x192xf32>, vector<192x256xf32>, vector<44x256xf32> -> vector<44x256xf32>
    %c1_52 = arith.constant 1 : index
    %c0_53 = arith.constant 0 : index
    %49 = vector.load %arg15[%c1_52, %c0_53] : memref<48x192xf32, #tpu.memory_space<vmem>>, vector<44x192xf32>
    %c1_54 = arith.constant 1 : index
    %c0_55 = arith.constant 0 : index
    %c0_56 = arith.constant 0 : index
    %50 = vector.load %arg8[%c1_54, %c0_55, %c0_56] : memref<5x192x256xf32, #tpu.memory_space<vmem>>, vector<1x192x256xf32>
    %51 = vector.shape_cast %50 : vector<1x192x256xf32> to vector<192x256xf32>
    %cst_57 = arith.constant dense<0.000000e+00> : vector<44x256xf32>
    %52 = tpu.matmul %49, %51, %cst_57 {dimension_numbers = #tpu.dot_dimension_numbers<[1], [0], [0], [1], [0, 0, 1, 1], [], []>} : vector<44x192xf32>, vector<192x256xf32>, vector<44x256xf32> -> vector<44x256xf32>
    %53 = arith.addf %48, %52 : vector<44x256xf32>
    %c2_58 = arith.constant 2 : index
    %c0_59 = arith.constant 0 : index
    %54 = vector.load %arg15[%c2_58, %c0_59] : memref<48x192xf32, #tpu.memory_space<vmem>>, vector<44x192xf32>
    %c2_60 = arith.constant 2 : index
    %c0_61 = arith.constant 0 : index
    %c0_62 = arith.constant 0 : index
    %55 = vector.load %arg8[%c2_60, %c0_61, %c0_62] : memref<5x192x256xf32, #tpu.memory_space<vmem>>, vector<1x192x256xf32>
    %56 = vector.shape_cast %55 : vector<1x192x256xf32> to vector<192x256xf32>
    %cst_63 = arith.constant dense<0.000000e+00> : vector<44x256xf32>
    %57 = tpu.matmul %54, %56, %cst_63 {dimension_numbers = #tpu.dot_dimension_numbers<[1], [0], [0], [1], [0, 0, 1, 1], [], []>} : vector<44x192xf32>, vector<192x256xf32>, vector<44x256xf32> -> vector<44x256xf32>
    %58 = arith.addf %53, %57 : vector<44x256xf32>
    %c3_64 = arith.constant 3 : index
    %c0_65 = arith.constant 0 : index
    %59 = vector.load %arg15[%c3_64, %c0_65] : memref<48x192xf32, #tpu.memory_space<vmem>>, vector<44x192xf32>
    %c3_66 = arith.constant 3 : index
    %c0_67 = arith.constant 0 : index
    %c0_68 = arith.constant 0 : index
    %60 = vector.load %arg8[%c3_66, %c0_67, %c0_68] : memref<5x192x256xf32, #tpu.memory_space<vmem>>, vector<1x192x256xf32>
    %61 = vector.shape_cast %60 : vector<1x192x256xf32> to vector<192x256xf32>
    %cst_69 = arith.constant dense<0.000000e+00> : vector<44x256xf32>
    %62 = tpu.matmul %59, %61, %cst_69 {dimension_numbers = #tpu.dot_dimension_numbers<[1], [0], [0], [1], [0, 0, 1, 1], [], []>} : vector<44x192xf32>, vector<192x256xf32>, vector<44x256xf32> -> vector<44x256xf32>
    %63 = arith.addf %58, %62 : vector<44x256xf32>
    %c4_70 = arith.constant 4 : index
    %c0_71 = arith.constant 0 : index
    %64 = vector.load %arg15[%c4_70, %c0_71] : memref<48x192xf32, #tpu.memory_space<vmem>>, vector<44x192xf32>
    %c4_72 = arith.constant 4 : index
    %c0_73 = arith.constant 0 : index
    %c0_74 = arith.constant 0 : index
    %65 = vector.load %arg8[%c4_72, %c0_73, %c0_74] : memref<5x192x256xf32, #tpu.memory_space<vmem>>, vector<1x192x256xf32>
    %66 = vector.shape_cast %65 : vector<1x192x256xf32> to vector<192x256xf32>
    %cst_75 = arith.constant dense<0.000000e+00> : vector<44x256xf32>
    %67 = tpu.matmul %64, %66, %cst_75 {dimension_numbers = #tpu.dot_dimension_numbers<[1], [0], [0], [1], [0, 0, 1, 1], [], []>} : vector<44x192xf32>, vector<192x256xf32>, vector<44x256xf32> -> vector<44x256xf32>
    %68 = arith.addf %63, %67 : vector<44x256xf32>
    %c0_76 = arith.constant 0 : index
    %c0_77 = arith.constant 0 : index
    %69 = vector.load %arg9[%c0_76, %c0_77] : memref<1x256xf32, #tpu.memory_space<vmem>>, vector<1x256xf32>
    %70 = vector.broadcast %69 : vector<1x256xf32> to vector<44x256xf32>
    %71 = arith.addf %68, %70 : vector<44x256xf32>
    %cst_78 = arith.constant 0.000000e+00 : f32
    %72 = vector.broadcast %cst_78 : f32 to vector<44x256xf32>
    %73 = arith.maximumf %71, %72 : vector<44x256xf32>
    %c0_79 = arith.constant 0 : index
    %c0_80 = arith.constant 0 : index
    %74 = vector.load %arg10[%c0_79, %c0_80] : memref<256x128xf32, #tpu.memory_space<vmem>>, vector<256x128xf32>
    %cst_81 = arith.constant dense<0.000000e+00> : vector<44x128xf32>
    %75 = tpu.matmul %73, %74, %cst_81 {dimension_numbers = #tpu.dot_dimension_numbers<[1], [0], [0], [1], [0, 0, 1, 1], [], []>} : vector<44x256xf32>, vector<256x128xf32>, vector<44x128xf32> -> vector<44x128xf32>
    %c0_82 = arith.constant 0 : index
    %c0_83 = arith.constant 0 : index
    %76 = vector.load %arg11[%c0_82, %c0_83] : memref<256x128xf32, #tpu.memory_space<vmem>>, vector<256x128xf32>
    %cst_84 = arith.constant dense<0.000000e+00> : vector<44x128xf32>
    %77 = tpu.matmul %73, %76, %cst_84 {dimension_numbers = #tpu.dot_dimension_numbers<[1], [0], [0], [1], [0, 0, 1, 1], [], []>} : vector<44x256xf32>, vector<256x128xf32>, vector<44x128xf32> -> vector<44x128xf32>
    %78 = arith.maximumf %75, %77 : vector<44x128xf32>
    %c0_85 = arith.constant 0 : index
    %c0_86 = arith.constant 0 : index
    %79 = vector.load %arg12[%c0_85, %c0_86] : memref<22x44xf32, #tpu.memory_space<vmem>>, vector<22x44xf32>
    %cst_87 = arith.constant dense<0.000000e+00> : vector<22x128xf32>
    %80 = tpu.matmul %79, %78, %cst_87 {dimension_numbers = #tpu.dot_dimension_numbers<[1], [0], [0], [1], [0, 0, 1, 1], [], []>} : vector<22x44xf32>, vector<44x128xf32>, vector<22x128xf32> -> vector<22x128xf32>
    %c0_88 = arith.constant 0 : index
    %c0_89 = arith.constant 0 : index
    %81 = vector.load %arg13[%c0_88, %c0_89] : memref<22x44xf32, #tpu.memory_space<vmem>>, vector<22x44xf32>
    %cst_90 = arith.constant dense<0.000000e+00> : vector<22x128xf32>
    %82 = tpu.matmul %81, %78, %cst_90 {dimension_numbers = #tpu.dot_dimension_numbers<[1], [0], [0], [1], [0, 0, 1, 1], [], []>} : vector<22x44xf32>, vector<44x128xf32>, vector<22x128xf32> -> vector<22x128xf32>
    %83 = arith.maximumf %80, %82 : vector<22x128xf32>
    %c0_91 = arith.constant 0 : index
    %c0_92 = arith.constant 0 : index
    %c0_93 = arith.constant 0 : index
    %84 = vector.load %arg14[%c0_91, %c0_92, %c0_93] : memref<1x22x128xf32, #tpu.memory_space<vmem>>, vector<1x22x128xf32>
    %85 = vector.shape_cast %84 : vector<1x22x128xf32> to vector<22x128xf32>
    %86 = vector.shape_cast %83 : vector<22x128xf32> to vector<1x22x128xf32>
    tpu.vector_store %arg14[%c0_91, %c0_92, %c0_93], %86 {strides = array<i32>} : memref<1x22x128xf32, #tpu.memory_space<vmem>>, vector<1x22x128xf32>,
    return
  }
  func.func @transform_0(%arg0: i32) -> (i32, i32, i32) {
    %c0_i32 = arith.constant 0 : i32
    %c0_i32_0 = arith.constant 0 : i32
    %c0_i32_1 = arith.constant 0 : i32
    return %arg0, %c0_i32, %c0_i32_0 : i32, i32, i32
  }
  func.func @transform_1(%arg0: i32) -> (i32, i32, i32) {
    %c0_i32 = arith.constant 0 : i32
    %c0_i32_0 = arith.constant 0 : i32
    %c0_i32_1 = arith.constant 0 : i32
    %c0_i32_2 = arith.constant 0 : i32
    return %c0_i32, %c0_i32_0, %c0_i32_1 : i32, i32, i32
  }
  func.func @transform_2(%arg0: i32) -> (i32, i32) {
    %c0_i32 = arith.constant 0 : i32
    %c0_i32_0 = arith.constant 0 : i32
    %c0_i32_1 = arith.constant 0 : i32
    return %c0_i32, %c0_i32_0 : i32, i32
  }
  func.func @transform_3(%arg0: i32) -> (i32, i32) {
    %c0_i32 = arith.constant 0 : i32
    %c0_i32_0 = arith.constant 0 : i32
    %c0_i32_1 = arith.constant 0 : i32
    return %c0_i32, %c0_i32_0 : i32, i32
  }
  func.func @transform_4(%arg0: i32) -> (i32, i32) {
    %c0_i32 = arith.constant 0 : i32
    %c0_i32_0 = arith.constant 0 : i32
    %c0_i32_1 = arith.constant 0 : i32
    return %c0_i32, %c0_i32_0 : i32, i32
  }
  func.func @transform_5(%arg0: i32) -> (i32, i32) {
    %c0_i32 = arith.constant 0 : i32
    %c0_i32_0 = arith.constant 0 : i32
    %c0_i32_1 = arith.constant 0 : i32
    return %c0_i32, %c0_i32_0 : i32, i32
  }
  func.func @transform_6(%arg0: i32) -> (i32, i32) {
    %c0_i32 = arith.constant 0 : i32
    %c0_i32_0 = arith.constant 0 : i32
    %c0_i32_1 = arith.constant 0 : i32
    return %c0_i32, %c0_i32_0 : i32, i32
  }
  func.func @transform_7(%arg0: i32) -> (i32, i32, i32) {
    %c0_i32 = arith.constant 0 : i32
    %c0_i32_0 = arith.constant 0 : i32
    %c0_i32_1 = arith.constant 0 : i32
    %c0_i32_2 = arith.constant 0 : i32
    return %c0_i32, %c0_i32_0, %c0_i32_1 : i32, i32, i32
  }
  func.func @transform_8(%arg0: i32) -> (i32, i32) {
    %c0_i32 = arith.constant 0 : i32
    %c0_i32_0 = arith.constant 0 : i32
    %c0_i32_1 = arith.constant 0 : i32
    return %c0_i32, %c0_i32_0 : i32, i32
  }
  func.func @transform_9(%arg0: i32) -> (i32, i32) {
    %c0_i32 = arith.constant 0 : i32
    %c0_i32_0 = arith.constant 0 : i32
    %c0_i32_1 = arith.constant 0 : i32
    return %c0_i32, %c0_i32_0 : i32, i32
  }
  func.func @transform_10(%arg0: i32) -> (i32, i32) {
    %c0_i32 = arith.constant 0 : i32
    %c0_i32_0 = arith.constant 0 : i32
    %c0_i32_1 = arith.constant 0 : i32
    return %c0_i32, %c0_i32_0 : i32, i32
  }
  func.func @transform_11(%arg0: i32) -> (i32, i32) {
    %c0_i32 = arith.constant 0 : i32
    %c0_i32_0 = arith.constant 0 : i32
    %c0_i32_1 = arith.constant 0 : i32
    return %c0_i32, %c0_i32_0 : i32, i32
  }
  func.func @transform_12(%arg0: i32) -> (i32, i32) {
    %c0_i32 = arith.constant 0 : i32
    %c0_i32_0 = arith.constant 0 : i32
    %c0_i32_1 = arith.constant 0 : i32
    return %c0_i32, %c0_i32_0 : i32, i32
  }
  func.func @transform_13(%arg0: i32) -> (i32, i32, i32) {
    %c0_i32 = arith.constant 0 : i32
    %c0_i32_0 = arith.constant 0 : i32
    %c0_i32_1 = arith.constant 0 : i32
    return %arg0, %c0_i32, %c0_i32_0 : i32, i32, i32
  }
}

module attributes {stable_mosaic.version = 11 : i64} {
  func.func @_linear_kernel(%arg0: i32, %arg1: memref<2x2816xf32, #tpu.memory_space<vmem>>, %arg2: memref<2816x36xf32, #tpu.memory_space<vmem>>, %arg3: memref<1x36xf32, #tpu.memory_space<vmem>>, %arg4: memref<2x36xf32, #tpu.memory_space<vmem>>) attributes {dimension_semantics = [#tpu.dimension_semantics<arbitrary>], iteration_bounds = array<i64: 1>, scalar_prefetch = 0 : i64, scratch_operands = 0 : i64, tpu.core_type = #tpu.core_type<tc>, window_params = [{pipeline_mode = #tpu.pipeline_mode<synchronous>, transform_indices = @transform_0, window_bounds = array<i64: 2, 2816>}, {pipeline_mode = #tpu.pipeline_mode<synchronous>, transform_indices = @transform_1, window_bounds = array<i64: 2816, 36>}, {pipeline_mode = #tpu.pipeline_mode<synchronous>, transform_indices = @transform_2, window_bounds = array<i64: 1, 36>}, {pipeline_mode = #tpu.pipeline_mode<synchronous>, transform_indices = @transform_3, window_bounds = array<i64: 2, 36>}]} {
    %c0 = arith.constant 0 : index
    %c0_0 = arith.constant 0 : index
    %0 = vector.load %arg1[%c0, %c0_0] : memref<2x2816xf32, #tpu.memory_space<vmem>>, vector<2x2816xf32>
    %c0_1 = arith.constant 0 : index
    %c0_2 = arith.constant 0 : index
    %1 = vector.load %arg2[%c0_1, %c0_2] : memref<2816x36xf32, #tpu.memory_space<vmem>>, vector<2816x36xf32>
    %cst = arith.constant dense<0.000000e+00> : vector<2x36xf32>
    %2 = tpu.matmul %0, %1, %cst {dimension_numbers = #tpu.dot_dimension_numbers<[1], [0], [0], [1], [0, 0, 1, 1], [], []>} : vector<2x2816xf32>, vector<2816x36xf32>, vector<2x36xf32> -> vector<2x36xf32>
    %c0_3 = arith.constant 0 : index
    %c0_4 = arith.constant 0 : index
    %3 = vector.load %arg3[%c0_3, %c0_4] : memref<1x36xf32, #tpu.memory_space<vmem>>, vector<1x36xf32>
    %4 = vector.broadcast %3 : vector<1x36xf32> to vector<2x36xf32>
    %5 = arith.addf %2, %4 : vector<2x36xf32>
    %c0_5 = arith.constant 0 : index
    %c0_6 = arith.constant 0 : index
    %6 = vector.load %arg4[%c0_5, %c0_6] : memref<2x36xf32, #tpu.memory_space<vmem>>, vector<2x36xf32>
    tpu.vector_store %arg4[%c0_5, %c0_6], %5 {strides = array<i32>} : memref<2x36xf32, #tpu.memory_space<vmem>>, vector<2x36xf32>,
    return
  }
  func.func @transform_0(%arg0: i32) -> (i32, i32) {
    %c0_i32 = arith.constant 0 : i32
    %c0_i32_0 = arith.constant 0 : i32
    %c0_i32_1 = arith.constant 0 : i32
    return %c0_i32, %c0_i32_0 : i32, i32
  }
  func.func @transform_1(%arg0: i32) -> (i32, i32) {
    %c0_i32 = arith.constant 0 : i32
    %c0_i32_0 = arith.constant 0 : i32
    %c0_i32_1 = arith.constant 0 : i32
    return %c0_i32, %c0_i32_0 : i32, i32
  }
  func.func @transform_2(%arg0: i32) -> (i32, i32) {
    %c0_i32 = arith.constant 0 : i32
    %c0_i32_0 = arith.constant 0 : i32
    %c0_i32_1 = arith.constant 0 : i32
    return %c0_i32, %c0_i32_0 : i32, i32
  }
  func.func @transform_3(%arg0: i32) -> (i32, i32) {
    %c0_i32 = arith.constant 0 : i32
    %c0_i32_0 = arith.constant 0 : i32
    %c0_i32_1 = arith.constant 0 : i32
    return %c0_i32, %c0_i32_0 : i32, i32
  }
}

</mosaic_0001>

<llo_original>
// kernel: my_cnn_forward.3
$region0: #{my_cnn_forward.3}
  #allocation0 [shape = 'u32[]', space=smem, size = 0x4, offset = 0x4, fixed_abs, tag = 'smem constant byte address 0x4 - core index']
  #allocation1 [shape = 'u32[72,128]{1,0:T(1,128)}', space=vmem, size = 0x9000, scoped, tag = 'internal scratch']
  %s0 = inlined_call_operand.vmem [shape: f32[2,2816], index: 0, kind: input, shape index: {}]
  %s1 = inlined_call_operand.vmem [shape: f32[2816,36], index: 1, kind: input, shape index: {}]
  %s2 = inlined_call_operand.vmem [shape: f32[1,36], index: 2, kind: input, shape index: {}]
  %s3 = inlined_call_operand.hbm [shape: f32[2,36], index: 3, kind: output, shape index: {}]
  %s4 = sld [smem:[#allocation0]]
  $region22: #{my_cnn_forward.3} parent=0
    _
  %s6 = ssub.s32 1, %s4
  %s7 = scalar_select 0, %s6, %s4
  $region1: #{my_cnn_forward.3} parent=0
    #allocation2 [shape = 'u8[1024]{0}', space=vmem, size = 0x400, scoped, tag = 'output window, operand 0, single buffered']
    #allocation3 [shape = 's32[1]{0}', space=sflag, size = 0x4, scoped, tag = 'scoped memory for my_cnn_forward.3']
    %8 = vsyncpa [#allocation3], 0
    // Predicated region
    $region2: #{my_cnn_forward.3} parent=1 // pred_check
      _
    $region3: #{my_cnn_forward.3} parent=1 // pred_check_branch
      %10 = sbr.rel (0) target = $region5
    $region4: #{my_cnn_forward.3} parent=1 // pred_region
      _
    $region5: #{my_cnn_forward.3} parent=1 // pred_fallthru
      _
    // Predicated region
    $region6: #{my_cnn_forward.3} parent=1 // pred_check
      _
    $region7: #{my_cnn_forward.3} parent=1 // pred_check_branch
      %12 = sbr.rel (0) target = $region9
    $region8: #{my_cnn_forward.3} parent=1 // pred_region
      _
    $region9: #{my_cnn_forward.3} parent=1 // pred_fallthru
      _
    // Predicated region
    $region10: #{my_cnn_forward.3} parent=1 // pred_check
      _
    $region11: #{my_cnn_forward.3} parent=1 // pred_check_branch
      %14 = sbr.rel (0) target = $region13
    $region12: #{my_cnn_forward.3} parent=1 // pred_region
      _
    $region13: #{my_cnn_forward.3} parent=1 // pred_fallthru
      _
    %v15 = vld [vmem:[%s0] sm:$0xff]
    %v16 = vld [vmem:[%s0 + $0x8] sm:$0xff]
    %v17 = vld [vmem:[%s0 + $0x10] sm:$0xff]
    %v18 = vld [vmem:[%s0 + $0x18] sm:$0xff]
    %v19 = vld [vmem:[%s0 + $0x20] sm:$0xff]
    %v20 = vld [vmem:[%s0 + $0x28] sm:$0xf]
    %v21 = vld [vmem:[%s1] sm:$0xff]
    %v22 = vld [vmem:[%s1 + $0x8] sm:$0xff]
    %v23 = vld [vmem:[%s1 + $0x10] sm:$0xff]
    %v24 = vld [vmem:[%s1 + $0x18] sm:$0xff]
    %v25 = vld [vmem:[%s1 + $0x20] sm:$0xff]
    %v26 = vld [vmem:[%s1 + $0x28] sm:$0xff]
    %v27 = vld [vmem:[%s1 + $0x30] sm:$0xff]
    %v28 = vld [vmem:[%s1 + $0x38] sm:$0xff]
    %v29 = vld [vmem:[%s1 + $0x40] sm:$0xff]
    %v30 = vld [vmem:[%s1 + $0x48] sm:$0xff]
    %v31 = vld [vmem:[%s1 + $0x50] sm:$0xff]
    %v32 = vld [vmem:[%s1 + $0x58] sm:$0xff]
    %v33 = vld [vmem:[%s1 + $0x60] sm:$0xff]
    %v34 = vld [vmem:[%s1 + $0x68] sm:$0xff]
    %v35 = vld [vmem:[%s1 + $0x70] sm:$0xff]
    %v36 = vld [vmem:[%s1 + $0x78] sm:$0xff]
    %v37 = vld [vmem:[%s1 + $0x80] sm:$0xff]
    %v38 = vld [vmem:[%s1 + $0x88] sm:$0xff]
    %v39 = vld [vmem:[%s1 + $0x90] sm:$0xff]
    %v40 = vld [vmem:[%s1 + $0x98] sm:$0xff]
    %v41 = vld [vmem:[%s1 + $0xa0] sm:$0xff]
    %v42 = vld [vmem:[%s1 + $0xa8] sm:$0xff]
    %v43 = vld [vmem:[%s1 + $0xb0] sm:$0xff]
    %v44 = vld [vmem:[%s1 + $0xb8] sm:$0xff]
    %v45 = vld [vmem:[%s1 + $0xc0] sm:$0xff]
    %v46 = vld [vmem:[%s1 + $0xc8] sm:$0xff]
    %v47 = vld [vmem:[%s1 + $0xd0] sm:$0xff]
    %v48 = vld [vmem:[%s1 + $0xd8] sm:$0xff]
    %v49 = vld [vmem:[%s1 + $0xe0] sm:$0xff]
    %v50 = vld [vmem:[%s1 + $0xe8] sm:$0xff]
    %v51 = vld [vmem:[%s1 + $0xf0] sm:$0xff]
    %v52 = vld [vmem:[%s1 + $0xf8] sm:$0xff]
    %v53 = vld [vmem:[%s1 + $0x100] sm:$0xff]
    %v54 = vld [vmem:[%s1 + $0x108] sm:$0xff]
    %v55 = vld [vmem:[%s1 + $0x110] sm:$0xff]
    %v56 = vld [vmem:[%s1 + $0x118] sm:$0xff]
    %v57 = vld [vmem:[%s1 + $0x120] sm:$0xff]
    %v58 = vld [vmem:[%s1 + $0x128] sm:$0xff]
    %v59 = vld [vmem:[%s1 + $0x130] sm:$0xff]
    %v60 = vld [vmem:[%s1 + $0x138] sm:$0xff]
    %v61 = vld [vmem:[%s1 + $0x140] sm:$0xff]
    %v62 = vld [vmem:[%s1 + $0x148] sm:$0xff]
    %v63 = vld [vmem:[%s1 + $0x150] sm:$0xff]
    %v64 = vld [vmem:[%s1 + $0x158] sm:$0xff]
    %v65 = vld [vmem:[%s1 + $0x160] sm:$0xff]
    %v66 = vld [vmem:[%s1 + $0x168] sm:$0xff]
    %v67 = vld [vmem:[%s1 + $0x170] sm:$0xff]
    %v68 = vld [vmem:[%s1 + $0x178] sm:$0xff]
    %v69 = vld [vmem:[%s1 + $0x180] sm:$0xff]
    %v70 = vld [vmem:[%s1 + $0x188] sm:$0xff]
    %v71 = vld [vmem:[%s1 + $0x190] sm:$0xff]
    %v72 = vld [vmem:[%s1 + $0x198] sm:$0xff]
    %v73 = vld [vmem:[%s1 + $0x1a0] sm:$0xff]
    %v74 = vld [vmem:[%s1 + $0x1a8] sm:$0xff]
    %v75 = vld [vmem:[%s1 + $0x1b0] sm:$0xff]
    %v76 = vld [vmem:[%s1 + $0x1b8] sm:$0xff]
    %v77 = vld [vmem:[%s1 + $0x1c0] sm:$0xff]
    %v78 = vld [vmem:[%s1 + $0x1c8] sm:$0xff]
    %v79 = vld [vmem:[%s1 + $0x1d0] sm:$0xff]
    %v80 = vld [vmem:[%s1 + $0x1d8] sm:$0xff]
    %v81 = vld [vmem:[%s1 + $0x1e0] sm:$0xff]
    %v82 = vld [vmem:[%s1 + $0x1e8] sm:$0xff]
    %v83 = vld [vmem:[%s1 + $0x1f0] sm:$0xff]
    %v84 = vld [vmem:[%s1 + $0x1f8] sm:$0xff]
    %v85 = vld [vmem:[%s1 + $0x200] sm:$0xff]
    %v86 = vld [vmem:[%s1 + $0x208] sm:$0xff]
    %v87 = vld [vmem:[%s1 + $0x210] sm:$0xff]
    %v88 = vld [vmem:[%s1 + $0x218] sm:$0xff]
    %v89 = vld [vmem:[%s1 + $0x220] sm:$0xff]
    %v90 = vld [vmem:[%s1 + $0x228] sm:$0xff]
    %v91 = vld [vmem:[%s1 + $0x230] sm:$0xff]
    %v92 = vld [vmem:[%s1 + $0x238] sm:$0xff]
    %v93 = vld [vmem:[%s1 + $0x240] sm:$0xff]
    %v94 = vld [vmem:[%s1 + $0x248] sm:$0xff]
    %v95 = vld [vmem:[%s1 + $0x250] sm:$0xff]
    %v96 = vld [vmem:[%s1 + $0x258] sm:$0xff]
    %v97 = vld [vmem:[%s1 + $0x260] sm:$0xff]
    %v98 = vld [vmem:[%s1 + $0x268] sm:$0xff]
    %v99 = vld [vmem:[%s1 + $0x270] sm:$0xff]
    %v100 = vld [vmem:[%s1 + $0x278] sm:$0xff]
    %v101 = vld [vmem:[%s1 + $0x280] sm:$0xff]
    %v102 = vld [vmem:[%s1 + $0x288] sm:$0xff]
    %v103 = vld [vmem:[%s1 + $0x290] sm:$0xff]
    %v104 = vld [vmem:[%s1 + $0x298] sm:$0xff]
    %v105 = vld [vmem:[%s1 + $0x2a0] sm:$0xff]
    %v106 = vld [vmem:[%s1 + $0x2a8] sm:$0xff]
    %v107 = vld [vmem:[%s1 + $0x2b0] sm:$0xff]
    %v108 = vld [vmem:[%s1 + $0x2b8] sm:$0xff]
    %v109 = vld [vmem:[%s1 + $0x2c0] sm:$0xff]
    %v110 = vld [vmem:[%s1 + $0x2c8] sm:$0xff]
    %v111 = vld [vmem:[%s1 + $0x2d0] sm:$0xff]
    %v112 = vld [vmem:[%s1 + $0x2d8] sm:$0xff]
    %v113 = vld [vmem:[%s1 + $0x2e0] sm:$0xff]
    %v114 = vld [vmem:[%s1 + $0x2e8] sm:$0xff]
    %v115 = vld [vmem:[%s1 + $0x2f0] sm:$0xff]
    %v116 = vld [vmem:[%s1 + $0x2f8] sm:$0xff]
    %v117 = vld [vmem:[%s1 + $0x300] sm:$0xff]
    %v118 = vld [vmem:[%s1 + $0x308] sm:$0xff]
    %v119 = vld [vmem:[%s1 + $0x310] sm:$0xff]
    %v120 = vld [vmem:[%s1 + $0x318] sm:$0xff]
    %v121 = vld [vmem:[%s1 + $0x320] sm:$0xff]
    %v122 = vld [vmem:[%s1 + $0x328] sm:$0xff]
    %v123 = vld [vmem:[%s1 + $0x330] sm:$0xff]
    %v124 = vld [vmem:[%s1 + $0x338] sm:$0xff]
    %v125 = vld [vmem:[%s1 + $0x340] sm:$0xff]
    %v126 = vld [vmem:[%s1 + $0x348] sm:$0xff]
    %v127 = vld [vmem:[%s1 + $0x350] sm:$0xff]
    %v128 = vld [vmem:[%s1 + $0x358] sm:$0xff]
    %v129 = vld [vmem:[%s1 + $0x360] sm:$0xff]
    %v130 = vld [vmem:[%s1 + $0x368] sm:$0xff]
    %v131 = vld [vmem:[%s1 + $0x370] sm:$0xff]
    %v132 = vld [vmem:[%s1 + $0x378] sm:$0xff]
    %v133 = vld [vmem:[%s1 + $0x380] sm:$0xff]
    %v134 = vld [vmem:[%s1 + $0x388] sm:$0xff]
    %v135 = vld [vmem:[%s1 + $0x390] sm:$0xff]
    %v136 = vld [vmem:[%s1 + $0x398] sm:$0xff]
    %v137 = vld [vmem:[%s1 + $0x3a0] sm:$0xff]
    %v138 = vld [vmem:[%s1 + $0x3a8] sm:$0xff]
    %v139 = vld [vmem:[%s1 + $0x3b0] sm:$0xff]
    %v140 = vld [vmem:[%s1 + $0x3b8] sm:$0xff]
    %v141 = vld [vmem:[%s1 + $0x3c0] sm:$0xff]
    %v142 = vld [vmem:[%s1 + $0x3c8] sm:$0xff]
    %v143 = vld [vmem:[%s1 + $0x3d0] sm:$0xff]
    %v144 = vld [vmem:[%s1 + $0x3d8] sm:$0xff]
    %v145 = vld [vmem:[%s1 + $0x3e0] sm:$0xff]
    %v146 = vld [vmem:[%s1 + $0x3e8] sm:$0xff]
    %v147 = vld [vmem:[%s1 + $0x3f0] sm:$0xff]
    %v148 = vld [vmem:[%s1 + $0x3f8] sm:$0xff]
    %v149 = vld [vmem:[%s1 + $0x400] sm:$0xff]
    %v150 = vld [vmem:[%s1 + $0x408] sm:$0xff]
    %v151 = vld [vmem:[%s1 + $0x410] sm:$0xff]
    %v152 = vld [vmem:[%s1 + $0x418] sm:$0xff]
    %v153 = vld [vmem:[%s1 + $0x420] sm:$0xff]
    %v154 = vld [vmem:[%s1 + $0x428] sm:$0xff]
    %v155 = vld [vmem:[%s1 + $0x430] sm:$0xff]
    %v156 = vld [vmem:[%s1 + $0x438] sm:$0xff]
    %v157 = vld [vmem:[%s1 + $0x440] sm:$0xff]
    %v158 = vld [vmem:[%s1 + $0x448] sm:$0xff]
    %v159 = vld [vmem:[%s1 + $0x450] sm:$0xff]
    %v160 = vld [vmem:[%s1 + $0x458] sm:$0xff]
    %v161 = vld [vmem:[%s1 + $0x460] sm:$0xff]
    %v162 = vld [vmem:[%s1 + $0x468] sm:$0xff]
    %v163 = vld [vmem:[%s1 + $0x470] sm:$0xff]
    %v164 = vld [vmem:[%s1 + $0x478] sm:$0xff]
    %v165 = vld [vmem:[%s1 + $0x480] sm:$0xff]
    %v166 = vld [vmem:[%s1 + $0x488] sm:$0xff]
    %v167 = vld [vmem:[%s1 + $0x490] sm:$0xff]
    %v168 = vld [vmem:[%s1 + $0x498] sm:$0xff]
    %v169 = vld [vmem:[%s1 + $0x4a0] sm:$0xff]
    %v170 = vld [vmem:[%s1 + $0x4a8] sm:$0xff]
    %v171 = vld [vmem:[%s1 + $0x4b0] sm:$0xff]
    %v172 = vld [vmem:[%s1 + $0x4b8] sm:$0xff]
    %v173 = vld [vmem:[%s1 + $0x4c0] sm:$0xff]
    %v174 = vld [vmem:[%s1 + $0x4c8] sm:$0xff]
    %v175 = vld [vmem:[%s1 + $0x4d0] sm:$0xff]
    %v176 = vld [vmem:[%s1 + $0x4d8] sm:$0xff]
    %v177 = vld [vmem:[%s1 + $0x4e0] sm:$0xff]
    %v178 = vld [vmem:[%s1 + $0x4e8] sm:$0xff]
    %v179 = vld [vmem:[%s1 + $0x4f0] sm:$0xff]
    %v180 = vld [vmem:[%s1 + $0x4f8] sm:$0xff]
    %v181 = vld [vmem:[%s1 + $0x500] sm:$0xff]
    %v182 = vld [vmem:[%s1 + $0x508] sm:$0xff]
    %v183 = vld [vmem:[%s1 + $0x510] sm:$0xff]
    %v184 = vld [vmem:[%s1 + $0x518] sm:$0xff]
    %v185 = vld [vmem:[%s1 + $0x520] sm:$0xff]
    %v186 = vld [vmem:[%s1 + $0x528] sm:$0xff]
    %v187 = vld [vmem:[%s1 + $0x530] sm:$0xff]
    %v188 = vld [vmem:[%s1 + $0x538] sm:$0xff]
    %v189 = vld [vmem:[%s1 + $0x540] sm:$0xff]
    %v190 = vld [vmem:[%s1 + $0x548] sm:$0xff]
    %v191 = vld [vmem:[%s1 + $0x550] sm:$0xff]
    %v192 = vld [vmem:[%s1 + $0x558] sm:$0xff]
    %v193 = vld [vmem:[%s1 + $0x560] sm:$0xff]
    %v194 = vld [vmem:[%s1 + $0x568] sm:$0xff]
    %v195 = vld [vmem:[%s1 + $0x570] sm:$0xff]
    %v196 = vld [vmem:[%s1 + $0x578] sm:$0xff]
    %v197 = vld [vmem:[%s1 + $0x580] sm:$0xff]
    %v198 = vld [vmem:[%s1 + $0x588] sm:$0xff]
    %v199 = vld [vmem:[%s1 + $0x590] sm:$0xff]
    %v200 = vld [vmem:[%s1 + $0x598] sm:$0xff]
    %v201 = vld [vmem:[%s1 + $0x5a0] sm:$0xff]
    %v202 = vld [vmem:[%s1 + $0x5a8] sm:$0xff]
    %v203 = vld [vmem:[%s1 + $0x5b0] sm:$0xff]
    %v204 = vld [vmem:[%s1 + $0x5b8] sm:$0xff]
    %v205 = vld [vmem:[%s1 + $0x5c0] sm:$0xff]
    %v206 = vld [vmem:[%s1 + $0x5c8] sm:$0xff]
    %v207 = vld [vmem:[%s1 + $0x5d0] sm:$0xff]
    %v208 = vld [vmem:[%s1 + $0x5d8] sm:$0xff]
    %v209 = vld [vmem:[%s1 + $0x5e0] sm:$0xff]
    %v210 = vld [vmem:[%s1 + $0x5e8] sm:$0xff]
    %v211 = vld [vmem:[%s1 + $0x5f0] sm:$0xff]
    %v212 = vld [vmem:[%s1 + $0x5f8] sm:$0xff]
    %v213 = vld [vmem:[%s1 + $0x600] sm:$0xff]
    %v214 = vld [vmem:[%s1 + $0x608] sm:$0xff]
    %v215 = vld [vmem:[%s1 + $0x610] sm:$0xff]
    %v216 = vld [vmem:[%s1 + $0x618] sm:$0xff]
    %v217 = vld [vmem:[%s1 + $0x620] sm:$0xff]
    %v218 = vld [vmem:[%s1 + $0x628] sm:$0xff]
    %v219 = vld [vmem:[%s1 + $0x630] sm:$0xff]
    %v220 = vld [vmem:[%s1 + $0x638] sm:$0xff]
    %v221 = vld [vmem:[%s1 + $0x640] sm:$0xff]
    %v222 = vld [vmem:[%s1 + $0x648] sm:$0xff]
    %v223 = vld [vmem:[%s1 + $0x650] sm:$0xff]
    %v224 = vld [vmem:[%s1 + $0x658] sm:$0xff]
    %v225 = vld [vmem:[%s1 + $0x660] sm:$0xff]
    %v226 = vld [vmem:[%s1 + $0x668] sm:$0xff]
    %v227 = vld [vmem:[%s1 + $0x670] sm:$0xff]
    %v228 = vld [vmem:[%s1 + $0x678] sm:$0xff]
    %v229 = vld [vmem:[%s1 + $0x680] sm:$0xff]
    %v230 = vld [vmem:[%s1 + $0x688] sm:$0xff]
    %v231 = vld [vmem:[%s1 + $0x690] sm:$0xff]
    %v232 = vld [vmem:[%s1 + $0x698] sm:$0xff]
    %v233 = vld [vmem:[%s1 + $0x6a0] sm:$0xff]
    %v234 = vld [vmem:[%s1 + $0x6a8] sm:$0xff]
    %v235 = vld [vmem:[%s1 + $0x6b0] sm:$0xff]
    %v236 = vld [vmem:[%s1 + $0x6b8] sm:$0xff]
    %v237 = vld [vmem:[%s1 + $0x6c0] sm:$0xff]
    %v238 = vld [vmem:[%s1 + $0x6c8] sm:$0xff]
    %v239 = vld [vmem:[%s1 + $0x6d0] sm:$0xff]
    %v240 = vld [vmem:[%s1 + $0x6d8] sm:$0xff]
    %v241 = vld [vmem:[%s1 + $0x6e0] sm:$0xff]
    %v242 = vld [vmem:[%s1 + $0x6e8] sm:$0xff]
    %v243 = vld [vmem:[%s1 + $0x6f0] sm:$0xff]
    %v244 = vld [vmem:[%s1 + $0x6f8] sm:$0xff]
    %v245 = vld [vmem:[%s1 + $0x700] sm:$0xff]
    %v246 = vld [vmem:[%s1 + $0x708] sm:$0xff]
    %v247 = vld [vmem:[%s1 + $0x710] sm:$0xff]
    %v248 = vld [vmem:[%s1 + $0x718] sm:$0xff]
    %v249 = vld [vmem:[%s1 + $0x720] sm:$0xff]
    %v250 = vld [vmem:[%s1 + $0x728] sm:$0xff]
    %v251 = vld [vmem:[%s1 + $0x730] sm:$0xff]
    %v252 = vld [vmem:[%s1 + $0x738] sm:$0xff]
    %v253 = vld [vmem:[%s1 + $0x740] sm:$0xff]
    %v254 = vld [vmem:[%s1 + $0x748] sm:$0xff]
    %v255 = vld [vmem:[%s1 + $0x750] sm:$0xff]
    %v256 = vld [vmem:[%s1 + $0x758] sm:$0xff]
    %v257 = vld [vmem:[%s1 + $0x760] sm:$0xff]
    %v258 = vld [vmem:[%s1 + $0x768] sm:$0xff]
    %v259 = vld [vmem:[%s1 + $0x770] sm:$0xff]
    %v260 = vld [vmem:[%s1 + $0x778] sm:$0xff]
    %v261 = vld [vmem:[%s1 + $0x780] sm:$0xff]
    %v262 = vld [vmem:[%s1 + $0x788] sm:$0xff]
    %v263 = vld [vmem:[%s1 + $0x790] sm:$0xff]
    %v264 = vld [vmem:[%s1 + $0x798] sm:$0xff]
    %v265 = vld [vmem:[%s1 + $0x7a0] sm:$0xff]
    %v266 = vld [vmem:[%s1 + $0x7a8] sm:$0xff]
    %v267 = vld [vmem:[%s1 + $0x7b0] sm:$0xff]
    %v268 = vld [vmem:[%s1 + $0x7b8] sm:$0xff]
    %v269 = vld [vmem:[%s1 + $0x7c0] sm:$0xff]
    %v270 = vld [vmem:[%s1 + $0x7c8] sm:$0xff]
    %v271 = vld [vmem:[%s1 + $0x7d0] sm:$0xff]
    %v272 = vld [vmem:[%s1 + $0x7d8] sm:$0xff]
    %v273 = vld [vmem:[%s1 + $0x7e0] sm:$0xff]
    %v274 = vld [vmem:[%s1 + $0x7e8] sm:$0xff]
    %v275 = vld [vmem:[%s1 + $0x7f0] sm:$0xff]
    %v276 = vld [vmem:[%s1 + $0x7f8] sm:$0xff]
    %v277 = vld [vmem:[%s1 + $0x800] sm:$0xff]
    %v278 = vld [vmem:[%s1 + $0x808] sm:$0xff]
    %v279 = vld [vmem:[%s1 + $0x810] sm:$0xff]
    %v280 = vld [vmem:[%s1 + $0x818] sm:$0xff]
    %v281 = vld [vmem:[%s1 + $0x820] sm:$0xff]
    %v282 = vld [vmem:[%s1 + $0x828] sm:$0xff]
    %v283 = vld [vmem:[%s1 + $0x830] sm:$0xff]
    %v284 = vld [vmem:[%s1 + $0x838] sm:$0xff]
    %v285 = vld [vmem:[%s1 + $0x840] sm:$0xff]
    %v286 = vld [vmem:[%s1 + $0x848] sm:$0xff]
    %v287 = vld [vmem:[%s1 + $0x850] sm:$0xff]
    %v288 = vld [vmem:[%s1 + $0x858] sm:$0xff]
    %v289 = vld [vmem:[%s1 + $0x860] sm:$0xff]
    %v290 = vld [vmem:[%s1 + $0x868] sm:$0xff]
    %v291 = vld [vmem:[%s1 + $0x870] sm:$0xff]
    %v292 = vld [vmem:[%s1 + $0x878] sm:$0xff]
    %v293 = vld [vmem:[%s1 + $0x880] sm:$0xff]
    %v294 = vld [vmem:[%s1 + $0x888] sm:$0xff]
    %v295 = vld [vmem:[%s1 + $0x890] sm:$0xff]
    %v296 = vld [vmem:[%s1 + $0x898] sm:$0xff]
    %v297 = vld [vmem:[%s1 + $0x8a0] sm:$0xff]
    %v298 = vld [vmem:[%s1 + $0x8a8] sm:$0xff]
    %v299 = vld [vmem:[%s1 + $0x8b0] sm:$0xff]
    %v300 = vld [vmem:[%s1 + $0x8b8] sm:$0xff]
    %v301 = vld [vmem:[%s1 + $0x8c0] sm:$0xff]
    %v302 = vld [vmem:[%s1 + $0x8c8] sm:$0xff]
    %v303 = vld [vmem:[%s1 + $0x8d0] sm:$0xff]
    %v304 = vld [vmem:[%s1 + $0x8d8] sm:$0xff]
    %v305 = vld [vmem:[%s1 + $0x8e0] sm:$0xff]
    %v306 = vld [vmem:[%s1 + $0x8e8] sm:$0xff]
    %v307 = vld [vmem:[%s1 + $0x8f0] sm:$0xff]
    %v308 = vld [vmem:[%s1 + $0x8f8] sm:$0xff]
    %v309 = vld [vmem:[%s1 + $0x900] sm:$0xff]
    %v310 = vld [vmem:[%s1 + $0x908] sm:$0xff]
    %v311 = vld [vmem:[%s1 + $0x910] sm:$0xff]
    %v312 = vld [vmem:[%s1 + $0x918] sm:$0xff]
    %v313 = vld [vmem:[%s1 + $0x920] sm:$0xff]
    %v314 = vld [vmem:[%s1 + $0x928] sm:$0xff]
    %v315 = vld [vmem:[%s1 + $0x930] sm:$0xff]
    %v316 = vld [vmem:[%s1 + $0x938] sm:$0xff]
    %v317 = vld [vmem:[%s1 + $0x940] sm:$0xff]
    %v318 = vld [vmem:[%s1 + $0x948] sm:$0xff]
    %v319 = vld [vmem:[%s1 + $0x950] sm:$0xff]
    %v320 = vld [vmem:[%s1 + $0x958] sm:$0xff]
    %v321 = vld [vmem:[%s1 + $0x960] sm:$0xff]
    %v322 = vld [vmem:[%s1 + $0x968] sm:$0xff]
    %v323 = vld [vmem:[%s1 + $0x970] sm:$0xff]
    %v324 = vld [vmem:[%s1 + $0x978] sm:$0xff]
    %v325 = vld [vmem:[%s1 + $0x980] sm:$0xff]
    %v326 = vld [vmem:[%s1 + $0x988] sm:$0xff]
    %v327 = vld [vmem:[%s1 + $0x990] sm:$0xff]
    %v328 = vld [vmem:[%s1 + $0x998] sm:$0xff]
    %v329 = vld [vmem:[%s1 + $0x9a0] sm:$0xff]
    %v330 = vld [vmem:[%s1 + $0x9a8] sm:$0xff]
    %v331 = vld [vmem:[%s1 + $0x9b0] sm:$0xff]
    %v332 = vld [vmem:[%s1 + $0x9b8] sm:$0xff]
    %v333 = vld [vmem:[%s1 + $0x9c0] sm:$0xff]
    %v334 = vld [vmem:[%s1 + $0x9c8] sm:$0xff]
    %v335 = vld [vmem:[%s1 + $0x9d0] sm:$0xff]
    %v336 = vld [vmem:[%s1 + $0x9d8] sm:$0xff]
    %v337 = vld [vmem:[%s1 + $0x9e0] sm:$0xff]
    %v338 = vld [vmem:[%s1 + $0x9e8] sm:$0xff]
    %v339 = vld [vmem:[%s1 + $0x9f0] sm:$0xff]
    %v340 = vld [vmem:[%s1 + $0x9f8] sm:$0xff]
    %v341 = vld [vmem:[%s1 + $0xa00] sm:$0xff]
    %v342 = vld [vmem:[%s1 + $0xa08] sm:$0xff]
    %v343 = vld [vmem:[%s1 + $0xa10] sm:$0xff]
    %v344 = vld [vmem:[%s1 + $0xa18] sm:$0xff]
    %v345 = vld [vmem:[%s1 + $0xa20] sm:$0xff]
    %v346 = vld [vmem:[%s1 + $0xa28] sm:$0xff]
    %v347 = vld [vmem:[%s1 + $0xa30] sm:$0xff]
    %v348 = vld [vmem:[%s1 + $0xa38] sm:$0xff]
    %v349 = vld [vmem:[%s1 + $0xa40] sm:$0xff]
    %v350 = vld [vmem:[%s1 + $0xa48] sm:$0xff]
    %v351 = vld [vmem:[%s1 + $0xa50] sm:$0xff]
    %v352 = vld [vmem:[%s1 + $0xa58] sm:$0xff]
    %v353 = vld [vmem:[%s1 + $0xa60] sm:$0xff]
    %v354 = vld [vmem:[%s1 + $0xa68] sm:$0xff]
    %v355 = vld [vmem:[%s1 + $0xa70] sm:$0xff]
    %v356 = vld [vmem:[%s1 + $0xa78] sm:$0xff]
    %v357 = vld [vmem:[%s1 + $0xa80] sm:$0xff]
    %v358 = vld [vmem:[%s1 + $0xa88] sm:$0xff]
    %v359 = vld [vmem:[%s1 + $0xa90] sm:$0xff]
    %v360 = vld [vmem:[%s1 + $0xa98] sm:$0xff]
    %v361 = vld [vmem:[%s1 + $0xaa0] sm:$0xff]
    %v362 = vld [vmem:[%s1 + $0xaa8] sm:$0xff]
    %v363 = vld [vmem:[%s1 + $0xab0] sm:$0xff]
    %v364 = vld [vmem:[%s1 + $0xab8] sm:$0xff]
    %v365 = vld [vmem:[%s1 + $0xac0] sm:$0xff]
    %v366 = vld [vmem:[%s1 + $0xac8] sm:$0xff]
    %v367 = vld [vmem:[%s1 + $0xad0] sm:$0xff]
    %v368 = vld [vmem:[%s1 + $0xad8] sm:$0xff]
    %v369 = vld [vmem:[%s1 + $0xae0] sm:$0xff]
    %v370 = vld [vmem:[%s1 + $0xae8] sm:$0xff]
    %v371 = vld [vmem:[%s1 + $0xaf0] sm:$0xff]
    %v372 = vld [vmem:[%s1 + $0xaf8] sm:$0xff]
    %v373 = vld [vmem:[%s2] sm:$0x1]
    %v375 = vperm.slane %v373, 0
    %383 = vst [vmem:[#allocation1] ss:$4 sm:$0xff] %v15
    %s384 = scalar_lea.vmem [#allocation1], 32
    %385 = vst [vmem:[%s384] ss:$4 sm:$0xff] %v16
    %v386 = vld.sshfl [vmem:[#allocation1] sm:$0xff pattern:$0x73625140]
    %v387 = vld.sshfl [vmem:[#allocation1 + $0x8] sm:$0xff pattern:$0x73625140]
    %v388 = vld.sshfl [vmem:[#allocation1 + $0x10] sm:$0xff pattern:$0x73625140]
    %v389 = vld.sshfl [vmem:[#allocation1 + $0x18] sm:$0xff pattern:$0x73625140]
    %v390 = vld.sshfl [vmem:[#allocation1 + $0x20] sm:$0xff pattern:$0x73625140]
    %v391 = vld.sshfl [vmem:[#allocation1 + $0x28] sm:$0xff pattern:$0x73625140]
    %v392 = vld.sshfl [vmem:[#allocation1 + $0x30] sm:$0xff pattern:$0x73625140]
    %v393 = vld.sshfl [vmem:[#allocation1 + $0x38] sm:$0xff pattern:$0x73625140]
    %394 = vst [vmem:[#allocation1] ss:$4 sm:$0xff] %v17
    %395 = vst [vmem:[%s384] ss:$4 sm:$0xff] %v18
    %v396 = vld.sshfl [vmem:[#allocation1] sm:$0xff pattern:$0x73625140]
    %v397 = vld.sshfl [vmem:[#allocation1 + $0x8] sm:$0xff pattern:$0x73625140]
    %v398 = vld.sshfl [vmem:[#allocation1 + $0x10] sm:$0xff pattern:$0x73625140]
    %v399 = vld.sshfl [vmem:[#allocation1 + $0x18] sm:$0xff pattern:$0x73625140]
    %v400 = vld.sshfl [vmem:[#allocation1 + $0x20] sm:$0xff pattern:$0x73625140]
    %v401 = vld.sshfl [vmem:[#allocation1 + $0x28] sm:$0xff pattern:$0x73625140]
    %v402 = vld.sshfl [vmem:[#allocation1 + $0x30] sm:$0xff pattern:$0x73625140]
    %v403 = vld.sshfl [vmem:[#allocation1 + $0x38] sm:$0xff pattern:$0x73625140]
    %404 = vst [vmem:[#allocation1] ss:$4 sm:$0xff] %v19
    %405 = vst [vmem:[%s384] ss:$4 sm:$0xff] %v20
    %v406 = vld.sshfl [vmem:[#allocation1] sm:$0xff pattern:$0x73625140]
    %v407 = vld.sshfl [vmem:[#allocation1 + $0x8] sm:$0xff pattern:$0x73625140]
    %v408 = vld.sshfl [vmem:[#allocation1 + $0x10] sm:$0xff pattern:$0x73625140]
    %v409 = vld.sshfl [vmem:[#allocation1 + $0x18] sm:$0xff pattern:$0x73625140]
    %v410 = vld.sshfl [vmem:[#allocation1 + $0x20] sm:$0xff pattern:$0x73625140]
    %v411 = vld.sshfl [vmem:[#allocation1 + $0x28] sm:$0xff pattern:$0x73625140]
    %434 = vmatpush.msra.mxu0 %v36
    %435 = vmatpush.msra.mxu0 %v35
    %436 = vmatpush.msra.mxu0 %v34
    %437 = vmatpush.msra.mxu0 %v33
    %438 = vmatpush.msra.mxu0 %v32
    %439 = vmatpush.msra.mxu0 %v31
    %440 = vmatpush.msra.mxu0 %v30
    %441 = vmatpush.msra.mxu0 %v29
    %442 = vmatpush.msra.mxu0 %v28
    %443 = vmatpush.msra.mxu0 %v27
    %444 = vmatpush.msra.mxu0 %v26
    %445 = vmatpush.msra.mxu0 %v25
    %446 = vmatpush.msra.mxu0 %v24
    %447 = vmatpush.msra.mxu0 %v23
    %448 = vmatpush.msra.mxu0 %v22
    %449 = vmatpush.msra.mxu0 %v21
    %450 = vmatmul.f32.gmra.mxu0 %v386
    %v451 = vpop.f32.mrf.mxu0
    %v452 = vadd.f32 %v375, %v451
    %453 = vdwg.mxu0
    %454 = vmatpush.msra.mxu0 %v52
    %455 = vmatpush.msra.mxu0 %v51
    %456 = vmatpush.msra.mxu0 %v50
    %457 = vmatpush.msra.mxu0 %v49
    %458 = vmatpush.msra.mxu0 %v48
    %459 = vmatpush.msra.mxu0 %v47
    %460 = vmatpush.msra.mxu0 %v46
    %461 = vmatpush.msra.mxu0 %v45
    %462 = vmatpush.msra.mxu0 %v44
    %463 = vmatpush.msra.mxu0 %v43
    %464 = vmatpush.msra.mxu0 %v42
    %465 = vmatpush.msra.mxu0 %v41
    %466 = vmatpush.msra.mxu0 %v40
    %467 = vmatpush.msra.mxu0 %v39
    %468 = vmatpush.msra.mxu0 %v38
    %469 = vmatpush.msra.mxu0 %v37
    %470 = vmatmul.f32.gmra.mxu0 %v387
    %v471 = vpop.f32.mrf.mxu0
    %v472 = vadd.f32 %v452, %v471
    %473 = vdwg.mxu0
    %474 = vmatpush.msra.mxu0 %v68
    %475 = vmatpush.msra.mxu0 %v67
    %476 = vmatpush.msra.mxu0 %v66
    %477 = vmatpush.msra.mxu0 %v65
    %478 = vmatpush.msra.mxu0 %v64
    %479 = vmatpush.msra.mxu0 %v63
    %480 = vmatpush.msra.mxu0 %v62
    %481 = vmatpush.msra.mxu0 %v61
    %482 = vmatpush.msra.mxu0 %v60
    %483 = vmatpush.msra.mxu0 %v59
    %484 = vmatpush.msra.mxu0 %v58
    %485 = vmatpush.msra.mxu0 %v57
    %486 = vmatpush.msra.mxu0 %v56
    %487 = vmatpush.msra.mxu0 %v55
    %488 = vmatpush.msra.mxu0 %v54
    %489 = vmatpush.msra.mxu0 %v53
    %490 = vmatmul.f32.gmra.mxu0 %v388
    %v491 = vpop.f32.mrf.mxu0
    %v492 = vadd.f32 %v472, %v491
    %493 = vdwg.mxu0
    %494 = vmatpush.msra.mxu0 %v84
    %495 = vmatpush.msra.mxu0 %v83
    %496 = vmatpush.msra.mxu0 %v82
    %497 = vmatpush.msra.mxu0 %v81
    %498 = vmatpush.msra.mxu0 %v80
    %499 = vmatpush.msra.mxu0 %v79
    %500 = vmatpush.msra.mxu0 %v78
    %501 = vmatpush.msra.mxu0 %v77
    %502 = vmatpush.msra.mxu0 %v76
    %503 = vmatpush.msra.mxu0 %v75
    %504 = vmatpush.msra.mxu0 %v74
    %505 = vmatpush.msra.mxu0 %v73
    %506 = vmatpush.msra.mxu0 %v72
    %507 = vmatpush.msra.mxu0 %v71
    %508 = vmatpush.msra.mxu0 %v70
    %509 = vmatpush.msra.mxu0 %v69
    %510 = vmatmul.f32.gmra.mxu0 %v389
    %v511 = vpop.f32.mrf.mxu0
    %v512 = vadd.f32 %v492, %v511
    %513 = vdwg.mxu0
    %514 = vmatpush.msra.mxu0 %v100
    %515 = vmatpush.msra.mxu0 %v99
    %516 = vmatpush.msra.mxu0 %v98
    %517 = vmatpush.msra.mxu0 %v97
    %518 = vmatpush.msra.mxu0 %v96
    %519 = vmatpush.msra.mxu0 %v95
    %520 = vmatpush.msra.mxu0 %v94
    %521 = vmatpush.msra.mxu0 %v93
    %522 = vmatpush.msra.mxu0 %v92
    %523 = vmatpush.msra.mxu0 %v91
    %524 = vmatpush.msra.mxu0 %v90
    %525 = vmatpush.msra.mxu0 %v89
    %526 = vmatpush.msra.mxu0 %v88
    %527 = vmatpush.msra.mxu0 %v87
    %528 = vmatpush.msra.mxu0 %v86
    %529 = vmatpush.msra.mxu0 %v85
    %530 = vmatmul.f32.gmra.mxu0 %v390
    %v531 = vpop.f32.mrf.mxu0
    %v532 = vadd.f32 %v512, %v531
    %533 = vdwg.mxu0
    %534 = vmatpush.msra.mxu0 %v116
    %535 = vmatpush.msra.mxu0 %v115
    %536 = vmatpush.msra.mxu0 %v114
    %537 = vmatpush.msra.mxu0 %v113
    %538 = vmatpush.msra.mxu0 %v112
    %539 = vmatpush.msra.mxu0 %v111
    %540 = vmatpush.msra.mxu0 %v110
    %541 = vmatpush.msra.mxu0 %v109
    %542 = vmatpush.msra.mxu0 %v108
    %543 = vmatpush.msra.mxu0 %v107
    %544 = vmatpush.msra.mxu0 %v106
    %545 = vmatpush.msra.mxu0 %v105
    %546 = vmatpush.msra.mxu0 %v104
    %547 = vmatpush.msra.mxu0 %v103
    %548 = vmatpush.msra.mxu0 %v102
    %549 = vmatpush.msra.mxu0 %v101
    %550 = vmatmul.f32.gmra.mxu0 %v391
    %v551 = vpop.f32.mrf.mxu0
    %v552 = vadd.f32 %v532, %v551
    %553 = vdwg.mxu0
    %554 = vmatpush.msra.mxu0 %v132
    %555 = vmatpush.msra.mxu0 %v131
    %556 = vmatpush.msra.mxu0 %v130
    %557 = vmatpush.msra.mxu0 %v129
    %558 = vmatpush.msra.mxu0 %v128
    %559 = vmatpush.msra.mxu0 %v127
    %560 = vmatpush.msra.mxu0 %v126
    %561 = vmatpush.msra.mxu0 %v125
    %562 = vmatpush.msra.mxu0 %v124
    %563 = vmatpush.msra.mxu0 %v123
    %564 = vmatpush.msra.mxu0 %v122
    %565 = vmatpush.msra.mxu0 %v121
    %566 = vmatpush.msra.mxu0 %v120
    %567 = vmatpush.msra.mxu0 %v119
    %568 = vmatpush.msra.mxu0 %v118
    %569 = vmatpush.msra.mxu0 %v117
    %570 = vmatmul.f32.gmra.mxu0 %v392
    %v571 = vpop.f32.mrf.mxu0
    %v572 = vadd.f32 %v552, %v571
    %573 = vdwg.mxu0
    %574 = vmatpush.msra.mxu0 %v148
    %575 = vmatpush.msra.mxu0 %v147
    %576 = vmatpush.msra.mxu0 %v146
    %577 = vmatpush.msra.mxu0 %v145
    %578 = vmatpush.msra.mxu0 %v144
    %579 = vmatpush.msra.mxu0 %v143
    %580 = vmatpush.msra.mxu0 %v142
    %581 = vmatpush.msra.mxu0 %v141
    %582 = vmatpush.msra.mxu0 %v140
    %583 = vmatpush.msra.mxu0 %v139
    %584 = vmatpush.msra.mxu0 %v138
    %585 = vmatpush.msra.mxu0 %v137
    %586 = vmatpush.msra.mxu0 %v136
    %587 = vmatpush.msra.mxu0 %v135
    %588 = vmatpush.msra.mxu0 %v134
    %589 = vmatpush.msra.mxu0 %v133
    %590 = vmatmul.f32.gmra.mxu0 %v393
    %v591 = vpop.f32.mrf.mxu0
    %v592 = vadd.f32 %v572, %v591
    %593 = vdwg.mxu0
    %594 = vmatpush.msra.mxu0 %v164
    %595 = vmatpush.msra.mxu0 %v163
    %596 = vmatpush.msra.mxu0 %v162
    %597 = vmatpush.msra.mxu0 %v161
    %598 = vmatpush.msra.mxu0 %v160
    %599 = vmatpush.msra.mxu0 %v159
    %600 = vmatpush.msra.mxu0 %v158
    %601 = vmatpush.msra.mxu0 %v157
    %602 = vmatpush.msra.mxu0 %v156
    %603 = vmatpush.msra.mxu0 %v155
    %604 = vmatpush.msra.mxu0 %v154
    %605 = vmatpush.msra.mxu0 %v153
    %606 = vmatpush.msra.mxu0 %v152
    %607 = vmatpush.msra.mxu0 %v151
    %608 = vmatpush.msra.mxu0 %v150
    %609 = vmatpush.msra.mxu0 %v149
    %610 = vmatmul.f32.gmra.mxu0 %v396
    %v611 = vpop.f32.mrf.mxu0
    %v612 = vadd.f32 %v592, %v611
    %613 = vdwg.mxu0
    %614 = vmatpush.msra.mxu0 %v180
    %615 = vmatpush.msra.mxu0 %v179
    %616 = vmatpush.msra.mxu0 %v178
    %617 = vmatpush.msra.mxu0 %v177
    %618 = vmatpush.msra.mxu0 %v176
    %619 = vmatpush.msra.mxu0 %v175
    %620 = vmatpush.msra.mxu0 %v174
    %621 = vmatpush.msra.mxu0 %v173
    %622 = vmatpush.msra.mxu0 %v172
    %623 = vmatpush.msra.mxu0 %v171
    %624 = vmatpush.msra.mxu0 %v170
    %625 = vmatpush.msra.mxu0 %v169
    %626 = vmatpush.msra.mxu0 %v168
    %627 = vmatpush.msra.mxu0 %v167
    %628 = vmatpush.msra.mxu0 %v166
    %629 = vmatpush.msra.mxu0 %v165
    %630 = vmatmul.f32.gmra.mxu0 %v397
    %v631 = vpop.f32.mrf.mxu0
    %v632 = vadd.f32 %v612, %v631
    %633 = vdwg.mxu0
    %634 = vmatpush.msra.mxu0 %v196
    %635 = vmatpush.msra.mxu0 %v195
    %636 = vmatpush.msra.mxu0 %v194
    %637 = vmatpush.msra.mxu0 %v193
    %638 = vmatpush.msra.mxu0 %v192
    %639 = vmatpush.msra.mxu0 %v191
    %640 = vmatpush.msra.mxu0 %v190
    %641 = vmatpush.msra.mxu0 %v189
    %642 = vmatpush.msra.mxu0 %v188
    %643 = vmatpush.msra.mxu0 %v187
    %644 = vmatpush.msra.mxu0 %v186
    %645 = vmatpush.msra.mxu0 %v185
    %646 = vmatpush.msra.mxu0 %v184
    %647 = vmatpush.msra.mxu0 %v183
    %648 = vmatpush.msra.mxu0 %v182
    %649 = vmatpush.msra.mxu0 %v181
    %650 = vmatmul.f32.gmra.mxu0 %v398
    %v651 = vpop.f32.mrf.mxu0
    %v652 = vadd.f32 %v632, %v651
    %653 = vdwg.mxu0
    %654 = vmatpush.msra.mxu0 %v212
    %655 = vmatpush.msra.mxu0 %v211
    %656 = vmatpush.msra.mxu0 %v210
    %657 = vmatpush.msra.mxu0 %v209
    %658 = vmatpush.msra.mxu0 %v208
    %659 = vmatpush.msra.mxu0 %v207
    %660 = vmatpush.msra.mxu0 %v206
    %661 = vmatpush.msra.mxu0 %v205
    %662 = vmatpush.msra.mxu0 %v204
    %663 = vmatpush.msra.mxu0 %v203
    %664 = vmatpush.msra.mxu0 %v202
    %665 = vmatpush.msra.mxu0 %v201
    %666 = vmatpush.msra.mxu0 %v200
    %667 = vmatpush.msra.mxu0 %v199
    %668 = vmatpush.msra.mxu0 %v198
    %669 = vmatpush.msra.mxu0 %v197
    %670 = vmatmul.f32.gmra.mxu0 %v399
    %v671 = vpop.f32.mrf.mxu0
    %v672 = vadd.f32 %v652, %v671
    %673 = vdwg.mxu0
    %674 = vmatpush.msra.mxu0 %v228
    %675 = vmatpush.msra.mxu0 %v227
    %676 = vmatpush.msra.mxu0 %v226
    %677 = vmatpush.msra.mxu0 %v225
    %678 = vmatpush.msra.mxu0 %v224
    %679 = vmatpush.msra.mxu0 %v223
    %680 = vmatpush.msra.mxu0 %v222
    %681 = vmatpush.msra.mxu0 %v221
    %682 = vmatpush.msra.mxu0 %v220
    %683 = vmatpush.msra.mxu0 %v219
    %684 = vmatpush.msra.mxu0 %v218
    %685 = vmatpush.msra.mxu0 %v217
    %686 = vmatpush.msra.mxu0 %v216
    %687 = vmatpush.msra.mxu0 %v215
    %688 = vmatpush.msra.mxu0 %v214
    %689 = vmatpush.msra.mxu0 %v213
    %690 = vmatmul.f32.gmra.mxu0 %v400
    %v691 = vpop.f32.mrf.mxu0
    %v692 = vadd.f32 %v672, %v691
    %693 = vdwg.mxu0
    %694 = vmatpush.msra.mxu0 %v244
    %695 = vmatpush.msra.mxu0 %v243
    %696 = vmatpush.msra.mxu0 %v242
    %697 = vmatpush.msra.mxu0 %v241
    %698 = vmatpush.msra.mxu0 %v240
    %699 = vmatpush.msra.mxu0 %v239
    %700 = vmatpush.msra.mxu0 %v238
    %701 = vmatpush.msra.mxu0 %v237
    %702 = vmatpush.msra.mxu0 %v236
    %703 = vmatpush.msra.mxu0 %v235
    %704 = vmatpush.msra.mxu0 %v234
    %705 = vmatpush.msra.mxu0 %v233
    %706 = vmatpush.msra.mxu0 %v232
    %707 = vmatpush.msra.mxu0 %v231
    %708 = vmatpush.msra.mxu0 %v230
    %709 = vmatpush.msra.mxu0 %v229
    %710 = vmatmul.f32.gmra.mxu0 %v401
    %v711 = vpop.f32.mrf.mxu0
    %v712 = vadd.f32 %v692, %v711
    %713 = vdwg.mxu0
    %714 = vmatpush.msra.mxu0 %v260
    %715 = vmatpush.msra.mxu0 %v259
    %716 = vmatpush.msra.mxu0 %v258
    %717 = vmatpush.msra.mxu0 %v257
    %718 = vmatpush.msra.mxu0 %v256
    %719 = vmatpush.msra.mxu0 %v255
    %720 = vmatpush.msra.mxu0 %v254
    %721 = vmatpush.msra.mxu0 %v253
    %722 = vmatpush.msra.mxu0 %v252
    %723 = vmatpush.msra.mxu0 %v251
    %724 = vmatpush.msra.mxu0 %v250
    %725 = vmatpush.msra.mxu0 %v249
    %726 = vmatpush.msra.mxu0 %v248
    %727 = vmatpush.msra.mxu0 %v247
    %728 = vmatpush.msra.mxu0 %v246
    %729 = vmatpush.msra.mxu0 %v245
    %730 = vmatmul.f32.gmra.mxu0 %v402
    %v731 = vpop.f32.mrf.mxu0
    %v732 = vadd.f32 %v712, %v731
    %733 = vdwg.mxu0
    %734 = vmatpush.msra.mxu0 %v276
    %735 = vmatpush.msra.mxu0 %v275
    %736 = vmatpush.msra.mxu0 %v274
    %737 = vmatpush.msra.mxu0 %v273
    %738 = vmatpush.msra.mxu0 %v272
    %739 = vmatpush.msra.mxu0 %v271
    %740 = vmatpush.msra.mxu0 %v270
    %741 = vmatpush.msra.mxu0 %v269
    %742 = vmatpush.msra.mxu0 %v268
    %743 = vmatpush.msra.mxu0 %v267
    %744 = vmatpush.msra.mxu0 %v266
    %745 = vmatpush.msra.mxu0 %v265
    %746 = vmatpush.msra.mxu0 %v264
    %747 = vmatpush.msra.mxu0 %v263
    %748 = vmatpush.msra.mxu0 %v262
    %749 = vmatpush.msra.mxu0 %v261
    %750 = vmatmul.f32.gmra.mxu0 %v403
    %v751 = vpop.f32.mrf.mxu0
    %v752 = vadd.f32 %v732, %v751
    %753 = vdwg.mxu0
    %754 = vmatpush.msra.mxu0 %v292
    %755 = vmatpush.msra.mxu0 %v291
    %756 = vmatpush.msra.mxu0 %v290
    %757 = vmatpush.msra.mxu0 %v289
    %758 = vmatpush.msra.mxu0 %v288
    %759 = vmatpush.msra.mxu0 %v287
    %760 = vmatpush.msra.mxu0 %v286
    %761 = vmatpush.msra.mxu0 %v285
    %762 = vmatpush.msra.mxu0 %v284
    %763 = vmatpush.msra.mxu0 %v283
    %764 = vmatpush.msra.mxu0 %v282
    %765 = vmatpush.msra.mxu0 %v281
    %766 = vmatpush.msra.mxu0 %v280
    %767 = vmatpush.msra.mxu0 %v279
    %768 = vmatpush.msra.mxu0 %v278
    %769 = vmatpush.msra.mxu0 %v277
    %770 = vmatmul.f32.gmra.mxu0 %v406
    %v771 = vpop.f32.mrf.mxu0
    %v772 = vadd.f32 %v752, %v771
    %773 = vdwg.mxu0
    %774 = vmatpush.msra.mxu0 %v308
    %775 = vmatpush.msra.mxu0 %v307
    %776 = vmatpush.msra.mxu0 %v306
    %777 = vmatpush.msra.mxu0 %v305
    %778 = vmatpush.msra.mxu0 %v304
    %779 = vmatpush.msra.mxu0 %v303
    %780 = vmatpush.msra.mxu0 %v302
    %781 = vmatpush.msra.mxu0 %v301
    %782 = vmatpush.msra.mxu0 %v300
    %783 = vmatpush.msra.mxu0 %v299
    %784 = vmatpush.msra.mxu0 %v298
    %785 = vmatpush.msra.mxu0 %v297
    %786 = vmatpush.msra.mxu0 %v296
    %787 = vmatpush.msra.mxu0 %v295
    %788 = vmatpush.msra.mxu0 %v294
    %789 = vmatpush.msra.mxu0 %v293
    %790 = vmatmul.f32.gmra.mxu0 %v407
    %v791 = vpop.f32.mrf.mxu0
    %v792 = vadd.f32 %v772, %v791
    %793 = vdwg.mxu0
    %794 = vmatpush.msra.mxu0 %v324
    %795 = vmatpush.msra.mxu0 %v323
    %796 = vmatpush.msra.mxu0 %v322
    %797 = vmatpush.msra.mxu0 %v321
    %798 = vmatpush.msra.mxu0 %v320
    %799 = vmatpush.msra.mxu0 %v319
    %800 = vmatpush.msra.mxu0 %v318
    %801 = vmatpush.msra.mxu0 %v317
    %802 = vmatpush.msra.mxu0 %v316
    %803 = vmatpush.msra.mxu0 %v315
    %804 = vmatpush.msra.mxu0 %v314
    %805 = vmatpush.msra.mxu0 %v313
    %806 = vmatpush.msra.mxu0 %v312
    %807 = vmatpush.msra.mxu0 %v311
    %808 = vmatpush.msra.mxu0 %v310
    %809 = vmatpush.msra.mxu0 %v309
    %810 = vmatmul.f32.gmra.mxu0 %v408
    %v811 = vpop.f32.mrf.mxu0
    %v812 = vadd.f32 %v792, %v811
    %813 = vdwg.mxu0
    %814 = vmatpush.msra.mxu0 %v340
    %815 = vmatpush.msra.mxu0 %v339
    %816 = vmatpush.msra.mxu0 %v338
    %817 = vmatpush.msra.mxu0 %v337
    %818 = vmatpush.msra.mxu0 %v336
    %819 = vmatpush.msra.mxu0 %v335
    %820 = vmatpush.msra.mxu0 %v334
    %821 = vmatpush.msra.mxu0 %v333
    %822 = vmatpush.msra.mxu0 %v332
    %823 = vmatpush.msra.mxu0 %v331
    %824 = vmatpush.msra.mxu0 %v330
    %825 = vmatpush.msra.mxu0 %v329
    %826 = vmatpush.msra.mxu0 %v328
    %827 = vmatpush.msra.mxu0 %v327
    %828 = vmatpush.msra.mxu0 %v326
    %829 = vmatpush.msra.mxu0 %v325
    %830 = vmatmul.f32.gmra.mxu0 %v409
    %v831 = vpop.f32.mrf.mxu0
    %v832 = vadd.f32 %v812, %v831
    %833 = vdwg.mxu0
    %834 = vmatpush.msra.mxu0 %v356
    %835 = vmatpush.msra.mxu0 %v355
    %836 = vmatpush.msra.mxu0 %v354
    %837 = vmatpush.msra.mxu0 %v353
    %838 = vmatpush.msra.mxu0 %v352
    %839 = vmatpush.msra.mxu0 %v351
    %840 = vmatpush.msra.mxu0 %v350
    %841 = vmatpush.msra.mxu0 %v349
    %842 = vmatpush.msra.mxu0 %v348
    %843 = vmatpush.msra.mxu0 %v347
    %844 = vmatpush.msra.mxu0 %v346
    %845 = vmatpush.msra.mxu0 %v345
    %846 = vmatpush.msra.mxu0 %v344
    %847 = vmatpush.msra.mxu0 %v343
    %848 = vmatpush.msra.mxu0 %v342
    %849 = vmatpush.msra.mxu0 %v341
    %850 = vmatmul.f32.gmra.mxu0 %v410
    %v851 = vpop.f32.mrf.mxu0
    %v852 = vadd.f32 %v832, %v851
    %853 = vdwg.mxu0
    %854 = vmatpush.msra.mxu0 %v372
    %855 = vmatpush.msra.mxu0 %v371
    %856 = vmatpush.msra.mxu0 %v370
    %857 = vmatpush.msra.mxu0 %v369
    %858 = vmatpush.msra.mxu0 %v368
    %859 = vmatpush.msra.mxu0 %v367
    %860 = vmatpush.msra.mxu0 %v366
    %861 = vmatpush.msra.mxu0 %v365
    %862 = vmatpush.msra.mxu0 %v364
    %863 = vmatpush.msra.mxu0 %v363
    %864 = vmatpush.msra.mxu0 %v362
    %865 = vmatpush.msra.mxu0 %v361
    %866 = vmatpush.msra.mxu0 %v360
    %867 = vmatpush.msra.mxu0 %v359
    %868 = vmatpush.msra.mxu0 %v358
    %869 = vmatpush.msra.mxu0 %v357
    %870 = vmatmul.f32.gmra.mxu0 %v411
    %v871 = vpop.f32.mrf.mxu0
    %v872 = vadd.f32 %v852, %v871
    %873 = vdwg.mxu0
    %vm874 = vcmask 287744
    %875 = vst.msk [vmem:[#allocation2] sm:$0x3] %vm874, %v872
    // Predicated region
    $region14: #{my_cnn_forward.3} parent=1 // pred_check
      _
    $region15: #{my_cnn_forward.3} parent=1 // pred_check_branch
      %877 = sbr.rel (0) target = $region17
    $region16: #{my_cnn_forward.3} parent=1 // pred_region
      %879 = vsyncadd [#allocation3], 0
      %s881 = sshll.u32 [#allocation2], 4
      %s882 = int_to_ptr.vmem [resolvable:$true] %s881
      %s883 = sshll.u32 %s3, 4
      %s884 = int_to_ptr.hbm [resolvable:$true] %s883
      %886 = dma.vmem_to_hbm [thread:$0]  %s882, 32, %s884, [#allocation3]
    $region17: #{my_cnn_forward.3} parent=1 // pred_fallthru
      _
    // Predicated region
    $region18: #{my_cnn_forward.3} parent=1 // pred_check
      _
    $region19: #{my_cnn_forward.3} parent=1 // pred_check_branch
      %888 = sbr.rel (0) target = $region21
    $region20: #{my_cnn_forward.3} parent=1 // pred_region
      %890 = dma.done [#allocation3], 32
    $region21: #{my_cnn_forward.3} parent=1 // pred_fallthru
      _
    %891 = vsyncpa [#allocation3], 1

// kernel: my_cnn_forward.2
$region0: #{my_cnn_forward.2}
  #allocation0 [shape = 'u32[]', space=smem, size = 0x4, offset = 0x4, fixed_abs, tag = 'smem constant byte address 0x4 - core index']
  #allocation1 [shape = 'u32[72,128]{1,0:T(1,128)}', space=vmem, size = 0x9000, scoped, tag = 'internal scratch']
  #allocation2 [shape = 'f32[48,192]{1,0:T(8,128)}', space=vmem, size = 0xc000, scoped, tag = 'scratch operand']
  %s0 = inlined_call_operand.vmem [shape: f32[2,100,28], index: 0, kind: input, shape index: {}]
  %s1 = inlined_call_operand.hbm [shape: f32[5,28,384], index: 1, kind: input, shape index: {}]
  %s2 = inlined_call_operand.vmem [shape: f32[1,384], index: 2, kind: input, shape index: {}]
  %s3 = inlined_call_operand.vmem [shape: f32[384,192], index: 3, kind: input, shape index: {}]
  %s4 = inlined_call_operand.vmem [shape: f32[384,192], index: 4, kind: input, shape index: {}]
  %s5 = inlined_call_operand.vmem [shape: f32[48,96], index: 5, kind: input, shape index: {}]
  %s6 = inlined_call_operand.vmem [shape: f32[48,96], index: 6, kind: input, shape index: {}]
  %s7 = inlined_call_operand.vmem [shape: f32[5,192,256], index: 7, kind: input, shape index: {}]
  %s8 = inlined_call_operand.vmem [shape: f32[1,256], index: 8, kind: input, shape index: {}]
  %s9 = inlined_call_operand.hbm [shape: f32[256,128], index: 9, kind: input, shape index: {}]
  %s10 = inlined_call_operand.hbm [shape: f32[256,128], index: 10, kind: input, shape index: {}]
  %s11 = inlined_call_operand.vmem [shape: f32[22,44], index: 11, kind: input, shape index: {}]
  %s12 = inlined_call_operand.vmem [shape: f32[22,44], index: 12, kind: input, shape index: {}]
  %s13 = inlined_call_operand.vmem [shape: f32[2,22,128], index: 13, kind: output, shape index: {}]
  %s14 = sld [smem:[#allocation0]]
  $region97: #{my_cnn_forward.2} parent=0
    _
  %s16 = ssub.s32 1, %s14
  %s17 = scalar_select 0, %s16, %s14
  $region1: #{my_cnn_forward.2} parent=0
    #allocation3 [shape = 'u8[245760]{0}', space=vmem, size = 0x3c000, scoped, tag = 'input window, operand 1, single buffered']
    #allocation4 [shape = 's32[2]{0}', space=sflag, size = 0x8, scoped, tag = 'scoped memory for my_cnn_forward.2']
    #allocation5 [shape = 'u8[131072]{0}', space=vmem, size = 0x20000, scoped, tag = 'input window, operand 9, single buffered']
    #allocation6 [shape = 's32[1]{0}', space=sflag, size = 0x4, scoped, tag = 'scoped memory for my_cnn_forward.2']
    #allocation7 [shape = 'u8[131072]{0}', space=vmem, size = 0x20000, scoped, tag = 'input window, operand 10, single buffered']
    %18 = vsyncpa [#allocation4], 0
    %19 = vsyncpa [#allocation6], 0
    loop: start=0, step=1, limit=4
    $region2: #{my_cnn_forward.2} parent=1 // loop_pre_header
      _
    $region3: #{my_cnn_forward.2} parent=1 // loop_header
      %s21 = sphi 0, %s25
      %p22 = scmp.ge.s32.totalorder %s21, 4
      %s31 = sphi 0, %s33
      %s34 = sphi 0, %s31
      %s35 = sphi 0, %s34
      %s51 = sphi 0, %s35
      %s55 = sphi 0, %s55
      %s57 = sphi 0, %s55
      %s58 = sphi 0, %s57
      %s72 = sphi 0, %s58
      %s76 = sphi 0, %s76
      %s78 = sphi 0, %s76
      %s79 = sphi 0, %s78
      %s93 = sphi 0, %s79
      %s97 = sphi 0, %s97
      %s99 = sphi 0, %s97
      %s100 = sphi 0, %s99
      %s114 = sphi 0, %s100
      %s118 = sphi 0, %s118
      %s120 = sphi 0, %s118
      %s121 = sphi 0, %s120
      %s135 = sphi 0, %s121
      %s139 = sphi 0, %s139
      %s141 = sphi 0, %s139
      %s142 = sphi 0, %s141
      %s156 = sphi 0, %s142
      %s160 = sphi 0, %s160
      %s162 = sphi 0, %s160
      %s163 = sphi 0, %s162
      %s177 = sphi 0, %s163
      %s181 = sphi 0, %s181
      %s183 = sphi 0, %s181
      %s184 = sphi 0, %s183
      %s198 = sphi 0, %s184
      %s202 = sphi 0, %s202
      %s204 = sphi 0, %s202
      %s205 = sphi 0, %s204
      %s219 = sphi 0, %s205
      %s223 = sphi 0, %s223
      %s225 = sphi 0, %s223
      %s226 = sphi 0, %s225
      %s240 = sphi 0, %s226
      %s244 = sphi 0, %s244
      %s246 = sphi 0, %s244
      %s247 = sphi 0, %s246
      %s261 = sphi 0, %s247
      %s265 = sphi 0, %s265
      %s267 = sphi 0, %s265
      %s268 = sphi 0, %s267
      %s282 = sphi 0, %s268
      %s286 = sphi 0, %s286
      %s288 = sphi 0, %s286
      %s289 = sphi 0, %s288
      %s303 = sphi 0, %s289
      %s309 = sphi 0, %s311
      %s312 = sphi 0, %s309
      %s313 = sphi 0, %s312
      %s329 = sphi 0, %s313
    $region4: #{my_cnn_forward.2} parent=1 // loop_header_branch
      %24 = sbr.rel (%p22) target = $region8
    $region5: #{my_cnn_forward.2} parent=1 // loop_body
      %s26 = ssub.s32 %s21, 1
      %s27 = ssub.s32 %s21, 2
      %s28 = sadd.s32 %s21, 1
      %s29 = ssub.s32 %s21, %s28
      %p30 = scmp.eq.s32.totalorder %s29, 0
      %s32 = sadd.s32 %s31, 1
      %s33 = scalar_select %p30, %s31, %s32
      %p36 = pneg %p30
      %p37 = scmp.eq.s32.totalorder %s21, 1
      %p38 = por %p36, %p37
      %p39 = scmp.ne.s32.totalorder %s31, %s34
      %p40 = scmp.eq.s32.totalorder %s21, 0
      %p41 = por %p39, %p40
      %p42 = scmp.ne.s32.totalorder %s31, %s34
      %p43 = scmp.eq.s32.totalorder %s26, 1
      %p44 = por %p42, %p43
      %p45 = scmp.ne.s32.totalorder %s34, %s35
      %p46 = scmp.eq.s32.totalorder %s26, 0
      %p47 = por %p45, %p46
      %p48 = scmp.ne.s32.totalorder %s34, %s35
      %p49 = scmp.eq.s32.totalorder %s27, 1
      %p50 = por %p48, %p49
      %p52 = scmp.ne.s32.totalorder %s35, %s51
      %p53 = scmp.eq.s32.totalorder %s27, 0
      %p54 = por %p52, %p53
      %s56 = sadd.s32 %s55, 1
      %p59 = scmp.eq.s32.totalorder %s21, 1
      %p60 = scmp.ne.s32.totalorder %s55, %s57
      %p61 = scmp.eq.s32.totalorder %s21, 0
      %p62 = por %p60, %p61
      %p63 = scmp.ne.s32.totalorder %s55, %s57
      %p64 = scmp.eq.s32.totalorder %s26, 1
      %p65 = por %p63, %p64
      %p66 = scmp.ne.s32.totalorder %s57, %s58
      %p67 = scmp.eq.s32.totalorder %s26, 0
      %p68 = por %p66, %p67
      %p69 = scmp.ne.s32.totalorder %s57, %s58
      %p70 = scmp.eq.s32.totalorder %s27, 1
      %p71 = por %p69, %p70
      %p73 = scmp.ne.s32.totalorder %s58, %s72
      %p74 = scmp.eq.s32.totalorder %s27, 0
      %p75 = por %p73, %p74
      %s77 = sadd.s32 %s76, 1
      %p80 = scmp.eq.s32.totalorder %s21, 1
      %p81 = scmp.ne.s32.totalorder %s76, %s78
      %p82 = scmp.eq.s32.totalorder %s21, 0
      %p83 = por %p81, %p82
      %p84 = scmp.ne.s32.totalorder %s76, %s78
      %p85 = scmp.eq.s32.totalorder %s26, 1
      %p86 = por %p84, %p85
      %p87 = scmp.ne.s32.totalorder %s78, %s79
      %p88 = scmp.eq.s32.totalorder %s26, 0
      %p89 = por %p87, %p88
      %p90 = scmp.ne.s32.totalorder %s78, %s79
      %p91 = scmp.eq.s32.totalorder %s27, 1
      %p92 = por %p90, %p91
      %p94 = scmp.ne.s32.totalorder %s79, %s93
      %p95 = scmp.eq.s32.totalorder %s27, 0
      %p96 = por %p94, %p95
      %s98 = sadd.s32 %s97, 1
      %p101 = scmp.eq.s32.totalorder %s21, 1
      %p102 = scmp.ne.s32.totalorder %s97, %s99
      %p103 = scmp.eq.s32.totalorder %s21, 0
      %p104 = por %p102, %p103
      %p105 = scmp.ne.s32.totalorder %s97, %s99
      %p106 = scmp.eq.s32.totalorder %s26, 1
      %p107 = por %p105, %p106
      %p108 = scmp.ne.s32.totalorder %s99, %s100
      %p109 = scmp.eq.s32.totalorder %s26, 0
      %p110 = por %p108, %p109
      %p111 = scmp.ne.s32.totalorder %s99, %s100
      %p112 = scmp.eq.s32.totalorder %s27, 1
      %p113 = por %p111, %p112
      %p115 = scmp.ne.s32.totalorder %s100, %s114
      %p116 = scmp.eq.s32.totalorder %s27, 0
      %p117 = por %p115, %p116
      %s119 = sadd.s32 %s118, 1
      %p122 = scmp.eq.s32.totalorder %s21, 1
      %p123 = scmp.ne.s32.totalorder %s118, %s120
      %p124 = scmp.eq.s32.totalorder %s21, 0
      %p125 = por %p123, %p124
      %p126 = scmp.ne.s32.totalorder %s118, %s120
      %p127 = scmp.eq.s32.totalorder %s26, 1
      %p128 = por %p126, %p127
      %p129 = scmp.ne.s32.totalorder %s120, %s121
      %p130 = scmp.eq.s32.totalorder %s26, 0
      %p131 = por %p129, %p130
      %p132 = scmp.ne.s32.totalorder %s120, %s121
      %p133 = scmp.eq.s32.totalorder %s27, 1
      %p134 = por %p132, %p133
      %p136 = scmp.ne.s32.totalorder %s121, %s135
      %p137 = scmp.eq.s32.totalorder %s27, 0
      %p138 = por %p136, %p137
      %s140 = sadd.s32 %s139, 1
      %p143 = scmp.eq.s32.totalorder %s21, 1
      %p144 = scmp.ne.s32.totalorder %s139, %s141
      %p145 = scmp.eq.s32.totalorder %s21, 0
      %p146 = por %p144, %p145
      %p147 = scmp.ne.s32.totalorder %s139, %s141
      %p148 = scmp.eq.s32.totalorder %s26, 1
      %p149 = por %p147, %p148
      %p150 = scmp.ne.s32.totalorder %s141, %s142
      %p151 = scmp.eq.s32.totalorder %s26, 0
      %p152 = por %p150, %p151
      %p153 = scmp.ne.s32.totalorder %s141, %s142
      %p154 = scmp.eq.s32.totalorder %s27, 1
      %p155 = por %p153, %p154
      %p157 = scmp.ne.s32.totalorder %s142, %s156
      %p158 = scmp.eq.s32.totalorder %s27, 0
      %p159 = por %p157, %p158
      %s161 = sadd.s32 %s160, 1
      %p164 = scmp.eq.s32.totalorder %s21, 1
      %p165 = scmp.ne.s32.totalorder %s160, %s162
      %p166 = scmp.eq.s32.totalorder %s21, 0
      %p167 = por %p165, %p166
      %p168 = scmp.ne.s32.totalorder %s160, %s162
      %p169 = scmp.eq.s32.totalorder %s26, 1
      %p170 = por %p168, %p169
      %p171 = scmp.ne.s32.totalorder %s162, %s163
      %p172 = scmp.eq.s32.totalorder %s26, 0
      %p173 = por %p171, %p172
      %p174 = scmp.ne.s32.totalorder %s162, %s163
      %p175 = scmp.eq.s32.totalorder %s27, 1
      %p176 = por %p174, %p175
      %p178 = scmp.ne.s32.totalorder %s163, %s177
      %p179 = scmp.eq.s32.totalorder %s27, 0
      %p180 = por %p178, %p179
      %s182 = sadd.s32 %s181, 1
      %p185 = scmp.eq.s32.totalorder %s21, 1
      %p186 = scmp.ne.s32.totalorder %s181, %s183
      %p187 = scmp.eq.s32.totalorder %s21, 0
      %p188 = por %p186, %p187
      %p189 = scmp.ne.s32.totalorder %s181, %s183
      %p190 = scmp.eq.s32.totalorder %s26, 1
      %p191 = por %p189, %p190
      %p192 = scmp.ne.s32.totalorder %s183, %s184
      %p193 = scmp.eq.s32.totalorder %s26, 0
      %p194 = por %p192, %p193
      %p195 = scmp.ne.s32.totalorder %s183, %s184
      %p196 = scmp.eq.s32.totalorder %s27, 1
      %p197 = por %p195, %p196
      %p199 = scmp.ne.s32.totalorder %s184, %s198
      %p200 = scmp.eq.s32.totalorder %s27, 0
      %p201 = por %p199, %p200
      %s203 = sadd.s32 %s202, 1
      %p206 = scmp.eq.s32.totalorder %s21, 1
      %p207 = scmp.ne.s32.totalorder %s202, %s204
      %p208 = scmp.eq.s32.totalorder %s21, 0
      %p209 = por %p207, %p208
      %p210 = scmp.ne.s32.totalorder %s202, %s204
      %p211 = scmp.eq.s32.totalorder %s26, 1
      %p212 = por %p210, %p211
      %p213 = scmp.ne.s32.totalorder %s204, %s205
      %p214 = scmp.eq.s32.totalorder %s26, 0
      %p215 = por %p213, %p214
      %p216 = scmp.ne.s32.totalorder %s204, %s205
      %p217 = scmp.eq.s32.totalorder %s27, 1
      %p218 = por %p216, %p217
      %p220 = scmp.ne.s32.totalorder %s205, %s219
      %p221 = scmp.eq.s32.totalorder %s27, 0
      %p222 = por %p220, %p221
      %s224 = sadd.s32 %s223, 1
      %p227 = scmp.eq.s32.totalorder %s21, 1
      %p228 = scmp.ne.s32.totalorder %s223, %s225
      %p229 = scmp.eq.s32.totalorder %s21, 0
      %p230 = por %p228, %p229
      %p231 = scmp.ne.s32.totalorder %s223, %s225
      %p232 = scmp.eq.s32.totalorder %s26, 1
      %p233 = por %p231, %p232
      %p234 = scmp.ne.s32.totalorder %s225, %s226
      %p235 = scmp.eq.s32.totalorder %s26, 0
      %p236 = por %p234, %p235
      %p237 = scmp.ne.s32.totalorder %s225, %s226
      %p238 = scmp.eq.s32.totalorder %s27, 1
      %p239 = por %p237, %p238
      %p241 = scmp.ne.s32.totalorder %s226, %s240
      %p242 = scmp.eq.s32.totalorder %s27, 0
      %p243 = por %p241, %p242
      %s245 = sadd.s32 %s244, 1
      %p248 = scmp.eq.s32.totalorder %s21, 1
      %p249 = scmp.ne.s32.totalorder %s244, %s246
      %p250 = scmp.eq.s32.totalorder %s21, 0
      %p251 = por %p249, %p250
      %p252 = scmp.ne.s32.totalorder %s244, %s246
      %p253 = scmp.eq.s32.totalorder %s26, 1
      %p254 = por %p252, %p253
      %p255 = scmp.ne.s32.totalorder %s246, %s247
      %p256 = scmp.eq.s32.totalorder %s26, 0
      %p257 = por %p255, %p256
      %p258 = scmp.ne.s32.totalorder %s246, %s247
      %p259 = scmp.eq.s32.totalorder %s27, 1
      %p260 = por %p258, %p259
      %p262 = scmp.ne.s32.totalorder %s247, %s261
      %p263 = scmp.eq.s32.totalorder %s27, 0
      %p264 = por %p262, %p263
      %s266 = sadd.s32 %s265, 1
      %p269 = scmp.eq.s32.totalorder %s21, 1
      %p270 = scmp.ne.s32.totalorder %s265, %s267
      %p271 = scmp.eq.s32.totalorder %s21, 0
      %p272 = por %p270, %p271
      %p273 = scmp.ne.s32.totalorder %s265, %s267
      %p274 = scmp.eq.s32.totalorder %s26, 1
      %p275 = por %p273, %p274
      %p276 = scmp.ne.s32.totalorder %s267, %s268
      %p277 = scmp.eq.s32.totalorder %s26, 0
      %p278 = por %p276, %p277
      %p279 = scmp.ne.s32.totalorder %s267, %s268
      %p280 = scmp.eq.s32.totalorder %s27, 1
      %p281 = por %p279, %p280
      %p283 = scmp.ne.s32.totalorder %s268, %s282
      %p284 = scmp.eq.s32.totalorder %s27, 0
      %p285 = por %p283, %p284
      %s287 = sadd.s32 %s286, 1
      %p290 = scmp.eq.s32.totalorder %s21, 1
      %p291 = scmp.ne.s32.totalorder %s286, %s288
      %p292 = scmp.eq.s32.totalorder %s21, 0
      %p293 = por %p291, %p292
      %p294 = scmp.ne.s32.totalorder %s286, %s288
      %p295 = scmp.eq.s32.totalorder %s26, 1
      %p296 = por %p294, %p295
      %p297 = scmp.ne.s32.totalorder %s288, %s289
      %p298 = scmp.eq.s32.totalorder %s26, 0
      %p299 = por %p297, %p298
      %p300 = scmp.ne.s32.totalorder %s288, %s289
      %p301 = scmp.eq.s32.totalorder %s27, 1
      %p302 = por %p300, %p301
      %p304 = scmp.ne.s32.totalorder %s289, %s303
      %p305 = scmp.eq.s32.totalorder %s27, 0
      %p306 = por %p304, %p305
      %s307 = ssub.s32 %s21, %s28
      %p308 = scmp.eq.s32.totalorder %s307, 0
      %s310 = sadd.s32 %s309, 1
      %s311 = scalar_select %p308, %s309, %s310
      %p314 = pneg %p308
      %p315 = scmp.eq.s32.totalorder %s21, 1
      %p316 = por %p314, %p315
      %p317 = scmp.ne.s32.totalorder %s309, %s312
      %p318 = scmp.eq.s32.totalorder %s21, 0
      %p319 = por %p317, %p318
      %p320 = scmp.ne.s32.totalorder %s309, %s312
      %p321 = scmp.eq.s32.totalorder %s26, 1
      %p322 = por %p320, %p321
      %p323 = scmp.ne.s32.totalorder %s312, %s313
      %p324 = scmp.eq.s32.totalorder %s26, 0
      %p325 = por %p323, %p324
      %p326 = scmp.ne.s32.totalorder %s312, %s313
      %p327 = scmp.eq.s32.totalorder %s27, 1
      %p328 = por %p326, %p327
      %p330 = scmp.ne.s32.totalorder %s313, %s329
      %p331 = scmp.eq.s32.totalorder %s27, 0
      %p332 = por %p330, %p331
      %p333 = scmp.le.s32.totalorder 1, %s21
      %p334 = scmp.lt.s32.totalorder %s21, 3
      %p335 = pnand %p333, %p334
      %p336 = pneg %p335
      // Predicated region
      $region9: #{my_cnn_forward.2} parent=5 // pred_check
        _
      $region10: #{my_cnn_forward.2} parent=5 // pred_check_branch
        %338 = sbr.rel (%p335) target = $region12
      $region11: #{my_cnn_forward.2} parent=5 // pred_region
        %s339 = ssub.s32 %s21, 1
        // Predicated region
        $region13: #{my_cnn_forward.2} parent=11 // pred_check
          %p340 = pneg %p68
        $region14: #{my_cnn_forward.2} parent=11 // pred_check_branch
          %342 = sbr.rel (%p340) target = $region16
        $region15: #{my_cnn_forward.2} parent=11 // pred_region
          %344 = vsyncadd [#allocation4], 0
          %s345 = sshll.u32 %s1, 4
          %s346 = int_to_ptr.hbm [resolvable:$true] %s345
          %s347 = sshll.u32 [#allocation3], 4
          %s348 = int_to_ptr.vmem [resolvable:$true] %s347
          %353 = dma.hbm_to_vmem [thread:$0]  %s346, 7680, %s348, [#allocation4], 384, 384, 24
        $region16: #{my_cnn_forward.2} parent=11 // pred_fallthru
          _
        // Predicated region
        $region17: #{my_cnn_forward.2} parent=11 // pred_check
          %p354 = pneg %p89
        $region18: #{my_cnn_forward.2} parent=11 // pred_check_branch
          %356 = sbr.rel (%p354) target = $region20
        $region19: #{my_cnn_forward.2} parent=11 // pred_region
          _
        $region20: #{my_cnn_forward.2} parent=11 // pred_fallthru
          _
        // Predicated region
        $region21: #{my_cnn_forward.2} parent=11 // pred_check
          %p357 = pneg %p110
        $region22: #{my_cnn_forward.2} parent=11 // pred_check_branch
          %359 = sbr.rel (%p357) target = $region24
        $region23: #{my_cnn_forward.2} parent=11 // pred_region
          _
        $region24: #{my_cnn_forward.2} parent=11 // pred_fallthru
          _
        // Predicated region
        $region25: #{my_cnn_forward.2} parent=11 // pred_check
          %p360 = pneg %p131
        $region26: #{my_cnn_forward.2} parent=11 // pred_check_branch
          %362 = sbr.rel (%p360) target = $region28
        $region27: #{my_cnn_forward.2} parent=11 // pred_region
          _
        $region28: #{my_cnn_forward.2} parent=11 // pred_fallthru
          _
        // Predicated region
        $region29: #{my_cnn_forward.2} parent=11 // pred_check
          %p363 = pneg %p152
        $region30: #{my_cnn_forward.2} parent=11 // pred_check_branch
          %365 = sbr.rel (%p363) target = $region32
        $region31: #{my_cnn_forward.2} parent=11 // pred_region
          _
        $region32: #{my_cnn_forward.2} parent=11 // pred_fallthru
          _
        // Predicated region
        $region33: #{my_cnn_forward.2} parent=11 // pred_check
          %p366 = pneg %p173
        $region34: #{my_cnn_forward.2} parent=11 // pred_check_branch
          %368 = sbr.rel (%p366) target = $region36
        $region35: #{my_cnn_forward.2} parent=11 // pred_region
          _
        $region36: #{my_cnn_forward.2} parent=11 // pred_fallthru
          _
        // Predicated region
        $region37: #{my_cnn_forward.2} parent=11 // pred_check
          %p369 = pneg %p194
        $region38: #{my_cnn_forward.2} parent=11 // pred_check_branch
          %371 = sbr.rel (%p369) target = $region40
        $region39: #{my_cnn_forward.2} parent=11 // pred_region
          _
        $region40: #{my_cnn_forward.2} parent=11 // pred_fallthru
          _
        // Predicated region
        $region41: #{my_cnn_forward.2} parent=11 // pred_check
          %p372 = pneg %p215
        $region42: #{my_cnn_forward.2} parent=11 // pred_check_branch
          %374 = sbr.rel (%p372) target = $region44
        $region43: #{my_cnn_forward.2} parent=11 // pred_region
          _
        $region44: #{my_cnn_forward.2} parent=11 // pred_fallthru
          _
        // Predicated region
        $region45: #{my_cnn_forward.2} parent=11 // pred_check
          %p375 = pneg %p236
        $region46: #{my_cnn_forward.2} parent=11 // pred_check_branch
          %377 = sbr.rel (%p375) target = $region48
        $region47: #{my_cnn_forward.2} parent=11 // pred_region
          %379 = vsyncadd [#allocation6], 0
          %s380 = sshll.u32 %s9, 4
          %s381 = int_to_ptr.hbm [resolvable:$true] %s380
          %s382 = sshll.u32 [#allocation5], 4
          %s383 = int_to_ptr.vmem [resolvable:$true] %s382
          %388 = dma.hbm_to_vmem [thread:$0]  %s381, 4096, %s383, [#allocation6], 128, 128, 8
        $region48: #{my_cnn_forward.2} parent=11 // pred_fallthru
          _
        // Predicated region
        $region49: #{my_cnn_forward.2} parent=11 // pred_check
          %p389 = pneg %p257
        $region50: #{my_cnn_forward.2} parent=11 // pred_check_branch
          %391 = sbr.rel (%p389) target = $region52
        $region51: #{my_cnn_forward.2} parent=11 // pred_region
          %393 = vsyncadd [#allocation6], 0
          %s394 = sshll.u32 %s10, 4
          %s395 = int_to_ptr.hbm [resolvable:$true] %s394
          %s396 = sshll.u32 [#allocation7], 4
          %s397 = int_to_ptr.vmem [resolvable:$true] %s396
          %402 = dma.hbm_to_vmem [thread:$0]  %s395, 4096, %s397, [#allocation6], 128, 128, 8
        $region52: #{my_cnn_forward.2} parent=11 // pred_fallthru
          _
        // Predicated region
        $region53: #{my_cnn_forward.2} parent=11 // pred_check
          %p403 = pneg %p278
        $region54: #{my_cnn_forward.2} parent=11 // pred_check_branch
          %405 = sbr.rel (%p403) target = $region56
        $region55: #{my_cnn_forward.2} parent=11 // pred_region
          _
        $region56: #{my_cnn_forward.2} parent=11 // pred_fallthru
          _
        // Predicated region
        $region57: #{my_cnn_forward.2} parent=11 // pred_check
          %p406 = pneg %p299
        $region58: #{my_cnn_forward.2} parent=11 // pred_check_branch
          %408 = sbr.rel (%p406) target = $region60
        $region59: #{my_cnn_forward.2} parent=11 // pred_region
          _
        $region60: #{my_cnn_forward.2} parent=11 // pred_fallthru
          _
      $region12: #{my_cnn_forward.2} parent=5 // pred_fallthru
        _
      %p409 = scmp.lt.s32.totalorder %s21, 2
      // Predicated region
      $region61: #{my_cnn_forward.2} parent=5 // pred_check
        %p410 = pneg %p409
      $region62: #{my_cnn_forward.2} parent=5 // pred_check_branch
        %412 = sbr.rel (%p410) target = $region64
      $region63: #{my_cnn_forward.2} parent=5 // pred_region
        // Predicated region
        $region65: #{my_cnn_forward.2} parent=63 // pred_check
          %p413 = pneg %p41
        $region66: #{my_cnn_forward.2} parent=63 // pred_check_branch
          %415 = sbr.rel (%p413) target = $region68
        $region67: #{my_cnn_forward.2} parent=63 // pred_region
          %p416 = scmp.lt.s32.totalorder %s21, 1
          %s417 = scalar_select %p416, %s21, 1
          %s418 = smul.addr %s417, 13
          %s419 = smul.addr %s418, 8
          %s420 = scalar_lea.vmem %s0, %s419
        $region68: #{my_cnn_forward.2} parent=63 // pred_fallthru
          _
      $region64: #{my_cnn_forward.2} parent=5 // pred_fallthru
        _
      %p421 = scmp.le.s32.totalorder 1, %s21
      %p422 = scmp.lt.s32.totalorder %s21, 3
      %p423 = pnand %p421, %p422
      %p424 = pneg %p423
      // Predicated region
      $region69: #{my_cnn_forward.2} parent=5 // pred_check
        _
      $region70: #{my_cnn_forward.2} parent=5 // pred_check_branch
        %426 = sbr.rel (%p423) target = $region72
      $region71: #{my_cnn_forward.2} parent=5 // pred_region
        %s427 = ssub.s32 %s21, 1
        // Predicated region
        $region73: #{my_cnn_forward.2} parent=71 // pred_check
          %p428 = pneg %p68
        $region74: #{my_cnn_forward.2} parent=71 // pred_check_branch
          %430 = sbr.rel (%p428) target = $region76
        $region75: #{my_cnn_forward.2} parent=71 // pred_region
          %432 = dma.done [#allocation4], 7680
        $region76: #{my_cnn_forward.2} parent=71 // pred_fallthru
          _
        // Predicated region
        $region77: #{my_cnn_forward.2} parent=71 // pred_check
          %p433 = pneg %p236
        $region78: #{my_cnn_forward.2} parent=71 // pred_check_branch
          %435 = sbr.rel (%p433) target = $region80
        $region79: #{my_cnn_forward.2} parent=71 // pred_region
          %437 = dma.done [#allocation6], 4096
        $region80: #{my_cnn_forward.2} parent=71 // pred_fallthru
          _
        // Predicated region
        $region81: #{my_cnn_forward.2} parent=71 // pred_check
          %p438 = pneg %p257
        $region82: #{my_cnn_forward.2} parent=71 // pred_check_branch
          %440 = sbr.rel (%p438) target = $region84
        $region83: #{my_cnn_forward.2} parent=71 // pred_region
          %442 = dma.done [#allocation6], 4096
        $region84: #{my_cnn_forward.2} parent=71 // pred_fallthru
          _
        %p443 = scmp.lt.s32.totalorder %s26, 1
        %s444 = scalar_select %p443, %s26, 1
        %s445 = smul.addr %s444, 13
        %s446 = smul.addr %s445, 8
        %s447 = scalar_lea.vmem %s0, %s446
        %p448 = pneg %p47
        %p449 = pneg %p44
        %p450 = pneg %p68
        %p451 = pneg %p65
        %p452 = pneg %p89
        %p453 = pneg %p86
        %p454 = pneg %p110
        %p455 = pneg %p107
        %p456 = pneg %p131
        %p457 = pneg %p128
        %p458 = pneg %p152
        %p459 = pneg %p149
        %p460 = pneg %p173
        %p461 = pneg %p170
        %p462 = pneg %p194
        %p463 = pneg %p191
        %p464 = pneg %p215
        %p465 = pneg %p212
        %p466 = pneg %p236
        %p467 = pneg %p233
        %p468 = pneg %p257
        %p469 = pneg %p254
        %p470 = pneg %p278
        %p471 = pneg %p275
        %p472 = pneg %p299
        %p473 = pneg %p296
        %p474 = pneg %p325
        %p475 = pneg %p322
        %p476 = scmp.lt.s32.totalorder %s26, 1
        %s477 = scalar_select %p476, %s26, 1
        %s478 = smul.addr %s477, 3
        %s479 = smul.addr %s478, 8
        %s480 = scalar_lea.vmem %s13, %s479
        %p481 = scmp.lt.s32.totalorder %s26, 1
        %s482 = scalar_select %p481, %s26, 1
        %s483 = smul.addr %s482, 13
        %s484 = smul.addr %s483, 8
        %s485 = scalar_lea.vmem %s0, %s484
        %p486 = scmp.lt.s32.totalorder %s26, 1
        %s487 = scalar_select %p486, %s26, 1
        %s488 = smul.addr %s487, 3
        %s489 = smul.addr %s488, 8
        %s490 = scalar_lea.vmem %s13, %s489
        %v491 = vld [vmem:[%s485] sm:$0xff]
        %v492 = vld [vmem:[%s485 + $0x8] sm:$0xff]
        %v493 = vld [vmem:[%s485 + $0x10] sm:$0xff]
        %v494 = vld [vmem:[%s485 + $0x18] sm:$0xff]
        %v495 = vld [vmem:[%s485 + $0x20] sm:$0xff]
        %v496 = vld [vmem:[%s485 + $0x28] sm:$0xff]
        %v497 = vld [vmem:[%s485 + $0x30] sm:$0xff]
        %v498 = vld [vmem:[%s485 + $0x38] sm:$0xff]
        %v499 = vld [vmem:[%s485 + $0x40] sm:$0xff]
        %v500 = vld [vmem:[%s485 + $0x48] sm:$0xff]
        %v501 = vld [vmem:[%s485 + $0x50] sm:$0xff]
        %v502 = vld [vmem:[%s485 + $0x58] sm:$0xff]
        %v503 = vld [vmem:[#allocation3] sm:$0xff]
        %v504 = vld [vmem:[#allocation3 + $0x8] sm:$0xff]
        %v505 = vld [vmem:[#allocation3 + $0x10] sm:$0xff]
        %v506 = vld [vmem:[#allocation3 + $0x18] sm:$0xff]
        %v507 = vld [vmem:[#allocation3 + $0x20] sm:$0xff]
        %v508 = vld [vmem:[#allocation3 + $0x28] sm:$0xff]
        %v509 = vld [vmem:[#allocation3 + $0x30] sm:$0xff]
        %v510 = vld [vmem:[#allocation3 + $0x38] sm:$0xff]
        %v511 = vld [vmem:[#allocation3 + $0x40] sm:$0xff]
        %v512 = vld [vmem:[#allocation3 + $0x48] sm:$0xf]
        %v513 = vld [vmem:[#allocation3 + $0x50] sm:$0xf]
        %v514 = vld [vmem:[#allocation3 + $0x58] sm:$0xf]
        %v515 = vld [vmem:[%s485 + $0x1] sm:$0xff]
        %v516 = vld [vmem:[%s485 + $0x9] sm:$0xff]
        %v517 = vld [vmem:[%s485 + $0x11] sm:$0xff]
        %v518 = vld [vmem:[%s485 + $0x19] sm:$0xff]
        %v519 = vld [vmem:[%s485 + $0x21] sm:$0xff]
        %v520 = vld [vmem:[%s485 + $0x29] sm:$0xff]
        %v521 = vld [vmem:[%s485 + $0x31] sm:$0xff]
        %v522 = vld [vmem:[%s485 + $0x39] sm:$0xff]
        %v523 = vld [vmem:[%s485 + $0x41] sm:$0xff]
        %v524 = vld [vmem:[%s485 + $0x49] sm:$0xff]
        %v525 = vld [vmem:[%s485 + $0x51] sm:$0xff]
        %v526 = vld [vmem:[%s485 + $0x59] sm:$0xff]
        %s527 = scalar_lea.vmem [#allocation3], 96
        %v528 = vld [vmem:[%s527] sm:$0xff]
        %v529 = vld [vmem:[%s527 + $0x8] sm:$0xff]
        %v530 = vld [vmem:[%s527 + $0x10] sm:$0xff]
        %v531 = vld [vmem:[%s527 + $0x18] sm:$0xff]
        %v532 = vld [vmem:[%s527 + $0x20] sm:$0xff]
        %v533 = vld [vmem:[%s527 + $0x28] sm:$0xff]
        %v534 = vld [vmem:[%s527 + $0x30] sm:$0xff]
        %v535 = vld [vmem:[%s527 + $0x38] sm:$0xff]
        %v536 = vld [vmem:[%s527 + $0x40] sm:$0xff]
        %v537 = vld [vmem:[%s527 + $0x48] sm:$0xf]
        %v538 = vld [vmem:[%s527 + $0x50] sm:$0xf]
        %v539 = vld [vmem:[%s527 + $0x58] sm:$0xf]
        %vm540 = vcmask 228352
        %v542 = vsel %vm540, %v515, 0
        %v545 = vsel %vm540, %v516, 0
        %v548 = vsel %vm540, %v517, 0
        %v551 = vsel %vm540, %v518, 0
        %v554 = vsel %vm540, %v519, 0
        %v557 = vsel %vm540, %v520, 0
        %v560 = vsel %vm540, %v521, 0
        %v563 = vsel %vm540, %v522, 0
        %v566 = vsel %vm540, %v523, 0
        %v569 = vsel %vm540, %v524, 0
        %v572 = vsel %vm540, %v525, 0
        %v575 = vsel %vm540, %v526, 0
        %vm577 = vcmask 1043456
        %v579 = vsel %vm577, %v537, 0
        %v582 = vsel %vm577, %v538, 0
        %v585 = vsel %vm577, %v539, 0
        %587 = vmatpush.msra.mxu0 0.0
        %588 = vmatpush.msra.mxu0 0.0
        %589 = vmatpush.msra.mxu0 0.0
        %590 = vmatpush.msra.mxu0 0.0
        %591 = vmatpush.msra.mxu0 0.0
        %592 = vmatpush.msra.mxu0 0.0
        %593 = vmatpush.msra.mxu0 0.0
        %594 = vmatpush.msra.mxu0 0.0
        %595 = vmatpush.msra.mxu0 0.0
        %596 = vmatpush.msra.mxu0 0.0
        %597 = vmatpush.msra.mxu0 0.0
        %598 = vmatpush.msra.mxu0 0.0
        %599 = vmatpush.msra.mxu0 %v579
        %600 = vmatpush.msra.mxu0 %v534
        %601 = vmatpush.msra.mxu0 %v531
        %602 = vmatpush.msra.mxu0 %v528
        %603 = vmatmul.f32.gmra.mxu0 %v542
        %v604 = vpop.f32.mrf.mxu0
        %v605 = vadd.f32 0.0, %v604
        %606 = vmatmul.f32.gmra.mxu0 %v545
        %v607 = vpop.f32.mrf.mxu0
        %v608 = vadd.f32 0.0, %v607
        %609 = vmatmul.f32.gmra.mxu0 %v548
        %v610 = vpop.f32.mrf.mxu0
        %v611 = vadd.f32 0.0, %v610
        %612 = vmatmul.f32.gmra.mxu0 %v551
        %v613 = vpop.f32.mrf.mxu0
        %v614 = vadd.f32 0.0, %v613
        %615 = vmatmul.f32.gmra.mxu0 %v554
        %v616 = vpop.f32.mrf.mxu0
        %v617 = vadd.f32 0.0, %v616
        %618 = vmatmul.f32.gmra.mxu0 %v557
        %v619 = vpop.f32.mrf.mxu0
        %v620 = vadd.f32 0.0, %v619
        %621 = vmatmul.f32.gmra.mxu0 %v560
        %v622 = vpop.f32.mrf.mxu0
        %v623 = vadd.f32 0.0, %v622
        %624 = vmatmul.f32.gmra.mxu0 %v563
        %v625 = vpop.f32.mrf.mxu0
        %v626 = vadd.f32 0.0, %v625
        %627 = vmatmul.f32.gmra.mxu0 %v566
        %v628 = vpop.f32.mrf.mxu0
        %v629 = vadd.f32 0.0, %v628
        %630 = vmatmul.f32.gmra.mxu0 %v569
        %v631 = vpop.f32.mrf.mxu0
        %v632 = vadd.f32 0.0, %v631
        %633 = vmatmul.f32.gmra.mxu0 %v572
        %v634 = vpop.f32.mrf.mxu0
        %v635 = vadd.f32 0.0, %v634
        %636 = vmatmul.f32.gmra.mxu0 %v575
        %v637 = vpop.f32.mrf.mxu0
        %v638 = vadd.f32 0.0, %v637
        %639 = vdwg.mxu0
        %640 = vmatpush.msra.mxu0 0.0
        %641 = vmatpush.msra.mxu0 0.0
        %642 = vmatpush.msra.mxu0 0.0
        %643 = vmatpush.msra.mxu0 0.0
        %644 = vmatpush.msra.mxu0 0.0
        %645 = vmatpush.msra.mxu0 0.0
        %646 = vmatpush.msra.mxu0 0.0
        %647 = vmatpush.msra.mxu0 0.0
        %648 = vmatpush.msra.mxu0 0.0
        %649 = vmatpush.msra.mxu0 0.0
        %650 = vmatpush.msra.mxu0 0.0
        %651 = vmatpush.msra.mxu0 0.0
        %652 = vmatpush.msra.mxu0 %v582
        %653 = vmatpush.msra.mxu0 %v535
        %654 = vmatpush.msra.mxu0 %v532
        %655 = vmatpush.msra.mxu0 %v529
        %656 = vmatmul.f32.gmra.mxu0 %v542
        %v657 = vpop.f32.mrf.mxu0
        %v658 = vadd.f32 0.0, %v657
        %659 = vmatmul.f32.gmra.mxu0 %v545
        %v660 = vpop.f32.mrf.mxu0
        %v661 = vadd.f32 0.0, %v660
        %662 = vmatmul.f32.gmra.mxu0 %v548
        %v663 = vpop.f32.mrf.mxu0
        %v664 = vadd.f32 0.0, %v663
        %665 = vmatmul.f32.gmra.mxu0 %v551
        %v666 = vpop.f32.mrf.mxu0
        %v667 = vadd.f32 0.0, %v666
        %668 = vmatmul.f32.gmra.mxu0 %v554
        %v669 = vpop.f32.mrf.mxu0
        %v670 = vadd.f32 0.0, %v669
        %671 = vmatmul.f32.gmra.mxu0 %v557
        %v672 = vpop.f32.mrf.mxu0
        %v673 = vadd.f32 0.0, %v672
        %674 = vmatmul.f32.gmra.mxu0 %v560
        %v675 = vpop.f32.mrf.mxu0
        %v676 = vadd.f32 0.0, %v675
        %677 = vmatmul.f32.gmra.mxu0 %v563
        %v678 = vpop.f32.mrf.mxu0
        %v679 = vadd.f32 0.0, %v678
        %680 = vmatmul.f32.gmra.mxu0 %v566
        %v681 = vpop.f32.mrf.mxu0
        %v682 = vadd.f32 0.0, %v681
        %683 = vmatmul.f32.gmra.mxu0 %v569
        %v684 = vpop.f32.mrf.mxu0
        %v685 = vadd.f32 0.0, %v684
        %686 = vmatmul.f32.gmra.mxu0 %v572
        %v687 = vpop.f32.mrf.mxu0
        %v688 = vadd.f32 0.0, %v687
        %689 = vmatmul.f32.gmra.mxu0 %v575
        %v690 = vpop.f32.mrf.mxu0
        %v691 = vadd.f32 0.0, %v690
        %692 = vdwg.mxu0
        %693 = vmatpush.msra.mxu0 0.0
        %694 = vmatpush.msra.mxu0 0.0
        %695 = vmatpush.msra.mxu0 0.0
        %696 = vmatpush.msra.mxu0 0.0
        %697 = vmatpush.msra.mxu0 0.0
        %698 = vmatpush.msra.mxu0 0.0
        %699 = vmatpush.msra.mxu0 0.0
        %700 = vmatpush.msra.mxu0 0.0
        %701 = vmatpush.msra.mxu0 0.0
        %702 = vmatpush.msra.mxu0 0.0
        %703 = vmatpush.msra.mxu0 0.0
        %704 = vmatpush.msra.mxu0 0.0
        %705 = vmatpush.msra.mxu0 %v585
        %706 = vmatpush.msra.mxu0 %v536
        %707 = vmatpush.msra.mxu0 %v533
        %708 = vmatpush.msra.mxu0 %v530
        %709 = vmatmul.f32.gmra.mxu0 %v542
        %v710 = vpop.f32.mrf.mxu0
        %v711 = vadd.f32 0.0, %v710
        %712 = vmatmul.f32.gmra.mxu0 %v545
        %v713 = vpop.f32.mrf.mxu0
        %v714 = vadd.f32 0.0, %v713
        %715 = vmatmul.f32.gmra.mxu0 %v548
        %v716 = vpop.f32.mrf.mxu0
        %v717 = vadd.f32 0.0, %v716
        %718 = vmatmul.f32.gmra.mxu0 %v551
        %v719 = vpop.f32.mrf.mxu0
        %v720 = vadd.f32 0.0, %v719
        %721 = vmatmul.f32.gmra.mxu0 %v554
        %v722 = vpop.f32.mrf.mxu0
        %v723 = vadd.f32 0.0, %v722
        %724 = vmatmul.f32.gmra.mxu0 %v557
        %v725 = vpop.f32.mrf.mxu0
        %v726 = vadd.f32 0.0, %v725
        %727 = vmatmul.f32.gmra.mxu0 %v560
        %v728 = vpop.f32.mrf.mxu0
        %v729 = vadd.f32 0.0, %v728
        %730 = vmatmul.f32.gmra.mxu0 %v563
        %v731 = vpop.f32.mrf.mxu0
        %v732 = vadd.f32 0.0, %v731
        %733 = vmatmul.f32.gmra.mxu0 %v566
        %v734 = vpop.f32.mrf.mxu0
        %v735 = vadd.f32 0.0, %v734
        %736 = vmatmul.f32.gmra.mxu0 %v569
        %v737 = vpop.f32.mrf.mxu0
        %v738 = vadd.f32 0.0, %v737
        %739 = vmatmul.f32.gmra.mxu0 %v572
        %v740 = vpop.f32.mrf.mxu0
        %v741 = vadd.f32 0.0, %v740
        %742 = vmatmul.f32.gmra.mxu0 %v575
        %v743 = vpop.f32.mrf.mxu0
        %v744 = vadd.f32 0.0, %v743
        %745 = vdwg.mxu0
        %v747 = vsel %vm540, %v491, 0
        %v750 = vsel %vm540, %v492, 0
        %v753 = vsel %vm540, %v493, 0
        %v756 = vsel %vm540, %v494, 0
        %v759 = vsel %vm540, %v495, 0
        %v762 = vsel %vm540, %v496, 0
        %v765 = vsel %vm540, %v497, 0
        %v768 = vsel %vm540, %v498, 0
        %v771 = vsel %vm540, %v499, 0
        %v774 = vsel %vm540, %v500, 0
        %v777 = vsel %vm540, %v501, 0
        %v780 = vsel %vm540, %v502, 0
        %v783 = vsel %vm577, %v512, 0
        %v786 = vsel %vm577, %v513, 0
        %v789 = vsel %vm577, %v514, 0
        %791 = vmatpush.msra.mxu0 0.0
        %792 = vmatpush.msra.mxu0 0.0
        %793 = vmatpush.msra.mxu0 0.0
        %794 = vmatpush.msra.mxu0 0.0
        %795 = vmatpush.msra.mxu0 0.0
        %796 = vmatpush.msra.mxu0 0.0
        %797 = vmatpush.msra.mxu0 0.0
        %798 = vmatpush.msra.mxu0 0.0
        %799 = vmatpush.msra.mxu0 0.0
        %800 = vmatpush.msra.mxu0 0.0
        %801 = vmatpush.msra.mxu0 0.0
        %802 = vmatpush.msra.mxu0 0.0
        %803 = vmatpush.msra.mxu0 %v783
        %804 = vmatpush.msra.mxu0 %v509
        %805 = vmatpush.msra.mxu0 %v506
        %806 = vmatpush.msra.mxu0 %v503
        %807 = vmatmul.f32.gmra.mxu0 %v747
        %v808 = vpop.f32.mrf.mxu0
        %v809 = vadd.f32 %v605, %v808
        %810 = vmatmul.f32.gmra.mxu0 %v750
        %v811 = vpop.f32.mrf.mxu0
        %v812 = vadd.f32 %v608, %v811
        %813 = vmatmul.f32.gmra.mxu0 %v753
        %v814 = vpop.f32.mrf.mxu0
        %v815 = vadd.f32 %v611, %v814
        %816 = vmatmul.f32.gmra.mxu0 %v756
        %v817 = vpop.f32.mrf.mxu0
        %v818 = vadd.f32 %v614, %v817
        %819 = vmatmul.f32.gmra.mxu0 %v759
        %v820 = vpop.f32.mrf.mxu0
        %v821 = vadd.f32 %v617, %v820
        %822 = vmatmul.f32.gmra.mxu0 %v762
        %v823 = vpop.f32.mrf.mxu0
        %v824 = vadd.f32 %v620, %v823
        %825 = vmatmul.f32.gmra.mxu0 %v765
        %v826 = vpop.f32.mrf.mxu0
        %v827 = vadd.f32 %v623, %v826
        %828 = vmatmul.f32.gmra.mxu0 %v768
        %v829 = vpop.f32.mrf.mxu0
        %v830 = vadd.f32 %v626, %v829
        %831 = vmatmul.f32.gmra.mxu0 %v771
        %v832 = vpop.f32.mrf.mxu0
        %v833 = vadd.f32 %v629, %v832
        %834 = vmatmul.f32.gmra.mxu0 %v774
        %v835 = vpop.f32.mrf.mxu0
        %v836 = vadd.f32 %v632, %v835
        %837 = vmatmul.f32.gmra.mxu0 %v777
        %v838 = vpop.f32.mrf.mxu0
        %v839 = vadd.f32 %v635, %v838
        %840 = vmatmul.f32.gmra.mxu0 %v780
        %v841 = vpop.f32.mrf.mxu0
        %v842 = vadd.f32 %v638, %v841
        %843 = vdwg.mxu0
        %844 = vmatpush.msra.mxu0 0.0
        %845 = vmatpush.msra.mxu0 0.0
        %846 = vmatpush.msra.mxu0 0.0
        %847 = vmatpush.msra.mxu0 0.0
        %848 = vmatpush.msra.mxu0 0.0
        %849 = vmatpush.msra.mxu0 0.0
        %850 = vmatpush.msra.mxu0 0.0
        %851 = vmatpush.msra.mxu0 0.0
        %852 = vmatpush.msra.mxu0 0.0
        %853 = vmatpush.msra.mxu0 0.0
        %854 = vmatpush.msra.mxu0 0.0
        %855 = vmatpush.msra.mxu0 0.0
        %856 = vmatpush.msra.mxu0 %v786
        %857 = vmatpush.msra.mxu0 %v510
        %858 = vmatpush.msra.mxu0 %v507
        %859 = vmatpush.msra.mxu0 %v504
        %860 = vmatmul.f32.gmra.mxu0 %v747
        %v861 = vpop.f32.mrf.mxu0
        %v862 = vadd.f32 %v658, %v861
        %863 = vmatmul.f32.gmra.mxu0 %v750
        %v864 = vpop.f32.mrf.mxu0
        %v865 = vadd.f32 %v661, %v864
        %866 = vmatmul.f32.gmra.mxu0 %v753
        %v867 = vpop.f32.mrf.mxu0
        %v868 = vadd.f32 %v664, %v867
        %869 = vmatmul.f32.gmra.mxu0 %v756
        %v870 = vpop.f32.mrf.mxu0
        %v871 = vadd.f32 %v667, %v870
        %872 = vmatmul.f32.gmra.mxu0 %v759
        %v873 = vpop.f32.mrf.mxu0
        %v874 = vadd.f32 %v670, %v873
        %875 = vmatmul.f32.gmra.mxu0 %v762
        %v876 = vpop.f32.mrf.mxu0
        %v877 = vadd.f32 %v673, %v876
        %878 = vmatmul.f32.gmra.mxu0 %v765
        %v879 = vpop.f32.mrf.mxu0
        %v880 = vadd.f32 %v676, %v879
        %881 = vmatmul.f32.gmra.mxu0 %v768
        %v882 = vpop.f32.mrf.mxu0
        %v883 = vadd.f32 %v679, %v882
        %884 = vmatmul.f32.gmra.mxu0 %v771
        %v885 = vpop.f32.mrf.mxu0
        %v886 = vadd.f32 %v682, %v885
        %887 = vmatmul.f32.gmra.mxu0 %v774
        %v888 = vpop.f32.mrf.mxu0
        %v889 = vadd.f32 %v685, %v888
        %890 = vmatmul.f32.gmra.mxu0 %v777
        %v891 = vpop.f32.mrf.mxu0
        %v892 = vadd.f32 %v688, %v891
        %893 = vmatmul.f32.gmra.mxu0 %v780
        %v894 = vpop.f32.mrf.mxu0
        %v895 = vadd.f32 %v691, %v894
        %896 = vdwg.mxu0
        %897 = vmatpush.msra.mxu0 0.0
        %898 = vmatpush.msra.mxu0 0.0
        %899 = vmatpush.msra.mxu0 0.0
        %900 = vmatpush.msra.mxu0 0.0
        %901 = vmatpush.msra.mxu0 0.0
        %902 = vmatpush.msra.mxu0 0.0
        %903 = vmatpush.msra.mxu0 0.0
        %904 = vmatpush.msra.mxu0 0.0
        %905 = vmatpush.msra.mxu0 0.0
        %906 = vmatpush.msra.mxu0 0.0
        %907 = vmatpush.msra.mxu0 0.0
        %908 = vmatpush.msra.mxu0 0.0
        %909 = vmatpush.msra.mxu0 %v789
        %910 = vmatpush.msra.mxu0 %v511
        %911 = vmatpush.msra.mxu0 %v508
        %912 = vmatpush.msra.mxu0 %v505
        %913 = vmatmul.f32.gmra.mxu0 %v747
        %v914 = vpop.f32.mrf.mxu0
        %v915 = vadd.f32 %v711, %v914
        %916 = vmatmul.f32.gmra.mxu0 %v750
        %v917 = vpop.f32.mrf.mxu0
        %v918 = vadd.f32 %v714, %v917
        %919 = vmatmul.f32.gmra.mxu0 %v753
        %v920 = vpop.f32.mrf.mxu0
        %v921 = vadd.f32 %v717, %v920
        %922 = vmatmul.f32.gmra.mxu0 %v756
        %v923 = vpop.f32.mrf.mxu0
        %v924 = vadd.f32 %v720, %v923
        %925 = vmatmul.f32.gmra.mxu0 %v759
        %v926 = vpop.f32.mrf.mxu0
        %v927 = vadd.f32 %v723, %v926
        %928 = vmatmul.f32.gmra.mxu0 %v762
        %v929 = vpop.f32.mrf.mxu0
        %v930 = vadd.f32 %v726, %v929
        %931 = vmatmul.f32.gmra.mxu0 %v765
        %v932 = vpop.f32.mrf.mxu0
        %v933 = vadd.f32 %v729, %v932
        %934 = vmatmul.f32.gmra.mxu0 %v768
        %v935 = vpop.f32.mrf.mxu0
        %v936 = vadd.f32 %v732, %v935
        %937 = vmatmul.f32.gmra.mxu0 %v771
        %v938 = vpop.f32.mrf.mxu0
        %v939 = vadd.f32 %v735, %v938
        %940 = vmatmul.f32.gmra.mxu0 %v774
        %v941 = vpop.f32.mrf.mxu0
        %v942 = vadd.f32 %v738, %v941
        %943 = vmatmul.f32.gmra.mxu0 %v777
        %v944 = vpop.f32.mrf.mxu0
        %v945 = vadd.f32 %v741, %v944
        %946 = vmatmul.f32.gmra.mxu0 %v780
        %v947 = vpop.f32.mrf.mxu0
        %v948 = vadd.f32 %v744, %v947
        %949 = vdwg.mxu0
        %v950 = vld [vmem:[%s485 + $0x2] sm:$0xff]
        %v951 = vld [vmem:[%s485 + $0xa] sm:$0xff]
        %v952 = vld [vmem:[%s485 + $0x12] sm:$0xff]
        %v953 = vld [vmem:[%s485 + $0x1a] sm:$0xff]
        %v954 = vld [vmem:[%s485 + $0x22] sm:$0xff]
        %v955 = vld [vmem:[%s485 + $0x2a] sm:$0xff]
        %v956 = vld [vmem:[%s485 + $0x32] sm:$0xff]
        %v957 = vld [vmem:[%s485 + $0x3a] sm:$0xff]
        %v958 = vld [vmem:[%s485 + $0x42] sm:$0xff]
        %v959 = vld [vmem:[%s485 + $0x4a] sm:$0xff]
        %v960 = vld [vmem:[%s485 + $0x52] sm:$0xff]
        %v961 = vld [vmem:[%s485 + $0x5a] sm:$0xff]
        %s962 = scalar_lea.vmem [#allocation3], 192
        %v963 = vld [vmem:[%s962] sm:$0xff]
        %v964 = vld [vmem:[%s962 + $0x8] sm:$0xff]
        %v965 = vld [vmem:[%s962 + $0x10] sm:$0xff]
        %v966 = vld [vmem:[%s962 + $0x18] sm:$0xff]
        %v967 = vld [vmem:[%s962 + $0x20] sm:$0xff]
        %v968 = vld [vmem:[%s962 + $0x28] sm:$0xff]
        %v969 = vld [vmem:[%s962 + $0x30] sm:$0xff]
        %v970 = vld [vmem:[%s962 + $0x38] sm:$0xff]
        %v971 = vld [vmem:[%s962 + $0x40] sm:$0xff]
        %v972 = vld [vmem:[%s962 + $0x48] sm:$0xf]
        %v973 = vld [vmem:[%s962 + $0x50] sm:$0xf]
        %v974 = vld [vmem:[%s962 + $0x58] sm:$0xf]
        %v976 = vsel %vm540, %v950, 0
        %v979 = vsel %vm540, %v951, 0
        %v982 = vsel %vm540, %v952, 0
        %v985 = vsel %vm540, %v953, 0
        %v988 = vsel %vm540, %v954, 0
        %v991 = vsel %vm540, %v955, 0
        %v994 = vsel %vm540, %v956, 0
        %v997 = vsel %vm540, %v957, 0
        %v1000 = vsel %vm540, %v958, 0
        %v1003 = vsel %vm540, %v959, 0
        %v1006 = vsel %vm540, %v960, 0
        %v1009 = vsel %vm540, %v961, 0
        %v1012 = vsel %vm577, %v972, 0
        %v1015 = vsel %vm577, %v973, 0
        %v1018 = vsel %vm577, %v974, 0
        %1020 = vmatpush.msra.mxu0 0.0
        %1021 = vmatpush.msra.mxu0 0.0
        %1022 = vmatpush.msra.mxu0 0.0
        %1023 = vmatpush.msra.mxu0 0.0
        %1024 = vmatpush.msra.mxu0 0.0
        %1025 = vmatpush.msra.mxu0 0.0
        %1026 = vmatpush.msra.mxu0 0.0
        %1027 = vmatpush.msra.mxu0 0.0
        %1028 = vmatpush.msra.mxu0 0.0
        %1029 = vmatpush.msra.mxu0 0.0
        %1030 = vmatpush.msra.mxu0 0.0
        %1031 = vmatpush.msra.mxu0 0.0
        %1032 = vmatpush.msra.mxu0 %v1012
        %1033 = vmatpush.msra.mxu0 %v969
        %1034 = vmatpush.msra.mxu0 %v966
        %1035 = vmatpush.msra.mxu0 %v963
        %1036 = vmatmul.f32.gmra.mxu0 %v976
        %v1037 = vpop.f32.mrf.mxu0
        %v1038 = vadd.f32 0.0, %v1037
        %1039 = vmatmul.f32.gmra.mxu0 %v979
        %v1040 = vpop.f32.mrf.mxu0
        %v1041 = vadd.f32 0.0, %v1040
        %1042 = vmatmul.f32.gmra.mxu0 %v982
        %v1043 = vpop.f32.mrf.mxu0
        %v1044 = vadd.f32 0.0, %v1043
        %1045 = vmatmul.f32.gmra.mxu0 %v985
        %v1046 = vpop.f32.mrf.mxu0
        %v1047 = vadd.f32 0.0, %v1046
        %1048 = vmatmul.f32.gmra.mxu0 %v988
        %v1049 = vpop.f32.mrf.mxu0
        %v1050 = vadd.f32 0.0, %v1049
        %1051 = vmatmul.f32.gmra.mxu0 %v991
        %v1052 = vpop.f32.mrf.mxu0
        %v1053 = vadd.f32 0.0, %v1052
        %1054 = vmatmul.f32.gmra.mxu0 %v994
        %v1055 = vpop.f32.mrf.mxu0
        %v1056 = vadd.f32 0.0, %v1055
        %1057 = vmatmul.f32.gmra.mxu0 %v997
        %v1058 = vpop.f32.mrf.mxu0
        %v1059 = vadd.f32 0.0, %v1058
        %1060 = vmatmul.f32.gmra.mxu0 %v1000
        %v1061 = vpop.f32.mrf.mxu0
        %v1062 = vadd.f32 0.0, %v1061
        %1063 = vmatmul.f32.gmra.mxu0 %v1003
        %v1064 = vpop.f32.mrf.mxu0
        %v1065 = vadd.f32 0.0, %v1064
        %1066 = vmatmul.f32.gmra.mxu0 %v1006
        %v1067 = vpop.f32.mrf.mxu0
        %v1068 = vadd.f32 0.0, %v1067
        %1069 = vmatmul.f32.gmra.mxu0 %v1009
        %v1070 = vpop.f32.mrf.mxu0
        %v1071 = vadd.f32 0.0, %v1070
        %1072 = vdwg.mxu0
        %1073 = vmatpush.msra.mxu0 0.0
        %1074 = vmatpush.msra.mxu0 0.0
        %1075 = vmatpush.msra.mxu0 0.0
        %1076 = vmatpush.msra.mxu0 0.0
        %1077 = vmatpush.msra.mxu0 0.0
        %1078 = vmatpush.msra.mxu0 0.0
        %1079 = vmatpush.msra.mxu0 0.0
        %1080 = vmatpush.msra.mxu0 0.0
        %1081 = vmatpush.msra.mxu0 0.0
        %1082 = vmatpush.msra.mxu0 0.0
        %1083 = vmatpush.msra.mxu0 0.0
        %1084 = vmatpush.msra.mxu0 0.0
        %1085 = vmatpush.msra.mxu0 %v1015
        %1086 = vmatpush.msra.mxu0 %v970
        %1087 = vmatpush.msra.mxu0 %v967
        %1088 = vmatpush.msra.mxu0 %v964
        %1089 = vmatmul.f32.gmra.mxu0 %v976
        %v1090 = vpop.f32.mrf.mxu0
        %v1091 = vadd.f32 0.0, %v1090
        %1092 = vmatmul.f32.gmra.mxu0 %v979
        %v1093 = vpop.f32.mrf.mxu0
        %v1094 = vadd.f32 0.0, %v1093
        %1095 = vmatmul.f32.gmra.mxu0 %v982
        %v1096 = vpop.f32.mrf.mxu0
        %v1097 = vadd.f32 0.0, %v1096
        %1098 = vmatmul.f32.gmra.mxu0 %v985
        %v1099 = vpop.f32.mrf.mxu0
        %v1100 = vadd.f32 0.0, %v1099
        %1101 = vmatmul.f32.gmra.mxu0 %v988
        %v1102 = vpop.f32.mrf.mxu0
        %v1103 = vadd.f32 0.0, %v1102
        %1104 = vmatmul.f32.gmra.mxu0 %v991
        %v1105 = vpop.f32.mrf.mxu0
        %v1106 = vadd.f32 0.0, %v1105
        %1107 = vmatmul.f32.gmra.mxu0 %v994
        %v1108 = vpop.f32.mrf.mxu0
        %v1109 = vadd.f32 0.0, %v1108
        %1110 = vmatmul.f32.gmra.mxu0 %v997
        %v1111 = vpop.f32.mrf.mxu0
        %v1112 = vadd.f32 0.0, %v1111
        %1113 = vmatmul.f32.gmra.mxu0 %v1000
        %v1114 = vpop.f32.mrf.mxu0
        %v1115 = vadd.f32 0.0, %v1114
        %1116 = vmatmul.f32.gmra.mxu0 %v1003
        %v1117 = vpop.f32.mrf.mxu0
        %v1118 = vadd.f32 0.0, %v1117
        %1119 = vmatmul.f32.gmra.mxu0 %v1006
        %v1120 = vpop.f32.mrf.mxu0
        %v1121 = vadd.f32 0.0, %v1120
        %1122 = vmatmul.f32.gmra.mxu0 %v1009
        %v1123 = vpop.f32.mrf.mxu0
        %v1124 = vadd.f32 0.0, %v1123
        %1125 = vdwg.mxu0
        %1126 = vmatpush.msra.mxu0 0.0
        %1127 = vmatpush.msra.mxu0 0.0
        %1128 = vmatpush.msra.mxu0 0.0
        %1129 = vmatpush.msra.mxu0 0.0
        %1130 = vmatpush.msra.mxu0 0.0
        %1131 = vmatpush.msra.mxu0 0.0
        %1132 = vmatpush.msra.mxu0 0.0
        %1133 = vmatpush.msra.mxu0 0.0
        %1134 = vmatpush.msra.mxu0 0.0
        %1135 = vmatpush.msra.mxu0 0.0
        %1136 = vmatpush.msra.mxu0 0.0
        %1137 = vmatpush.msra.mxu0 0.0
        %1138 = vmatpush.msra.mxu0 %v1018
        %1139 = vmatpush.msra.mxu0 %v971
        %1140 = vmatpush.msra.mxu0 %v968
        %1141 = vmatpush.msra.mxu0 %v965
        %1142 = vmatmul.f32.gmra.mxu0 %v976
        %v1143 = vpop.f32.mrf.mxu0
        %v1144 = vadd.f32 0.0, %v1143
        %1145 = vmatmul.f32.gmra.mxu0 %v979
        %v1146 = vpop.f32.mrf.mxu0
        %v1147 = vadd.f32 0.0, %v1146
        %1148 = vmatmul.f32.gmra.mxu0 %v982
        %v1149 = vpop.f32.mrf.mxu0
        %v1150 = vadd.f32 0.0, %v1149
        %1151 = vmatmul.f32.gmra.mxu0 %v985
        %v1152 = vpop.f32.mrf.mxu0
        %v1153 = vadd.f32 0.0, %v1152
        %1154 = vmatmul.f32.gmra.mxu0 %v988
        %v1155 = vpop.f32.mrf.mxu0
        %v1156 = vadd.f32 0.0, %v1155
        %1157 = vmatmul.f32.gmra.mxu0 %v991
        %v1158 = vpop.f32.mrf.mxu0
        %v1159 = vadd.f32 0.0, %v1158
        %1160 = vmatmul.f32.gmra.mxu0 %v994
        %v1161 = vpop.f32.mrf.mxu0
        %v1162 = vadd.f32 0.0, %v1161
        %1163 = vmatmul.f32.gmra.mxu0 %v997
        %v1164 = vpop.f32.mrf.mxu0
        %v1165 = vadd.f32 0.0, %v1164
        %1166 = vmatmul.f32.gmra.mxu0 %v1000
        %v1167 = vpop.f32.mrf.mxu0
        %v1168 = vadd.f32 0.0, %v1167
        %1169 = vmatmul.f32.gmra.mxu0 %v1003
        %v1170 = vpop.f32.mrf.mxu0
        %v1171 = vadd.f32 0.0, %v1170
        %1172 = vmatmul.f32.gmra.mxu0 %v1006
        %v1173 = vpop.f32.mrf.mxu0
        %v1174 = vadd.f32 0.0, %v1173
        %1175 = vmatmul.f32.gmra.mxu0 %v1009
        %v1176 = vpop.f32.mrf.mxu0
        %v1177 = vadd.f32 0.0, %v1176
        %1178 = vdwg.mxu0
        %v1179 = vadd.f32 %v809, %v1038
        %v1180 = vadd.f32 %v862, %v1091
        %v1181 = vadd.f32 %v915, %v1144
        %v1182 = vadd.f32 %v812, %v1041
        %v1183 = vadd.f32 %v865, %v1094
        %v1184 = vadd.f32 %v918, %v1147
        %v1185 = vadd.f32 %v815, %v1044
        %v1186 = vadd.f32 %v868, %v1097
        %v1187 = vadd.f32 %v921, %v1150
        %v1188 = vadd.f32 %v818, %v1047
        %v1189 = vadd.f32 %v871, %v1100
        %v1190 = vadd.f32 %v924, %v1153
        %v1191 = vadd.f32 %v821, %v1050
        %v1192 = vadd.f32 %v874, %v1103
        %v1193 = vadd.f32 %v927, %v1156
        %v1194 = vadd.f32 %v824, %v1053
        %v1195 = vadd.f32 %v877, %v1106
        %v1196 = vadd.f32 %v930, %v1159
        %v1197 = vadd.f32 %v827, %v1056
        %v1198 = vadd.f32 %v880, %v1109
        %v1199 = vadd.f32 %v933, %v1162
        %v1200 = vadd.f32 %v830, %v1059
        %v1201 = vadd.f32 %v883, %v1112
        %v1202 = vadd.f32 %v936, %v1165
        %v1203 = vadd.f32 %v833, %v1062
        %v1204 = vadd.f32 %v886, %v1115
        %v1205 = vadd.f32 %v939, %v1168
        %v1206 = vadd.f32 %v836, %v1065
        %v1207 = vadd.f32 %v889, %v1118
        %v1208 = vadd.f32 %v942, %v1171
        %v1209 = vadd.f32 %v839, %v1068
        %v1210 = vadd.f32 %v892, %v1121
        %v1211 = vadd.f32 %v945, %v1174
        %v1212 = vadd.f32 %v842, %v1071
        %v1213 = vadd.f32 %v895, %v1124
        %v1214 = vadd.f32 %v948, %v1177
        %v1215 = vld [vmem:[%s485 + $0x3] sm:$0xff]
        %v1216 = vld [vmem:[%s485 + $0xb] sm:$0xff]
        %v1217 = vld [vmem:[%s485 + $0x13] sm:$0xff]
        %v1218 = vld [vmem:[%s485 + $0x1b] sm:$0xff]
        %v1219 = vld [vmem:[%s485 + $0x23] sm:$0xff]
        %v1220 = vld [vmem:[%s485 + $0x2b] sm:$0xff]
        %v1221 = vld [vmem:[%s485 + $0x33] sm:$0xff]
        %v1222 = vld [vmem:[%s485 + $0x3b] sm:$0xff]
        %v1223 = vld [vmem:[%s485 + $0x43] sm:$0xff]
        %v1224 = vld [vmem:[%s485 + $0x4b] sm:$0xff]
        %v1225 = vld [vmem:[%s485 + $0x53] sm:$0xff]
        %v1226 = vld [vmem:[%s485 + $0x5b] sm:$0xff]
        %s1227 = scalar_lea.vmem [#allocation3], 288
        %v1228 = vld [vmem:[%s1227] sm:$0xff]
        %v1229 = vld [vmem:[%s1227 + $0x8] sm:$0xff]
        %v1230 = vld [vmem:[%s1227 + $0x10] sm:$0xff]
        %v1231 = vld [vmem:[%s1227 + $0x18] sm:$0xff]
        %v1232 = vld [vmem:[%s1227 + $0x20] sm:$0xff]
        %v1233 = vld [vmem:[%s1227 + $0x28] sm:$0xff]
        %v1234 = vld [vmem:[%s1227 + $0x30] sm:$0xff]
        %v1235 = vld [vmem:[%s1227 + $0x38] sm:$0xff]
        %v1236 = vld [vmem:[%s1227 + $0x40] sm:$0xff]
        %v1237 = vld [vmem:[%s1227 + $0x48] sm:$0xf]
        %v1238 = vld [vmem:[%s1227 + $0x50] sm:$0xf]
        %v1239 = vld [vmem:[%s1227 + $0x58] sm:$0xf]
        %v1241 = vsel %vm540, %v1215, 0
        %v1244 = vsel %vm540, %v1216, 0
        %v1247 = vsel %vm540, %v1217, 0
        %v1250 = vsel %vm540, %v1218, 0
        %v1253 = vsel %vm540, %v1219, 0
        %v1256 = vsel %vm540, %v1220, 0
        %v1259 = vsel %vm540, %v1221, 0
        %v1262 = vsel %vm540, %v1222, 0
        %v1265 = vsel %vm540, %v1223, 0
        %v1268 = vsel %vm540, %v1224, 0
        %v1271 = vsel %vm540, %v1225, 0
        %v1274 = vsel %vm540, %v1226, 0
        %v1277 = vsel %vm577, %v1237, 0
        %v1280 = vsel %vm577, %v1238, 0
        %v1283 = vsel %vm577, %v1239, 0
        %1285 = vmatpush.msra.mxu0 0.0
        %1286 = vmatpush.msra.mxu0 0.0
        %1287 = vmatpush.msra.mxu0 0.0
        %1288 = vmatpush.msra.mxu0 0.0
        %1289 = vmatpush.msra.mxu0 0.0
        %1290 = vmatpush.msra.mxu0 0.0
        %1291 = vmatpush.msra.mxu0 0.0
        %1292 = vmatpush.msra.mxu0 0.0
        %1293 = vmatpush.msra.mxu0 0.0
        %1294 = vmatpush.msra.mxu0 0.0
        %1295 = vmatpush.msra.mxu0 0.0
        %1296 = vmatpush.msra.mxu0 0.0
        %1297 = vmatpush.msra.mxu0 %v1277
        %1298 = vmatpush.msra.mxu0 %v1234
        %1299 = vmatpush.msra.mxu0 %v1231
        %1300 = vmatpush.msra.mxu0 %v1228
        %1301 = vmatmul.f32.gmra.mxu0 %v1241
        %v1302 = vpop.f32.mrf.mxu0
        %v1303 = vadd.f32 0.0, %v1302
        %1304 = vmatmul.f32.gmra.mxu0 %v1244
        %v1305 = vpop.f32.mrf.mxu0
        %v1306 = vadd.f32 0.0, %v1305
        %1307 = vmatmul.f32.gmra.mxu0 %v1247
        %v1308 = vpop.f32.mrf.mxu0
        %v1309 = vadd.f32 0.0, %v1308
        %1310 = vmatmul.f32.gmra.mxu0 %v1250
        %v1311 = vpop.f32.mrf.mxu0
        %v1312 = vadd.f32 0.0, %v1311
        %1313 = vmatmul.f32.gmra.mxu0 %v1253
        %v1314 = vpop.f32.mrf.mxu0
        %v1315 = vadd.f32 0.0, %v1314
        %1316 = vmatmul.f32.gmra.mxu0 %v1256
        %v1317 = vpop.f32.mrf.mxu0
        %v1318 = vadd.f32 0.0, %v1317
        %1319 = vmatmul.f32.gmra.mxu0 %v1259
        %v1320 = vpop.f32.mrf.mxu0
        %v1321 = vadd.f32 0.0, %v1320
        %1322 = vmatmul.f32.gmra.mxu0 %v1262
        %v1323 = vpop.f32.mrf.mxu0
        %v1324 = vadd.f32 0.0, %v1323
        %1325 = vmatmul.f32.gmra.mxu0 %v1265
        %v1326 = vpop.f32.mrf.mxu0
        %v1327 = vadd.f32 0.0, %v1326
        %1328 = vmatmul.f32.gmra.mxu0 %v1268
        %v1329 = vpop.f32.mrf.mxu0
        %v1330 = vadd.f32 0.0, %v1329
        %1331 = vmatmul.f32.gmra.mxu0 %v1271
        %v1332 = vpop.f32.mrf.mxu0
        %v1333 = vadd.f32 0.0, %v1332
        %1334 = vmatmul.f32.gmra.mxu0 %v1274
        %v1335 = vpop.f32.mrf.mxu0
        %v1336 = vadd.f32 0.0, %v1335
        %1337 = vdwg.mxu0
        %1338 = vmatpush.msra.mxu0 0.0
        %1339 = vmatpush.msra.mxu0 0.0
        %1340 = vmatpush.msra.mxu0 0.0
        %1341 = vmatpush.msra.mxu0 0.0
        %1342 = vmatpush.msra.mxu0 0.0
        %1343 = vmatpush.msra.mxu0 0.0
        %1344 = vmatpush.msra.mxu0 0.0
        %1345 = vmatpush.msra.mxu0 0.0
        %1346 = vmatpush.msra.mxu0 0.0
        %1347 = vmatpush.msra.mxu0 0.0
        %1348 = vmatpush.msra.mxu0 0.0
        %1349 = vmatpush.msra.mxu0 0.0
        %1350 = vmatpush.msra.mxu0 %v1280
        %1351 = vmatpush.msra.mxu0 %v1235
        %1352 = vmatpush.msra.mxu0 %v1232
        %1353 = vmatpush.msra.mxu0 %v1229
        %1354 = vmatmul.f32.gmra.mxu0 %v1241
        %v1355 = vpop.f32.mrf.mxu0
        %v1356 = vadd.f32 0.0, %v1355
        %1357 = vmatmul.f32.gmra.mxu0 %v1244
        %v1358 = vpop.f32.mrf.mxu0
        %v1359 = vadd.f32 0.0, %v1358
        %1360 = vmatmul.f32.gmra.mxu0 %v1247
        %v1361 = vpop.f32.mrf.mxu0
        %v1362 = vadd.f32 0.0, %v1361
        %1363 = vmatmul.f32.gmra.mxu0 %v1250
        %v1364 = vpop.f32.mrf.mxu0
        %v1365 = vadd.f32 0.0, %v1364
        %1366 = vmatmul.f32.gmra.mxu0 %v1253
        %v1367 = vpop.f32.mrf.mxu0
        %v1368 = vadd.f32 0.0, %v1367
        %1369 = vmatmul.f32.gmra.mxu0 %v1256
        %v1370 = vpop.f32.mrf.mxu0
        %v1371 = vadd.f32 0.0, %v1370
        %1372 = vmatmul.f32.gmra.mxu0 %v1259
        %v1373 = vpop.f32.mrf.mxu0
        %v1374 = vadd.f32 0.0, %v1373
        %1375 = vmatmul.f32.gmra.mxu0 %v1262
        %v1376 = vpop.f32.mrf.mxu0
        %v1377 = vadd.f32 0.0, %v1376
        %1378 = vmatmul.f32.gmra.mxu0 %v1265
        %v1379 = vpop.f32.mrf.mxu0
        %v1380 = vadd.f32 0.0, %v1379
        %1381 = vmatmul.f32.gmra.mxu0 %v1268
        %v1382 = vpop.f32.mrf.mxu0
        %v1383 = vadd.f32 0.0, %v1382
        %1384 = vmatmul.f32.gmra.mxu0 %v1271
        %v1385 = vpop.f32.mrf.mxu0
        %v1386 = vadd.f32 0.0, %v1385
        %1387 = vmatmul.f32.gmra.mxu0 %v1274
        %v1388 = vpop.f32.mrf.mxu0
        %v1389 = vadd.f32 0.0, %v1388
        %1390 = vdwg.mxu0
        %1391 = vmatpush.msra.mxu0 0.0
        %1392 = vmatpush.msra.mxu0 0.0
        %1393 = vmatpush.msra.mxu0 0.0
        %1394 = vmatpush.msra.mxu0 0.0
        %1395 = vmatpush.msra.mxu0 0.0
        %1396 = vmatpush.msra.mxu0 0.0
        %1397 = vmatpush.msra.mxu0 0.0
        %1398 = vmatpush.msra.mxu0 0.0
        %1399 = vmatpush.msra.mxu0 0.0
        %1400 = vmatpush.msra.mxu0 0.0
        %1401 = vmatpush.msra.mxu0 0.0
        %1402 = vmatpush.msra.mxu0 0.0
        %1403 = vmatpush.msra.mxu0 %v1283
        %1404 = vmatpush.msra.mxu0 %v1236
        %1405 = vmatpush.msra.mxu0 %v1233
        %1406 = vmatpush.msra.mxu0 %v1230
        %1407 = vmatmul.f32.gmra.mxu0 %v1241
        %v1408 = vpop.f32.mrf.mxu0
        %v1409 = vadd.f32 0.0, %v1408
        %1410 = vmatmul.f32.gmra.mxu0 %v1244
        %v1411 = vpop.f32.mrf.mxu0
        %v1412 = vadd.f32 0.0, %v1411
        %1413 = vmatmul.f32.gmra.mxu0 %v1247
        %v1414 = vpop.f32.mrf.mxu0
        %v1415 = vadd.f32 0.0, %v1414
        %1416 = vmatmul.f32.gmra.mxu0 %v1250
        %v1417 = vpop.f32.mrf.mxu0
        %v1418 = vadd.f32 0.0, %v1417
        %1419 = vmatmul.f32.gmra.mxu0 %v1253
        %v1420 = vpop.f32.mrf.mxu0
        %v1421 = vadd.f32 0.0, %v1420
        %1422 = vmatmul.f32.gmra.mxu0 %v1256
        %v1423 = vpop.f32.mrf.mxu0
        %v1424 = vadd.f32 0.0, %v1423
        %1425 = vmatmul.f32.gmra.mxu0 %v1259
        %v1426 = vpop.f32.mrf.mxu0
        %v1427 = vadd.f32 0.0, %v1426
        %1428 = vmatmul.f32.gmra.mxu0 %v1262
        %v1429 = vpop.f32.mrf.mxu0
        %v1430 = vadd.f32 0.0, %v1429
        %1431 = vmatmul.f32.gmra.mxu0 %v1265
        %v1432 = vpop.f32.mrf.mxu0
        %v1433 = vadd.f32 0.0, %v1432
        %1434 = vmatmul.f32.gmra.mxu0 %v1268
        %v1435 = vpop.f32.mrf.mxu0
        %v1436 = vadd.f32 0.0, %v1435
        %1437 = vmatmul.f32.gmra.mxu0 %v1271
        %v1438 = vpop.f32.mrf.mxu0
        %v1439 = vadd.f32 0.0, %v1438
        %1440 = vmatmul.f32.gmra.mxu0 %v1274
        %v1441 = vpop.f32.mrf.mxu0
        %v1442 = vadd.f32 0.0, %v1441
        %1443 = vdwg.mxu0
        %v1444 = vadd.f32 %v1179, %v1303
        %v1445 = vadd.f32 %v1180, %v1356
        %v1446 = vadd.f32 %v1181, %v1409
        %v1447 = vadd.f32 %v1182, %v1306
        %v1448 = vadd.f32 %v1183, %v1359
        %v1449 = vadd.f32 %v1184, %v1412
        %v1450 = vadd.f32 %v1185, %v1309
        %v1451 = vadd.f32 %v1186, %v1362
        %v1452 = vadd.f32 %v1187, %v1415
        %v1453 = vadd.f32 %v1188, %v1312
        %v1454 = vadd.f32 %v1189, %v1365
        %v1455 = vadd.f32 %v1190, %v1418
        %v1456 = vadd.f32 %v1191, %v1315
        %v1457 = vadd.f32 %v1192, %v1368
        %v1458 = vadd.f32 %v1193, %v1421
        %v1459 = vadd.f32 %v1194, %v1318
        %v1460 = vadd.f32 %v1195, %v1371
        %v1461 = vadd.f32 %v1196, %v1424
        %v1462 = vadd.f32 %v1197, %v1321
        %v1463 = vadd.f32 %v1198, %v1374
        %v1464 = vadd.f32 %v1199, %v1427
        %v1465 = vadd.f32 %v1200, %v1324
        %v1466 = vadd.f32 %v1201, %v1377
        %v1467 = vadd.f32 %v1202, %v1430
        %v1468 = vadd.f32 %v1203, %v1327
        %v1469 = vadd.f32 %v1204, %v1380
        %v1470 = vadd.f32 %v1205, %v1433
        %v1471 = vadd.f32 %v1206, %v1330
        %v1472 = vadd.f32 %v1207, %v1383
        %v1473 = vadd.f32 %v1208, %v1436
        %v1474 = vadd.f32 %v1209, %v1333
        %v1475 = vadd.f32 %v1210, %v1386
        %v1476 = vadd.f32 %v1211, %v1439
        %v1477 = vadd.f32 %v1212, %v1336
        %v1478 = vadd.f32 %v1213, %v1389
        %v1479 = vadd.f32 %v1214, %v1442
        %v1480 = vld [vmem:[%s485 + $0x4] sm:$0xff]
        %v1481 = vld [vmem:[%s485 + $0xc] sm:$0xff]
        %v1482 = vld [vmem:[%s485 + $0x14] sm:$0xff]
        %v1483 = vld [vmem:[%s485 + $0x1c] sm:$0xff]
        %v1484 = vld [vmem:[%s485 + $0x24] sm:$0xff]
        %v1485 = vld [vmem:[%s485 + $0x2c] sm:$0xff]
        %v1486 = vld [vmem:[%s485 + $0x34] sm:$0xff]
        %v1487 = vld [vmem:[%s485 + $0x3c] sm:$0xff]
        %v1488 = vld [vmem:[%s485 + $0x44] sm:$0xff]
        %v1489 = vld [vmem:[%s485 + $0x4c] sm:$0xff]
        %v1490 = vld [vmem:[%s485 + $0x54] sm:$0xff]
        %v1491 = vld [vmem:[%s485 + $0x5c] sm:$0xff]
        %s1492 = scalar_lea.vmem [#allocation3], 384
        %v1493 = vld [vmem:[%s1492] sm:$0xff]
        %v1494 = vld [vmem:[%s1492 + $0x8] sm:$0xff]
        %v1495 = vld [vmem:[%s1492 + $0x10] sm:$0xff]
        %v1496 = vld [vmem:[%s1492 + $0x18] sm:$0xff]
        %v1497 = vld [vmem:[%s1492 + $0x20] sm:$0xff]
        %v1498 = vld [vmem:[%s1492 + $0x28] sm:$0xff]
        %v1499 = vld [vmem:[%s1492 + $0x30] sm:$0xff]
        %v1500 = vld [vmem:[%s1492 + $0x38] sm:$0xff]
        %v1501 = vld [vmem:[%s1492 + $0x40] sm:$0xff]
        %v1502 = vld [vmem:[%s1492 + $0x48] sm:$0xf]
        %v1503 = vld [vmem:[%s1492 + $0x50] sm:$0xf]
        %v1504 = vld [vmem:[%s1492 + $0x58] sm:$0xf]
        %v1506 = vsel %vm540, %v1480, 0
        %v1509 = vsel %vm540, %v1481, 0
        %v1512 = vsel %vm540, %v1482, 0
        %v1515 = vsel %vm540, %v1483, 0
        %v1518 = vsel %vm540, %v1484, 0
        %v1521 = vsel %vm540, %v1485, 0
        %v1524 = vsel %vm540, %v1486, 0
        %v1527 = vsel %vm540, %v1487, 0
        %v1530 = vsel %vm540, %v1488, 0
        %v1533 = vsel %vm540, %v1489, 0
        %v1536 = vsel %vm540, %v1490, 0
        %v1539 = vsel %vm540, %v1491, 0
        %v1542 = vsel %vm577, %v1502, 0
        %v1545 = vsel %vm577, %v1503, 0
        %v1548 = vsel %vm577, %v1504, 0
        %1550 = vmatpush.msra.mxu0 0.0
        %1551 = vmatpush.msra.mxu0 0.0
        %1552 = vmatpush.msra.mxu0 0.0
        %1553 = vmatpush.msra.mxu0 0.0
        %1554 = vmatpush.msra.mxu0 0.0
        %1555 = vmatpush.msra.mxu0 0.0
        %1556 = vmatpush.msra.mxu0 0.0
        %1557 = vmatpush.msra.mxu0 0.0
        %1558 = vmatpush.msra.mxu0 0.0
        %1559 = vmatpush.msra.mxu0 0.0
        %1560 = vmatpush.msra.mxu0 0.0
        %1561 = vmatpush.msra.mxu0 0.0
        %1562 = vmatpush.msra.mxu0 %v1542
        %1563 = vmatpush.msra.mxu0 %v1499
        %1564 = vmatpush.msra.mxu0 %v1496
        %1565 = vmatpush.msra.mxu0 %v1493
        %1566 = vmatmul.f32.gmra.mxu0 %v1506
        %v1567 = vpop.f32.mrf.mxu0
        %v1568 = vadd.f32 0.0, %v1567
        %1569 = vmatmul.f32.gmra.mxu0 %v1509
        %v1570 = vpop.f32.mrf.mxu0
        %v1571 = vadd.f32 0.0, %v1570
        %1572 = vmatmul.f32.gmra.mxu0 %v1512
        %v1573 = vpop.f32.mrf.mxu0
        %v1574 = vadd.f32 0.0, %v1573
        %1575 = vmatmul.f32.gmra.mxu0 %v1515
        %v1576 = vpop.f32.mrf.mxu0
        %v1577 = vadd.f32 0.0, %v1576
        %1578 = vmatmul.f32.gmra.mxu0 %v1518
        %v1579 = vpop.f32.mrf.mxu0
        %v1580 = vadd.f32 0.0, %v1579
        %1581 = vmatmul.f32.gmra.mxu0 %v1521
        %v1582 = vpop.f32.mrf.mxu0
        %v1583 = vadd.f32 0.0, %v1582
        %1584 = vmatmul.f32.gmra.mxu0 %v1524
        %v1585 = vpop.f32.mrf.mxu0
        %v1586 = vadd.f32 0.0, %v1585
        %1587 = vmatmul.f32.gmra.mxu0 %v1527
        %v1588 = vpop.f32.mrf.mxu0
        %v1589 = vadd.f32 0.0, %v1588
        %1590 = vmatmul.f32.gmra.mxu0 %v1530
        %v1591 = vpop.f32.mrf.mxu0
        %v1592 = vadd.f32 0.0, %v1591
        %1593 = vmatmul.f32.gmra.mxu0 %v1533
        %v1594 = vpop.f32.mrf.mxu0
        %v1595 = vadd.f32 0.0, %v1594
        %1596 = vmatmul.f32.gmra.mxu0 %v1536
        %v1597 = vpop.f32.mrf.mxu0
        %v1598 = vadd.f32 0.0, %v1597
        %1599 = vmatmul.f32.gmra.mxu0 %v1539
        %v1600 = vpop.f32.mrf.mxu0
        %v1601 = vadd.f32 0.0, %v1600
        %1602 = vdwg.mxu0
        %1603 = vmatpush.msra.mxu0 0.0
        %1604 = vmatpush.msra.mxu0 0.0
        %1605 = vmatpush.msra.mxu0 0.0
        %1606 = vmatpush.msra.mxu0 0.0
        %1607 = vmatpush.msra.mxu0 0.0
        %1608 = vmatpush.msra.mxu0 0.0
        %1609 = vmatpush.msra.mxu0 0.0
        %1610 = vmatpush.msra.mxu0 0.0
        %1611 = vmatpush.msra.mxu0 0.0
        %1612 = vmatpush.msra.mxu0 0.0
        %1613 = vmatpush.msra.mxu0 0.0
        %1614 = vmatpush.msra.mxu0 0.0
        %1615 = vmatpush.msra.mxu0 %v1545
        %1616 = vmatpush.msra.mxu0 %v1500
        %1617 = vmatpush.msra.mxu0 %v1497
        %1618 = vmatpush.msra.mxu0 %v1494
        %1619 = vmatmul.f32.gmra.mxu0 %v1506
        %v1620 = vpop.f32.mrf.mxu0
        %v1621 = vadd.f32 0.0, %v1620
        %1622 = vmatmul.f32.gmra.mxu0 %v1509
        %v1623 = vpop.f32.mrf.mxu0
        %v1624 = vadd.f32 0.0, %v1623
        %1625 = vmatmul.f32.gmra.mxu0 %v1512
        %v1626 = vpop.f32.mrf.mxu0
        %v1627 = vadd.f32 0.0, %v1626
        %1628 = vmatmul.f32.gmra.mxu0 %v1515
        %v1629 = vpop.f32.mrf.mxu0
        %v1630 = vadd.f32 0.0, %v1629
        %1631 = vmatmul.f32.gmra.mxu0 %v1518
        %v1632 = vpop.f32.mrf.mxu0
        %v1633 = vadd.f32 0.0, %v1632
        %1634 = vmatmul.f32.gmra.mxu0 %v1521
        %v1635 = vpop.f32.mrf.mxu0
        %v1636 = vadd.f32 0.0, %v1635
        %1637 = vmatmul.f32.gmra.mxu0 %v1524
        %v1638 = vpop.f32.mrf.mxu0
        %v1639 = vadd.f32 0.0, %v1638
        %1640 = vmatmul.f32.gmra.mxu0 %v1527
        %v1641 = vpop.f32.mrf.mxu0
        %v1642 = vadd.f32 0.0, %v1641
        %1643 = vmatmul.f32.gmra.mxu0 %v1530
        %v1644 = vpop.f32.mrf.mxu0
        %v1645 = vadd.f32 0.0, %v1644
        %1646 = vmatmul.f32.gmra.mxu0 %v1533
        %v1647 = vpop.f32.mrf.mxu0
        %v1648 = vadd.f32 0.0, %v1647
        %1649 = vmatmul.f32.gmra.mxu0 %v1536
        %v1650 = vpop.f32.mrf.mxu0
        %v1651 = vadd.f32 0.0, %v1650
        %1652 = vmatmul.f32.gmra.mxu0 %v1539
        %v1653 = vpop.f32.mrf.mxu0
        %v1654 = vadd.f32 0.0, %v1653
        %1655 = vdwg.mxu0
        %1656 = vmatpush.msra.mxu0 0.0
        %1657 = vmatpush.msra.mxu0 0.0
        %1658 = vmatpush.msra.mxu0 0.0
        %1659 = vmatpush.msra.mxu0 0.0
        %1660 = vmatpush.msra.mxu0 0.0
        %1661 = vmatpush.msra.mxu0 0.0
        %1662 = vmatpush.msra.mxu0 0.0
        %1663 = vmatpush.msra.mxu0 0.0
        %1664 = vmatpush.msra.mxu0 0.0
        %1665 = vmatpush.msra.mxu0 0.0
        %1666 = vmatpush.msra.mxu0 0.0
        %1667 = vmatpush.msra.mxu0 0.0
        %1668 = vmatpush.msra.mxu0 %v1548
        %1669 = vmatpush.msra.mxu0 %v1501
        %1670 = vmatpush.msra.mxu0 %v1498
        %1671 = vmatpush.msra.mxu0 %v1495
        %1672 = vmatmul.f32.gmra.mxu0 %v1506
        %v1673 = vpop.f32.mrf.mxu0
        %v1674 = vadd.f32 0.0, %v1673
        %1675 = vmatmul.f32.gmra.mxu0 %v1509
        %v1676 = vpop.f32.mrf.mxu0
        %v1677 = vadd.f32 0.0, %v1676
        %1678 = vmatmul.f32.gmra.mxu0 %v1512
        %v1679 = vpop.f32.mrf.mxu0
        %v1680 = vadd.f32 0.0, %v1679
        %1681 = vmatmul.f32.gmra.mxu0 %v1515
        %v1682 = vpop.f32.mrf.mxu0
        %v1683 = vadd.f32 0.0, %v1682
        %1684 = vmatmul.f32.gmra.mxu0 %v1518
        %v1685 = vpop.f32.mrf.mxu0
        %v1686 = vadd.f32 0.0, %v1685
        %1687 = vmatmul.f32.gmra.mxu0 %v1521
        %v1688 = vpop.f32.mrf.mxu0
        %v1689 = vadd.f32 0.0, %v1688
        %1690 = vmatmul.f32.gmra.mxu0 %v1524
        %v1691 = vpop.f32.mrf.mxu0
        %v1692 = vadd.f32 0.0, %v1691
        %1693 = vmatmul.f32.gmra.mxu0 %v1527
        %v1694 = vpop.f32.mrf.mxu0
        %v1695 = vadd.f32 0.0, %v1694
        %1696 = vmatmul.f32.gmra.mxu0 %v1530
        %v1697 = vpop.f32.mrf.mxu0
        %v1698 = vadd.f32 0.0, %v1697
        %1699 = vmatmul.f32.gmra.mxu0 %v1533
        %v1700 = vpop.f32.mrf.mxu0
        %v1701 = vadd.f32 0.0, %v1700
        %1702 = vmatmul.f32.gmra.mxu0 %v1536
        %v1703 = vpop.f32.mrf.mxu0
        %v1704 = vadd.f32 0.0, %v1703
        %1705 = vmatmul.f32.gmra.mxu0 %v1539
        %v1706 = vpop.f32.mrf.mxu0
        %v1707 = vadd.f32 0.0, %v1706
        %1708 = vdwg.mxu0
        %v1709 = vadd.f32 %v1444, %v1568
        %v1710 = vadd.f32 %v1445, %v1621
        %v1711 = vadd.f32 %v1446, %v1674
        %v1712 = vadd.f32 %v1447, %v1571
        %v1713 = vadd.f32 %v1448, %v1624
        %v1714 = vadd.f32 %v1449, %v1677
        %v1715 = vadd.f32 %v1450, %v1574
        %v1716 = vadd.f32 %v1451, %v1627
        %v1717 = vadd.f32 %v1452, %v1680
        %v1718 = vadd.f32 %v1453, %v1577
        %v1719 = vadd.f32 %v1454, %v1630
        %v1720 = vadd.f32 %v1455, %v1683
        %v1721 = vadd.f32 %v1456, %v1580
        %v1722 = vadd.f32 %v1457, %v1633
        %v1723 = vadd.f32 %v1458, %v1686
        %v1724 = vadd.f32 %v1459, %v1583
        %v1725 = vadd.f32 %v1460, %v1636
        %v1726 = vadd.f32 %v1461, %v1689
        %v1727 = vadd.f32 %v1462, %v1586
        %v1728 = vadd.f32 %v1463, %v1639
        %v1729 = vadd.f32 %v1464, %v1692
        %v1730 = vadd.f32 %v1465, %v1589
        %v1731 = vadd.f32 %v1466, %v1642
        %v1732 = vadd.f32 %v1467, %v1695
        %v1733 = vadd.f32 %v1468, %v1592
        %v1734 = vadd.f32 %v1469, %v1645
        %v1735 = vadd.f32 %v1470, %v1698
        %v1736 = vadd.f32 %v1471, %v1595
        %v1737 = vadd.f32 %v1472, %v1648
        %v1738 = vadd.f32 %v1473, %v1701
        %v1739 = vadd.f32 %v1474, %v1598
        %v1740 = vadd.f32 %v1475, %v1651
        %v1741 = vadd.f32 %v1476, %v1704
        %v1742 = vadd.f32 %v1477, %v1601
        %v1743 = vadd.f32 %v1478, %v1654
        %v1744 = vadd.f32 %v1479, %v1707
        %v1745 = vld [vmem:[%s2] sm:$0x7]
        %v1747 = vperm.slane %v1745, 0
        %v1748 = vperm.slane %v1745, 1
        %v1749 = vperm.slane %v1745, 2
        %v1753 = vadd.f32 %v1709, %v1747
        %v1754 = vadd.f32 %v1710, %v1748
        %v1755 = vadd.f32 %v1711, %v1749
        %v1756 = vadd.f32 %v1712, %v1747
        %v1757 = vadd.f32 %v1713, %v1748
        %v1758 = vadd.f32 %v1714, %v1749
        %v1759 = vadd.f32 %v1715, %v1747
        %v1760 = vadd.f32 %v1716, %v1748
        %v1761 = vadd.f32 %v1717, %v1749
        %v1762 = vadd.f32 %v1718, %v1747
        %v1763 = vadd.f32 %v1719, %v1748
        %v1764 = vadd.f32 %v1720, %v1749
        %v1765 = vadd.f32 %v1721, %v1747
        %v1766 = vadd.f32 %v1722, %v1748
        %v1767 = vadd.f32 %v1723, %v1749
        %v1768 = vadd.f32 %v1724, %v1747
        %v1769 = vadd.f32 %v1725, %v1748
        %v1770 = vadd.f32 %v1726, %v1749
        %v1771 = vadd.f32 %v1727, %v1747
        %v1772 = vadd.f32 %v1728, %v1748
        %v1773 = vadd.f32 %v1729, %v1749
        %v1774 = vadd.f32 %v1730, %v1747
        %v1775 = vadd.f32 %v1731, %v1748
        %v1776 = vadd.f32 %v1732, %v1749
        %v1777 = vadd.f32 %v1733, %v1747
        %v1778 = vadd.f32 %v1734, %v1748
        %v1779 = vadd.f32 %v1735, %v1749
        %v1780 = vadd.f32 %v1736, %v1747
        %v1781 = vadd.f32 %v1737, %v1748
        %v1782 = vadd.f32 %v1738, %v1749
        %v1783 = vadd.f32 %v1739, %v1747
        %v1784 = vadd.f32 %v1740, %v1748
        %v1785 = vadd.f32 %v1741, %v1749
        %v1786 = vadd.f32 %v1742, %v1747
        %v1787 = vadd.f32 %v1743, %v1748
        %v1788 = vadd.f32 %v1744, %v1749
        %v1789 = vmax.f32 %v1753, 0.0
        %v1790 = vmax.f32 %v1754, 0.0
        %v1791 = vmax.f32 %v1755, 0.0
        %v1792 = vmax.f32 %v1756, 0.0
        %v1793 = vmax.f32 %v1757, 0.0
        %v1794 = vmax.f32 %v1758, 0.0
        %v1795 = vmax.f32 %v1759, 0.0
        %v1796 = vmax.f32 %v1760, 0.0
        %v1797 = vmax.f32 %v1761, 0.0
        %v1798 = vmax.f32 %v1762, 0.0
        %v1799 = vmax.f32 %v1763, 0.0
        %v1800 = vmax.f32 %v1764, 0.0
        %v1801 = vmax.f32 %v1765, 0.0
        %v1802 = vmax.f32 %v1766, 0.0
        %v1803 = vmax.f32 %v1767, 0.0
        %v1804 = vmax.f32 %v1768, 0.0
        %v1805 = vmax.f32 %v1769, 0.0
        %v1806 = vmax.f32 %v1770, 0.0
        %v1807 = vmax.f32 %v1771, 0.0
        %v1808 = vmax.f32 %v1772, 0.0
        %v1809 = vmax.f32 %v1773, 0.0
        %v1810 = vmax.f32 %v1774, 0.0
        %v1811 = vmax.f32 %v1775, 0.0
        %v1812 = vmax.f32 %v1776, 0.0
        %v1813 = vmax.f32 %v1777, 0.0
        %v1814 = vmax.f32 %v1778, 0.0
        %v1815 = vmax.f32 %v1779, 0.0
        %v1816 = vmax.f32 %v1780, 0.0
        %v1817 = vmax.f32 %v1781, 0.0
        %v1818 = vmax.f32 %v1782, 0.0
        %v1819 = vmax.f32 %v1783, 0.0
        %v1820 = vmax.f32 %v1784, 0.0
        %v1821 = vmax.f32 %v1785, 0.0
        %v1822 = vmax.f32 %v1786, 0.0
        %v1823 = vmax.f32 %v1787, 0.0
        %v1824 = vmax.f32 %v1788, 0.0
        %v1825 = vld [vmem:[%s3] sm:$0xff]
        %v1826 = vld [vmem:[%s3 + $0x8] sm:$0xff]
        %v1827 = vld [vmem:[%s3 + $0x10] sm:$0xff]
        %v1828 = vld [vmem:[%s3 + $0x18] sm:$0xff]
        %v1829 = vld [vmem:[%s3 + $0x20] sm:$0xff]
        %v1830 = vld [vmem:[%s3 + $0x28] sm:$0xff]
        %v1831 = vld [vmem:[%s3 + $0x30] sm:$0xff]
        %v1832 = vld [vmem:[%s3 + $0x38] sm:$0xff]
        %v1833 = vld [vmem:[%s3 + $0x40] sm:$0xff]
        %v1834 = vld [vmem:[%s3 + $0x48] sm:$0xff]
        %v1835 = vld [vmem:[%s3 + $0x50] sm:$0xff]
        %v1836 = vld [vmem:[%s3 + $0x58] sm:$0xff]
        %v1837 = vld [vmem:[%s3 + $0x60] sm:$0xff]
        %v1838 = vld [vmem:[%s3 + $0x68] sm:$0xff]
        %v1839 = vld [vmem:[%s3 + $0x70] sm:$0xff]
        %v1840 = vld [vmem:[%s3 + $0x78] sm:$0xff]
        %v1841 = vld [vmem:[%s3 + $0x80] sm:$0xff]
        %v1842 = vld [vmem:[%s3 + $0x88] sm:$0xff]
        %v1843 = vld [vmem:[%s3 + $0x90] sm:$0xff]
        %v1844 = vld [vmem:[%s3 + $0x98] sm:$0xff]
        %v1845 = vld [vmem:[%s3 + $0xa0] sm:$0xff]
        %v1846 = vld [vmem:[%s3 + $0xa8] sm:$0xff]
        %v1847 = vld [vmem:[%s3 + $0xb0] sm:$0xff]
        %v1848 = vld [vmem:[%s3 + $0xb8] sm:$0xff]
        %v1849 = vld [vmem:[%s3 + $0xc0] sm:$0xff]
        %v1850 = vld [vmem:[%s3 + $0xc8] sm:$0xff]
        %v1851 = vld [vmem:[%s3 + $0xd0] sm:$0xff]
        %v1852 = vld [vmem:[%s3 + $0xd8] sm:$0xff]
        %v1853 = vld [vmem:[%s3 + $0xe0] sm:$0xff]
        %v1854 = vld [vmem:[%s3 + $0xe8] sm:$0xff]
        %v1855 = vld [vmem:[%s3 + $0xf0] sm:$0xff]
        %v1856 = vld [vmem:[%s3 + $0xf8] sm:$0xff]
        %v1857 = vld [vmem:[%s3 + $0x100] sm:$0xff]
        %v1858 = vld [vmem:[%s3 + $0x108] sm:$0xff]
        %v1859 = vld [vmem:[%s3 + $0x110] sm:$0xff]
        %v1860 = vld [vmem:[%s3 + $0x118] sm:$0xff]
        %v1861 = vld [vmem:[%s3 + $0x120] sm:$0xff]
        %v1862 = vld [vmem:[%s3 + $0x128] sm:$0xff]
        %v1863 = vld [vmem:[%s3 + $0x130] sm:$0xff]
        %v1864 = vld [vmem:[%s3 + $0x138] sm:$0xff]
        %v1865 = vld [vmem:[%s3 + $0x140] sm:$0xff]
        %v1866 = vld [vmem:[%s3 + $0x148] sm:$0xff]
        %v1867 = vld [vmem:[%s3 + $0x150] sm:$0xff]
        %v1868 = vld [vmem:[%s3 + $0x158] sm:$0xff]
        %v1869 = vld [vmem:[%s3 + $0x160] sm:$0xff]
        %v1870 = vld [vmem:[%s3 + $0x168] sm:$0xff]
        %v1871 = vld [vmem:[%s3 + $0x170] sm:$0xff]
        %v1872 = vld [vmem:[%s3 + $0x178] sm:$0xff]
        %v1873 = vld [vmem:[%s3 + $0x180] sm:$0xff]
        %v1874 = vld [vmem:[%s3 + $0x188] sm:$0xff]
        %v1875 = vld [vmem:[%s3 + $0x190] sm:$0xff]
        %v1876 = vld [vmem:[%s3 + $0x198] sm:$0xff]
        %v1877 = vld [vmem:[%s3 + $0x1a0] sm:$0xff]
        %v1878 = vld [vmem:[%s3 + $0x1a8] sm:$0xff]
        %v1879 = vld [vmem:[%s3 + $0x1b0] sm:$0xff]
        %v1880 = vld [vmem:[%s3 + $0x1b8] sm:$0xff]
        %v1881 = vld [vmem:[%s3 + $0x1c0] sm:$0xff]
        %v1882 = vld [vmem:[%s3 + $0x1c8] sm:$0xff]
        %v1883 = vld [vmem:[%s3 + $0x1d0] sm:$0xff]
        %v1884 = vld [vmem:[%s3 + $0x1d8] sm:$0xff]
        %v1885 = vld [vmem:[%s3 + $0x1e0] sm:$0xff]
        %v1886 = vld [vmem:[%s3 + $0x1e8] sm:$0xff]
        %v1887 = vld [vmem:[%s3 + $0x1f0] sm:$0xff]
        %v1888 = vld [vmem:[%s3 + $0x1f8] sm:$0xff]
        %v1889 = vld [vmem:[%s3 + $0x200] sm:$0xff]
        %v1890 = vld [vmem:[%s3 + $0x208] sm:$0xff]
        %v1891 = vld [vmem:[%s3 + $0x210] sm:$0xff]
        %v1892 = vld [vmem:[%s3 + $0x218] sm:$0xff]
        %v1893 = vld [vmem:[%s3 + $0x220] sm:$0xff]
        %v1894 = vld [vmem:[%s3 + $0x228] sm:$0xff]
        %v1895 = vld [vmem:[%s3 + $0x230] sm:$0xff]
        %v1896 = vld [vmem:[%s3 + $0x238] sm:$0xff]
        %v1897 = vld [vmem:[%s3 + $0x240] sm:$0xff]
        %v1898 = vld [vmem:[%s3 + $0x248] sm:$0xff]
        %v1899 = vld [vmem:[%s3 + $0x250] sm:$0xff]
        %v1900 = vld [vmem:[%s3 + $0x258] sm:$0xff]
        %v1901 = vld [vmem:[%s3 + $0x260] sm:$0xff]
        %v1902 = vld [vmem:[%s3 + $0x268] sm:$0xff]
        %v1903 = vld [vmem:[%s3 + $0x270] sm:$0xff]
        %v1904 = vld [vmem:[%s3 + $0x278] sm:$0xff]
        %v1905 = vld [vmem:[%s3 + $0x280] sm:$0xff]
        %v1906 = vld [vmem:[%s3 + $0x288] sm:$0xff]
        %v1907 = vld [vmem:[%s3 + $0x290] sm:$0xff]
        %v1908 = vld [vmem:[%s3 + $0x298] sm:$0xff]
        %v1909 = vld [vmem:[%s3 + $0x2a0] sm:$0xff]
        %v1910 = vld [vmem:[%s3 + $0x2a8] sm:$0xff]
        %v1911 = vld [vmem:[%s3 + $0x2b0] sm:$0xff]
        %v1912 = vld [vmem:[%s3 + $0x2b8] sm:$0xff]
        %v1913 = vld [vmem:[%s3 + $0x2c0] sm:$0xff]
        %v1914 = vld [vmem:[%s3 + $0x2c8] sm:$0xff]
        %v1915 = vld [vmem:[%s3 + $0x2d0] sm:$0xff]
        %v1916 = vld [vmem:[%s3 + $0x2d8] sm:$0xff]
        %v1917 = vld [vmem:[%s3 + $0x2e0] sm:$0xff]
        %v1918 = vld [vmem:[%s3 + $0x2e8] sm:$0xff]
        %v1919 = vld [vmem:[%s3 + $0x2f0] sm:$0xff]
        %v1920 = vld [vmem:[%s3 + $0x2f8] sm:$0xff]
        %1921 = vmatpush.msra.mxu0 %v1855
        %1922 = vmatpush.msra.mxu0 %v1853
        %1923 = vmatpush.msra.mxu0 %v1851
        %1924 = vmatpush.msra.mxu0 %v1849
        %1925 = vmatpush.msra.mxu0 %v1847
        %1926 = vmatpush.msra.mxu0 %v1845
        %1927 = vmatpush.msra.mxu0 %v1843
        %1928 = vmatpush.msra.mxu0 %v1841
        %1929 = vmatpush.msra.mxu0 %v1839
        %1930 = vmatpush.msra.mxu0 %v1837
        %1931 = vmatpush.msra.mxu0 %v1835
        %1932 = vmatpush.msra.mxu0 %v1833
        %1933 = vmatpush.msra.mxu0 %v1831
        %1934 = vmatpush.msra.mxu0 %v1829
        %1935 = vmatpush.msra.mxu0 %v1827
        %1936 = vmatpush.msra.mxu0 %v1825
        %1937 = vmatmul.f32.gmra.mxu0 %v1789
        %v1938 = vpop.f32.mrf.mxu0
        %v1939 = vadd.f32 0.0, %v1938
        %1940 = vmatmul.f32.gmra.mxu0 %v1792
        %v1941 = vpop.f32.mrf.mxu0
        %v1942 = vadd.f32 0.0, %v1941
        %1943 = vmatmul.f32.gmra.mxu0 %v1795
        %v1944 = vpop.f32.mrf.mxu0
        %v1945 = vadd.f32 0.0, %v1944
        %1946 = vmatmul.f32.gmra.mxu0 %v1798
        %v1947 = vpop.f32.mrf.mxu0
        %v1948 = vadd.f32 0.0, %v1947
        %1949 = vmatmul.f32.gmra.mxu0 %v1801
        %v1950 = vpop.f32.mrf.mxu0
        %v1951 = vadd.f32 0.0, %v1950
        %1952 = vmatmul.f32.gmra.mxu0 %v1804
        %v1953 = vpop.f32.mrf.mxu0
        %v1954 = vadd.f32 0.0, %v1953
        %1955 = vmatmul.f32.gmra.mxu0 %v1807
        %v1956 = vpop.f32.mrf.mxu0
        %v1957 = vadd.f32 0.0, %v1956
        %1958 = vmatmul.f32.gmra.mxu0 %v1810
        %v1959 = vpop.f32.mrf.mxu0
        %v1960 = vadd.f32 0.0, %v1959
        %1961 = vmatmul.f32.gmra.mxu0 %v1813
        %v1962 = vpop.f32.mrf.mxu0
        %v1963 = vadd.f32 0.0, %v1962
        %1964 = vmatmul.f32.gmra.mxu0 %v1816
        %v1965 = vpop.f32.mrf.mxu0
        %v1966 = vadd.f32 0.0, %v1965
        %1967 = vmatmul.f32.gmra.mxu0 %v1819
        %v1968 = vpop.f32.mrf.mxu0
        %v1969 = vadd.f32 0.0, %v1968
        %1970 = vmatmul.f32.gmra.mxu0 %v1822
        %v1971 = vpop.f32.mrf.mxu0
        %v1972 = vadd.f32 0.0, %v1971
        %1973 = vdwg.mxu0
        %1974 = vmatpush.msra.mxu0 %v1887
        %1975 = vmatpush.msra.mxu0 %v1885
        %1976 = vmatpush.msra.mxu0 %v1883
        %1977 = vmatpush.msra.mxu0 %v1881
        %1978 = vmatpush.msra.mxu0 %v1879
        %1979 = vmatpush.msra.mxu0 %v1877
        %1980 = vmatpush.msra.mxu0 %v1875
        %1981 = vmatpush.msra.mxu0 %v1873
        %1982 = vmatpush.msra.mxu0 %v1871
        %1983 = vmatpush.msra.mxu0 %v1869
        %1984 = vmatpush.msra.mxu0 %v1867
        %1985 = vmatpush.msra.mxu0 %v1865
        %1986 = vmatpush.msra.mxu0 %v1863
        %1987 = vmatpush.msra.mxu0 %v1861
        %1988 = vmatpush.msra.mxu0 %v1859
        %1989 = vmatpush.msra.mxu0 %v1857
        %1990 = vmatmul.f32.gmra.mxu0 %v1790
        %v1991 = vpop.f32.mrf.mxu0
        %v1992 = vadd.f32 %v1939, %v1991
        %1993 = vmatmul.f32.gmra.mxu0 %v1793
        %v1994 = vpop.f32.mrf.mxu0
        %v1995 = vadd.f32 %v1942, %v1994
        %1996 = vmatmul.f32.gmra.mxu0 %v1796
        %v1997 = vpop.f32.mrf.mxu0
        %v1998 = vadd.f32 %v1945, %v1997
        %1999 = vmatmul.f32.gmra.mxu0 %v1799
        %v2000 = vpop.f32.mrf.mxu0
        %v2001 = vadd.f32 %v1948, %v2000
        %2002 = vmatmul.f32.gmra.mxu0 %v1802
        %v2003 = vpop.f32.mrf.mxu0
        %v2004 = vadd.f32 %v1951, %v2003
        %2005 = vmatmul.f32.gmra.mxu0 %v1805
        %v2006 = vpop.f32.mrf.mxu0
        %v2007 = vadd.f32 %v1954, %v2006
        %2008 = vmatmul.f32.gmra.mxu0 %v1808
        %v2009 = vpop.f32.mrf.mxu0
        %v2010 = vadd.f32 %v1957, %v2009
        %2011 = vmatmul.f32.gmra.mxu0 %v1811
        %v2012 = vpop.f32.mrf.mxu0
        %v2013 = vadd.f32 %v1960, %v2012
        %2014 = vmatmul.f32.gmra.mxu0 %v1814
        %v2015 = vpop.f32.mrf.mxu0
        %v2016 = vadd.f32 %v1963, %v2015
        %2017 = vmatmul.f32.gmra.mxu0 %v1817
        %v2018 = vpop.f32.mrf.mxu0
        %v2019 = vadd.f32 %v1966, %v2018
        %2020 = vmatmul.f32.gmra.mxu0 %v1820
        %v2021 = vpop.f32.mrf.mxu0
        %v2022 = vadd.f32 %v1969, %v2021
        %2023 = vmatmul.f32.gmra.mxu0 %v1823
        %v2024 = vpop.f32.mrf.mxu0
        %v2025 = vadd.f32 %v1972, %v2024
        %2026 = vdwg.mxu0
        %2027 = vmatpush.msra.mxu0 %v1919
        %2028 = vmatpush.msra.mxu0 %v1917
        %2029 = vmatpush.msra.mxu0 %v1915
        %2030 = vmatpush.msra.mxu0 %v1913
        %2031 = vmatpush.msra.mxu0 %v1911
        %2032 = vmatpush.msra.mxu0 %v1909
        %2033 = vmatpush.msra.mxu0 %v1907
        %2034 = vmatpush.msra.mxu0 %v1905
        %2035 = vmatpush.msra.mxu0 %v1903
        %2036 = vmatpush.msra.mxu0 %v1901
        %2037 = vmatpush.msra.mxu0 %v1899
        %2038 = vmatpush.msra.mxu0 %v1897
        %2039 = vmatpush.msra.mxu0 %v1895
        %2040 = vmatpush.msra.mxu0 %v1893
        %2041 = vmatpush.msra.mxu0 %v1891
        %2042 = vmatpush.msra.mxu0 %v1889
        %2043 = vmatmul.f32.gmra.mxu0 %v1791
        %v2044 = vpop.f32.mrf.mxu0
        %v2045 = vadd.f32 %v1992, %v2044
        %2046 = vmatmul.f32.gmra.mxu0 %v1794
        %v2047 = vpop.f32.mrf.mxu0
        %v2048 = vadd.f32 %v1995, %v2047
        %2049 = vmatmul.f32.gmra.mxu0 %v1797
        %v2050 = vpop.f32.mrf.mxu0
        %v2051 = vadd.f32 %v1998, %v2050
        %2052 = vmatmul.f32.gmra.mxu0 %v1800
        %v2053 = vpop.f32.mrf.mxu0
        %v2054 = vadd.f32 %v2001, %v2053
        %2055 = vmatmul.f32.gmra.mxu0 %v1803
        %v2056 = vpop.f32.mrf.mxu0
        %v2057 = vadd.f32 %v2004, %v2056
        %2058 = vmatmul.f32.gmra.mxu0 %v1806
        %v2059 = vpop.f32.mrf.mxu0
        %v2060 = vadd.f32 %v2007, %v2059
        %2061 = vmatmul.f32.gmra.mxu0 %v1809
        %v2062 = vpop.f32.mrf.mxu0
        %v2063 = vadd.f32 %v2010, %v2062
        %2064 = vmatmul.f32.gmra.mxu0 %v1812
        %v2065 = vpop.f32.mrf.mxu0
        %v2066 = vadd.f32 %v2013, %v2065
        %2067 = vmatmul.f32.gmra.mxu0 %v1815
        %v2068 = vpop.f32.mrf.mxu0
        %v2069 = vadd.f32 %v2016, %v2068
        %2070 = vmatmul.f32.gmra.mxu0 %v1818
        %v2071 = vpop.f32.mrf.mxu0
        %v2072 = vadd.f32 %v2019, %v2071
        %2073 = vmatmul.f32.gmra.mxu0 %v1821
        %v2074 = vpop.f32.mrf.mxu0
        %v2075 = vadd.f32 %v2022, %v2074
        %2076 = vmatmul.f32.gmra.mxu0 %v1824
        %v2077 = vpop.f32.mrf.mxu0
        %v2078 = vadd.f32 %v2025, %v2077
        %2079 = vdwg.mxu0
        %2080 = vmatpush.msra.mxu0 %v1856
        %2081 = vmatpush.msra.mxu0 %v1854
        %2082 = vmatpush.msra.mxu0 %v1852
        %2083 = vmatpush.msra.mxu0 %v1850
        %2084 = vmatpush.msra.mxu0 %v1848
        %2085 = vmatpush.msra.mxu0 %v1846
        %2086 = vmatpush.msra.mxu0 %v1844
        %2087 = vmatpush.msra.mxu0 %v1842
        %2088 = vmatpush.msra.mxu0 %v1840
        %2089 = vmatpush.msra.mxu0 %v1838
        %2090 = vmatpush.msra.mxu0 %v1836
        %2091 = vmatpush.msra.mxu0 %v1834
        %2092 = vmatpush.msra.mxu0 %v1832
        %2093 = vmatpush.msra.mxu0 %v1830
        %2094 = vmatpush.msra.mxu0 %v1828
        %2095 = vmatpush.msra.mxu0 %v1826
        %2096 = vmatmul.f32.gmra.mxu0 %v1789
        %v2097 = vpop.f32.mrf.mxu0
        %v2098 = vadd.f32 0.0, %v2097
        %2099 = vmatmul.f32.gmra.mxu0 %v1792
        %v2100 = vpop.f32.mrf.mxu0
        %v2101 = vadd.f32 0.0, %v2100
        %2102 = vmatmul.f32.gmra.mxu0 %v1795
        %v2103 = vpop.f32.mrf.mxu0
        %v2104 = vadd.f32 0.0, %v2103
        %2105 = vmatmul.f32.gmra.mxu0 %v1798
        %v2106 = vpop.f32.mrf.mxu0
        %v2107 = vadd.f32 0.0, %v2106
        %2108 = vmatmul.f32.gmra.mxu0 %v1801
        %v2109 = vpop.f32.mrf.mxu0
        %v2110 = vadd.f32 0.0, %v2109
        %2111 = vmatmul.f32.gmra.mxu0 %v1804
        %v2112 = vpop.f32.mrf.mxu0
        %v2113 = vadd.f32 0.0, %v2112
        %2114 = vmatmul.f32.gmra.mxu0 %v1807
        %v2115 = vpop.f32.mrf.mxu0
        %v2116 = vadd.f32 0.0, %v2115
        %2117 = vmatmul.f32.gmra.mxu0 %v1810
        %v2118 = vpop.f32.mrf.mxu0
        %v2119 = vadd.f32 0.0, %v2118
        %2120 = vmatmul.f32.gmra.mxu0 %v1813
        %v2121 = vpop.f32.mrf.mxu0
        %v2122 = vadd.f32 0.0, %v2121
        %2123 = vmatmul.f32.gmra.mxu0 %v1816
        %v2124 = vpop.f32.mrf.mxu0
        %v2125 = vadd.f32 0.0, %v2124
        %2126 = vmatmul.f32.gmra.mxu0 %v1819
        %v2127 = vpop.f32.mrf.mxu0
        %v2128 = vadd.f32 0.0, %v2127
        %2129 = vmatmul.f32.gmra.mxu0 %v1822
        %v2130 = vpop.f32.mrf.mxu0
        %v2131 = vadd.f32 0.0, %v2130
        %2132 = vdwg.mxu0
        %2133 = vmatpush.msra.mxu0 %v1888
        %2134 = vmatpush.msra.mxu0 %v1886
        %2135 = vmatpush.msra.mxu0 %v1884
        %2136 = vmatpush.msra.mxu0 %v1882
        %2137 = vmatpush.msra.mxu0 %v1880
        %2138 = vmatpush.msra.mxu0 %v1878
        %2139 = vmatpush.msra.mxu0 %v1876
        %2140 = vmatpush.msra.mxu0 %v1874
        %2141 = vmatpush.msra.mxu0 %v1872
        %2142 = vmatpush.msra.mxu0 %v1870
        %2143 = vmatpush.msra.mxu0 %v1868
        %2144 = vmatpush.msra.mxu0 %v1866
        %2145 = vmatpush.msra.mxu0 %v1864
        %2146 = vmatpush.msra.mxu0 %v1862
        %2147 = vmatpush.msra.mxu0 %v1860
        %2148 = vmatpush.msra.mxu0 %v1858
        %2149 = vmatmul.f32.gmra.mxu0 %v1790
        %v2150 = vpop.f32.mrf.mxu0
        %v2151 = vadd.f32 %v2098, %v2150
        %2152 = vmatmul.f32.gmra.mxu0 %v1793
        %v2153 = vpop.f32.mrf.mxu0
        %v2154 = vadd.f32 %v2101, %v2153
        %2155 = vmatmul.f32.gmra.mxu0 %v1796
        %v2156 = vpop.f32.mrf.mxu0
        %v2157 = vadd.f32 %v2104, %v2156
        %2158 = vmatmul.f32.gmra.mxu0 %v1799
        %v2159 = vpop.f32.mrf.mxu0
        %v2160 = vadd.f32 %v2107, %v2159
        %2161 = vmatmul.f32.gmra.mxu0 %v1802
        %v2162 = vpop.f32.mrf.mxu0
        %v2163 = vadd.f32 %v2110, %v2162
        %2164 = vmatmul.f32.gmra.mxu0 %v1805
        %v2165 = vpop.f32.mrf.mxu0
        %v2166 = vadd.f32 %v2113, %v2165
        %2167 = vmatmul.f32.gmra.mxu0 %v1808
        %v2168 = vpop.f32.mrf.mxu0
        %v2169 = vadd.f32 %v2116, %v2168
        %2170 = vmatmul.f32.gmra.mxu0 %v1811
        %v2171 = vpop.f32.mrf.mxu0
        %v2172 = vadd.f32 %v2119, %v2171
        %2173 = vmatmul.f32.gmra.mxu0 %v1814
        %v2174 = vpop.f32.mrf.mxu0
        %v2175 = vadd.f32 %v2122, %v2174
        %2176 = vmatmul.f32.gmra.mxu0 %v1817
        %v2177 = vpop.f32.mrf.mxu0
        %v2178 = vadd.f32 %v2125, %v2177
        %2179 = vmatmul.f32.gmra.mxu0 %v1820
        %v2180 = vpop.f32.mrf.mxu0
        %v2181 = vadd.f32 %v2128, %v2180
        %2182 = vmatmul.f32.gmra.mxu0 %v1823
        %v2183 = vpop.f32.mrf.mxu0
        %v2184 = vadd.f32 %v2131, %v2183
        %2185 = vdwg.mxu0
        %2186 = vmatpush.msra.mxu0 %v1920
        %2187 = vmatpush.msra.mxu0 %v1918
        %2188 = vmatpush.msra.mxu0 %v1916
        %2189 = vmatpush.msra.mxu0 %v1914
        %2190 = vmatpush.msra.mxu0 %v1912
        %2191 = vmatpush.msra.mxu0 %v1910
        %2192 = vmatpush.msra.mxu0 %v1908
        %2193 = vmatpush.msra.mxu0 %v1906
        %2194 = vmatpush.msra.mxu0 %v1904
        %2195 = vmatpush.msra.mxu0 %v1902
        %2196 = vmatpush.msra.mxu0 %v1900
        %2197 = vmatpush.msra.mxu0 %v1898
        %2198 = vmatpush.msra.mxu0 %v1896
        %2199 = vmatpush.msra.mxu0 %v1894
        %2200 = vmatpush.msra.mxu0 %v1892
        %2201 = vmatpush.msra.mxu0 %v1890
        %2202 = vmatmul.f32.gmra.mxu0 %v1791
        %v2203 = vpop.f32.mrf.mxu0
        %v2204 = vadd.f32 %v2151, %v2203
        %2205 = vmatmul.f32.gmra.mxu0 %v1794
        %v2206 = vpop.f32.mrf.mxu0
        %v2207 = vadd.f32 %v2154, %v2206
        %2208 = vmatmul.f32.gmra.mxu0 %v1797
        %v2209 = vpop.f32.mrf.mxu0
        %v2210 = vadd.f32 %v2157, %v2209
        %2211 = vmatmul.f32.gmra.mxu0 %v1800
        %v2212 = vpop.f32.mrf.mxu0
        %v2213 = vadd.f32 %v2160, %v2212
        %2214 = vmatmul.f32.gmra.mxu0 %v1803
        %v2215 = vpop.f32.mrf.mxu0
        %v2216 = vadd.f32 %v2163, %v2215
        %2217 = vmatmul.f32.gmra.mxu0 %v1806
        %v2218 = vpop.f32.mrf.mxu0
        %v2219 = vadd.f32 %v2166, %v2218
        %2220 = vmatmul.f32.gmra.mxu0 %v1809
        %v2221 = vpop.f32.mrf.mxu0
        %v2222 = vadd.f32 %v2169, %v2221
        %2223 = vmatmul.f32.gmra.mxu0 %v1812
        %v2224 = vpop.f32.mrf.mxu0
        %v2225 = vadd.f32 %v2172, %v2224
        %2226 = vmatmul.f32.gmra.mxu0 %v1815
        %v2227 = vpop.f32.mrf.mxu0
        %v2228 = vadd.f32 %v2175, %v2227
        %2229 = vmatmul.f32.gmra.mxu0 %v1818
        %v2230 = vpop.f32.mrf.mxu0
        %v2231 = vadd.f32 %v2178, %v2230
        %2232 = vmatmul.f32.gmra.mxu0 %v1821
        %v2233 = vpop.f32.mrf.mxu0
        %v2234 = vadd.f32 %v2181, %v2233
        %2235 = vmatmul.f32.gmra.mxu0 %v1824
        %v2236 = vpop.f32.mrf.mxu0
        %v2237 = vadd.f32 %v2184, %v2236
        %2238 = vdwg.mxu0
        %v2239 = vld [vmem:[%s4] sm:$0xff]
        %v2240 = vld [vmem:[%s4 + $0x8] sm:$0xff]
        %v2241 = vld [vmem:[%s4 + $0x10] sm:$0xff]
        %v2242 = vld [vmem:[%s4 + $0x18] sm:$0xff]
        %v2243 = vld [vmem:[%s4 + $0x20] sm:$0xff]
        %v2244 = vld [vmem:[%s4 + $0x28] sm:$0xff]
        %v2245 = vld [vmem:[%s4 + $0x30] sm:$0xff]
        %v2246 = vld [vmem:[%s4 + $0x38] sm:$0xff]
        %v2247 = vld [vmem:[%s4 + $0x40] sm:$0xff]
        %v2248 = vld [vmem:[%s4 + $0x48] sm:$0xff]
        %v2249 = vld [vmem:[%s4 + $0x50] sm:$0xff]
        %v2250 = vld [vmem:[%s4 + $0x58] sm:$0xff]
        %v2251 = vld [vmem:[%s4 + $0x60] sm:$0xff]
        %v2252 = vld [vmem:[%s4 + $0x68] sm:$0xff]
        %v2253 = vld [vmem:[%s4 + $0x70] sm:$0xff]
        %v2254 = vld [vmem:[%s4 + $0x78] sm:$0xff]
        %v2255 = vld [vmem:[%s4 + $0x80] sm:$0xff]
        %v2256 = vld [vmem:[%s4 + $0x88] sm:$0xff]
        %v2257 = vld [vmem:[%s4 + $0x90] sm:$0xff]
        %v2258 = vld [vmem:[%s4 + $0x98] sm:$0xff]
        %v2259 = vld [vmem:[%s4 + $0xa0] sm:$0xff]
        %v2260 = vld [vmem:[%s4 + $0xa8] sm:$0xff]
        %v2261 = vld [vmem:[%s4 + $0xb0] sm:$0xff]
        %v2262 = vld [vmem:[%s4 + $0xb8] sm:$0xff]
        %v2263 = vld [vmem:[%s4 + $0xc0] sm:$0xff]
        %v2264 = vld [vmem:[%s4 + $0xc8] sm:$0xff]
        %v2265 = vld [vmem:[%s4 + $0xd0] sm:$0xff]
        %v2266 = vld [vmem:[%s4 + $0xd8] sm:$0xff]
        %v2267 = vld [vmem:[%s4 + $0xe0] sm:$0xff]
        %v2268 = vld [vmem:[%s4 + $0xe8] sm:$0xff]
        %v2269 = vld [vmem:[%s4 + $0xf0] sm:$0xff]
        %v2270 = vld [vmem:[%s4 + $0xf8] sm:$0xff]
        %v2271 = vld [vmem:[%s4 + $0x100] sm:$0xff]
        %v2272 = vld [vmem:[%s4 + $0x108] sm:$0xff]
        %v2273 = vld [vmem:[%s4 + $0x110] sm:$0xff]
        %v2274 = vld [vmem:[%s4 + $0x118] sm:$0xff]
        %v2275 = vld [vmem:[%s4 + $0x120] sm:$0xff]
        %v2276 = vld [vmem:[%s4 + $0x128] sm:$0xff]
        %v2277 = vld [vmem:[%s4 + $0x130] sm:$0xff]
        %v2278 = vld [vmem:[%s4 + $0x138] sm:$0xff]
        %v2279 = vld [vmem:[%s4 + $0x140] sm:$0xff]
        %v2280 = vld [vmem:[%s4 + $0x148] sm:$0xff]
        %v2281 = vld [vmem:[%s4 + $0x150] sm:$0xff]
        %v2282 = vld [vmem:[%s4 + $0x158] sm:$0xff]
        %v2283 = vld [vmem:[%s4 + $0x160] sm:$0xff]
        %v2284 = vld [vmem:[%s4 + $0x168] sm:$0xff]
        %v2285 = vld [vmem:[%s4 + $0x170] sm:$0xff]
        %v2286 = vld [vmem:[%s4 + $0x178] sm:$0xff]
        %v2287 = vld [vmem:[%s4 + $0x180] sm:$0xff]
        %v2288 = vld [vmem:[%s4 + $0x188] sm:$0xff]
        %v2289 = vld [vmem:[%s4 + $0x190] sm:$0xff]
        %v2290 = vld [vmem:[%s4 + $0x198] sm:$0xff]
        %v2291 = vld [vmem:[%s4 + $0x1a0] sm:$0xff]
        %v2292 = vld [vmem:[%s4 + $0x1a8] sm:$0xff]
        %v2293 = vld [vmem:[%s4 + $0x1b0] sm:$0xff]
        %v2294 = vld [vmem:[%s4 + $0x1b8] sm:$0xff]
        %v2295 = vld [vmem:[%s4 + $0x1c0] sm:$0xff]
        %v2296 = vld [vmem:[%s4 + $0x1c8] sm:$0xff]
        %v2297 = vld [vmem:[%s4 + $0x1d0] sm:$0xff]
        %v2298 = vld [vmem:[%s4 + $0x1d8] sm:$0xff]
        %v2299 = vld [vmem:[%s4 + $0x1e0] sm:$0xff]
        %v2300 = vld [vmem:[%s4 + $0x1e8] sm:$0xff]
        %v2301 = vld [vmem:[%s4 + $0x1f0] sm:$0xff]
        %v2302 = vld [vmem:[%s4 + $0x1f8] sm:$0xff]
        %v2303 = vld [vmem:[%s4 + $0x200] sm:$0xff]
        %v2304 = vld [vmem:[%s4 + $0x208] sm:$0xff]
        %v2305 = vld [vmem:[%s4 + $0x210] sm:$0xff]
        %v2306 = vld [vmem:[%s4 + $0x218] sm:$0xff]
        %v2307 = vld [vmem:[%s4 + $0x220] sm:$0xff]
        %v2308 = vld [vmem:[%s4 + $0x228] sm:$0xff]
        %v2309 = vld [vmem:[%s4 + $0x230] sm:$0xff]
        %v2310 = vld [vmem:[%s4 + $0x238] sm:$0xff]
        %v2311 = vld [vmem:[%s4 + $0x240] sm:$0xff]
        %v2312 = vld [vmem:[%s4 + $0x248] sm:$0xff]
        %v2313 = vld [vmem:[%s4 + $0x250] sm:$0xff]
        %v2314 = vld [vmem:[%s4 + $0x258] sm:$0xff]
        %v2315 = vld [vmem:[%s4 + $0x260] sm:$0xff]
        %v2316 = vld [vmem:[%s4 + $0x268] sm:$0xff]
        %v2317 = vld [vmem:[%s4 + $0x270] sm:$0xff]
        %v2318 = vld [vmem:[%s4 + $0x278] sm:$0xff]
        %v2319 = vld [vmem:[%s4 + $0x280] sm:$0xff]
        %v2320 = vld [vmem:[%s4 + $0x288] sm:$0xff]
        %v2321 = vld [vmem:[%s4 + $0x290] sm:$0xff]
        %v2322 = vld [vmem:[%s4 + $0x298] sm:$0xff]
        %v2323 = vld [vmem:[%s4 + $0x2a0] sm:$0xff]
        %v2324 = vld [vmem:[%s4 + $0x2a8] sm:$0xff]
        %v2325 = vld [vmem:[%s4 + $0x2b0] sm:$0xff]
        %v2326 = vld [vmem:[%s4 + $0x2b8] sm:$0xff]
        %v2327 = vld [vmem:[%s4 + $0x2c0] sm:$0xff]
        %v2328 = vld [vmem:[%s4 + $0x2c8] sm:$0xff]
        %v2329 = vld [vmem:[%s4 + $0x2d0] sm:$0xff]
        %v2330 = vld [vmem:[%s4 + $0x2d8] sm:$0xff]
        %v2331 = vld [vmem:[%s4 + $0x2e0] sm:$0xff]
        %v2332 = vld [vmem:[%s4 + $0x2e8] sm:$0xff]
        %v2333 = vld [vmem:[%s4 + $0x2f0] sm:$0xff]
        %v2334 = vld [vmem:[%s4 + $0x2f8] sm:$0xff]
        %2335 = vmatpush.msra.mxu0 %v2269
        %2336 = vmatpush.msra.mxu0 %v2267
        %2337 = vmatpush.msra.mxu0 %v2265
        %2338 = vmatpush.msra.mxu0 %v2263
        %2339 = vmatpush.msra.mxu0 %v2261
        %2340 = vmatpush.msra.mxu0 %v2259
        %2341 = vmatpush.msra.mxu0 %v2257
        %2342 = vmatpush.msra.mxu0 %v2255
        %2343 = vmatpush.msra.mxu0 %v2253
        %2344 = vmatpush.msra.mxu0 %v2251
        %2345 = vmatpush.msra.mxu0 %v2249
        %2346 = vmatpush.msra.mxu0 %v2247
        %2347 = vmatpush.msra.mxu0 %v2245
        %2348 = vmatpush.msra.mxu0 %v2243
        %2349 = vmatpush.msra.mxu0 %v2241
        %2350 = vmatpush.msra.mxu0 %v2239
        %2351 = vmatmul.f32.gmra.mxu0 %v1789
        %v2352 = vpop.f32.mrf.mxu0
        %v2353 = vadd.f32 0.0, %v2352
        %2354 = vmatmul.f32.gmra.mxu0 %v1792
        %v2355 = vpop.f32.mrf.mxu0
        %v2356 = vadd.f32 0.0, %v2355
        %2357 = vmatmul.f32.gmra.mxu0 %v1795
        %v2358 = vpop.f32.mrf.mxu0
        %v2359 = vadd.f32 0.0, %v2358
        %2360 = vmatmul.f32.gmra.mxu0 %v1798
        %v2361 = vpop.f32.mrf.mxu0
        %v2362 = vadd.f32 0.0, %v2361
        %2363 = vmatmul.f32.gmra.mxu0 %v1801
        %v2364 = vpop.f32.mrf.mxu0
        %v2365 = vadd.f32 0.0, %v2364
        %2366 = vmatmul.f32.gmra.mxu0 %v1804
        %v2367 = vpop.f32.mrf.mxu0
        %v2368 = vadd.f32 0.0, %v2367
        %2369 = vmatmul.f32.gmra.mxu0 %v1807
        %v2370 = vpop.f32.mrf.mxu0
        %v2371 = vadd.f32 0.0, %v2370
        %2372 = vmatmul.f32.gmra.mxu0 %v1810
        %v2373 = vpop.f32.mrf.mxu0
        %v2374 = vadd.f32 0.0, %v2373
        %2375 = vmatmul.f32.gmra.mxu0 %v1813
        %v2376 = vpop.f32.mrf.mxu0
        %v2377 = vadd.f32 0.0, %v2376
        %2378 = vmatmul.f32.gmra.mxu0 %v1816
        %v2379 = vpop.f32.mrf.mxu0
        %v2380 = vadd.f32 0.0, %v2379
        %2381 = vmatmul.f32.gmra.mxu0 %v1819
        %v2382 = vpop.f32.mrf.mxu0
        %v2383 = vadd.f32 0.0, %v2382
        %2384 = vmatmul.f32.gmra.mxu0 %v1822
        %v2385 = vpop.f32.mrf.mxu0
        %v2386 = vadd.f32 0.0, %v2385
        %2387 = vdwg.mxu0
        %2388 = vmatpush.msra.mxu0 %v2301
        %2389 = vmatpush.msra.mxu0 %v2299
        %2390 = vmatpush.msra.mxu0 %v2297
        %2391 = vmatpush.msra.mxu0 %v2295
        %2392 = vmatpush.msra.mxu0 %v2293
        %2393 = vmatpush.msra.mxu0 %v2291
        %2394 = vmatpush.msra.mxu0 %v2289
        %2395 = vmatpush.msra.mxu0 %v2287
        %2396 = vmatpush.msra.mxu0 %v2285
        %2397 = vmatpush.msra.mxu0 %v2283
        %2398 = vmatpush.msra.mxu0 %v2281
        %2399 = vmatpush.msra.mxu0 %v2279
        %2400 = vmatpush.msra.mxu0 %v2277
        %2401 = vmatpush.msra.mxu0 %v2275
        %2402 = vmatpush.msra.mxu0 %v2273
        %2403 = vmatpush.msra.mxu0 %v2271
        %2404 = vmatmul.f32.gmra.mxu0 %v1790
        %v2405 = vpop.f32.mrf.mxu0
        %v2406 = vadd.f32 %v2353, %v2405
        %2407 = vmatmul.f32.gmra.mxu0 %v1793
        %v2408 = vpop.f32.mrf.mxu0
        %v2409 = vadd.f32 %v2356, %v2408
        %2410 = vmatmul.f32.gmra.mxu0 %v1796
        %v2411 = vpop.f32.mrf.mxu0
        %v2412 = vadd.f32 %v2359, %v2411
        %2413 = vmatmul.f32.gmra.mxu0 %v1799
        %v2414 = vpop.f32.mrf.mxu0
        %v2415 = vadd.f32 %v2362, %v2414
        %2416 = vmatmul.f32.gmra.mxu0 %v1802
        %v2417 = vpop.f32.mrf.mxu0
        %v2418 = vadd.f32 %v2365, %v2417
        %2419 = vmatmul.f32.gmra.mxu0 %v1805
        %v2420 = vpop.f32.mrf.mxu0
        %v2421 = vadd.f32 %v2368, %v2420
        %2422 = vmatmul.f32.gmra.mxu0 %v1808
        %v2423 = vpop.f32.mrf.mxu0
        %v2424 = vadd.f32 %v2371, %v2423
        %2425 = vmatmul.f32.gmra.mxu0 %v1811
        %v2426 = vpop.f32.mrf.mxu0
        %v2427 = vadd.f32 %v2374, %v2426
        %2428 = vmatmul.f32.gmra.mxu0 %v1814
        %v2429 = vpop.f32.mrf.mxu0
        %v2430 = vadd.f32 %v2377, %v2429
        %2431 = vmatmul.f32.gmra.mxu0 %v1817
        %v2432 = vpop.f32.mrf.mxu0
        %v2433 = vadd.f32 %v2380, %v2432
        %2434 = vmatmul.f32.gmra.mxu0 %v1820
        %v2435 = vpop.f32.mrf.mxu0
        %v2436 = vadd.f32 %v2383, %v2435
        %2437 = vmatmul.f32.gmra.mxu0 %v1823
        %v2438 = vpop.f32.mrf.mxu0
        %v2439 = vadd.f32 %v2386, %v2438
        %2440 = vdwg.mxu0
        %2441 = vmatpush.msra.mxu0 %v2333
        %2442 = vmatpush.msra.mxu0 %v2331
        %2443 = vmatpush.msra.mxu0 %v2329
        %2444 = vmatpush.msra.mxu0 %v2327
        %2445 = vmatpush.msra.mxu0 %v2325
        %2446 = vmatpush.msra.mxu0 %v2323
        %2447 = vmatpush.msra.mxu0 %v2321
        %2448 = vmatpush.msra.mxu0 %v2319
        %2449 = vmatpush.msra.mxu0 %v2317
        %2450 = vmatpush.msra.mxu0 %v2315
        %2451 = vmatpush.msra.mxu0 %v2313
        %2452 = vmatpush.msra.mxu0 %v2311
        %2453 = vmatpush.msra.mxu0 %v2309
        %2454 = vmatpush.msra.mxu0 %v2307
        %2455 = vmatpush.msra.mxu0 %v2305
        %2456 = vmatpush.msra.mxu0 %v2303
        %2457 = vmatmul.f32.gmra.mxu0 %v1791
        %v2458 = vpop.f32.mrf.mxu0
        %v2459 = vadd.f32 %v2406, %v2458
        %2460 = vmatmul.f32.gmra.mxu0 %v1794
        %v2461 = vpop.f32.mrf.mxu0
        %v2462 = vadd.f32 %v2409, %v2461
        %2463 = vmatmul.f32.gmra.mxu0 %v1797
        %v2464 = vpop.f32.mrf.mxu0
        %v2465 = vadd.f32 %v2412, %v2464
        %2466 = vmatmul.f32.gmra.mxu0 %v1800
        %v2467 = vpop.f32.mrf.mxu0
        %v2468 = vadd.f32 %v2415, %v2467
        %2469 = vmatmul.f32.gmra.mxu0 %v1803
        %v2470 = vpop.f32.mrf.mxu0
        %v2471 = vadd.f32 %v2418, %v2470
        %2472 = vmatmul.f32.gmra.mxu0 %v1806
        %v2473 = vpop.f32.mrf.mxu0
        %v2474 = vadd.f32 %v2421, %v2473
        %2475 = vmatmul.f32.gmra.mxu0 %v1809
        %v2476 = vpop.f32.mrf.mxu0
        %v2477 = vadd.f32 %v2424, %v2476
        %2478 = vmatmul.f32.gmra.mxu0 %v1812
        %v2479 = vpop.f32.mrf.mxu0
        %v2480 = vadd.f32 %v2427, %v2479
        %2481 = vmatmul.f32.gmra.mxu0 %v1815
        %v2482 = vpop.f32.mrf.mxu0
        %v2483 = vadd.f32 %v2430, %v2482
        %2484 = vmatmul.f32.gmra.mxu0 %v1818
        %v2485 = vpop.f32.mrf.mxu0
        %v2486 = vadd.f32 %v2433, %v2485
        %2487 = vmatmul.f32.gmra.mxu0 %v1821
        %v2488 = vpop.f32.mrf.mxu0
        %v2489 = vadd.f32 %v2436, %v2488
        %2490 = vmatmul.f32.gmra.mxu0 %v1824
        %v2491 = vpop.f32.mrf.mxu0
        %v2492 = vadd.f32 %v2439, %v2491
        %2493 = vdwg.mxu0
        %2494 = vmatpush.msra.mxu0 %v2270
        %2495 = vmatpush.msra.mxu0 %v2268
        %2496 = vmatpush.msra.mxu0 %v2266
        %2497 = vmatpush.msra.mxu0 %v2264
        %2498 = vmatpush.msra.mxu0 %v2262
        %2499 = vmatpush.msra.mxu0 %v2260
        %2500 = vmatpush.msra.mxu0 %v2258
        %2501 = vmatpush.msra.mxu0 %v2256
        %2502 = vmatpush.msra.mxu0 %v2254
        %2503 = vmatpush.msra.mxu0 %v2252
        %2504 = vmatpush.msra.mxu0 %v2250
        %2505 = vmatpush.msra.mxu0 %v2248
        %2506 = vmatpush.msra.mxu0 %v2246
        %2507 = vmatpush.msra.mxu0 %v2244
        %2508 = vmatpush.msra.mxu0 %v2242
        %2509 = vmatpush.msra.mxu0 %v2240
        %2510 = vmatmul.f32.gmra.mxu0 %v1789
        %v2511 = vpop.f32.mrf.mxu0
        %v2512 = vadd.f32 0.0, %v2511
        %2513 = vmatmul.f32.gmra.mxu0 %v1792
        %v2514 = vpop.f32.mrf.mxu0
        %v2515 = vadd.f32 0.0, %v2514
        %2516 = vmatmul.f32.gmra.mxu0 %v1795
        %v2517 = vpop.f32.mrf.mxu0
        %v2518 = vadd.f32 0.0, %v2517
        %2519 = vmatmul.f32.gmra.mxu0 %v1798
        %v2520 = vpop.f32.mrf.mxu0
        %v2521 = vadd.f32 0.0, %v2520
        %2522 = vmatmul.f32.gmra.mxu0 %v1801
        %v2523 = vpop.f32.mrf.mxu0
        %v2524 = vadd.f32 0.0, %v2523
        %2525 = vmatmul.f32.gmra.mxu0 %v1804
        %v2526 = vpop.f32.mrf.mxu0
        %v2527 = vadd.f32 0.0, %v2526
        %2528 = vmatmul.f32.gmra.mxu0 %v1807
        %v2529 = vpop.f32.mrf.mxu0
        %v2530 = vadd.f32 0.0, %v2529
        %2531 = vmatmul.f32.gmra.mxu0 %v1810
        %v2532 = vpop.f32.mrf.mxu0
        %v2533 = vadd.f32 0.0, %v2532
        %2534 = vmatmul.f32.gmra.mxu0 %v1813
        %v2535 = vpop.f32.mrf.mxu0
        %v2536 = vadd.f32 0.0, %v2535
        %2537 = vmatmul.f32.gmra.mxu0 %v1816
        %v2538 = vpop.f32.mrf.mxu0
        %v2539 = vadd.f32 0.0, %v2538
        %2540 = vmatmul.f32.gmra.mxu0 %v1819
        %v2541 = vpop.f32.mrf.mxu0
        %v2542 = vadd.f32 0.0, %v2541
        %2543 = vmatmul.f32.gmra.mxu0 %v1822
        %v2544 = vpop.f32.mrf.mxu0
        %v2545 = vadd.f32 0.0, %v2544
        %2546 = vdwg.mxu0
        %2547 = vmatpush.msra.mxu0 %v2302
        %2548 = vmatpush.msra.mxu0 %v2300
        %2549 = vmatpush.msra.mxu0 %v2298
        %2550 = vmatpush.msra.mxu0 %v2296
        %2551 = vmatpush.msra.mxu0 %v2294
        %2552 = vmatpush.msra.mxu0 %v2292
        %2553 = vmatpush.msra.mxu0 %v2290
        %2554 = vmatpush.msra.mxu0 %v2288
        %2555 = vmatpush.msra.mxu0 %v2286
        %2556 = vmatpush.msra.mxu0 %v2284
        %2557 = vmatpush.msra.mxu0 %v2282
        %2558 = vmatpush.msra.mxu0 %v2280
        %2559 = vmatpush.msra.mxu0 %v2278
        %2560 = vmatpush.msra.mxu0 %v2276
        %2561 = vmatpush.msra.mxu0 %v2274
        %2562 = vmatpush.msra.mxu0 %v2272
        %2563 = vmatmul.f32.gmra.mxu0 %v1790
        %v2564 = vpop.f32.mrf.mxu0
        %v2565 = vadd.f32 %v2512, %v2564
        %2566 = vmatmul.f32.gmra.mxu0 %v1793
        %v2567 = vpop.f32.mrf.mxu0
        %v2568 = vadd.f32 %v2515, %v2567
        %2569 = vmatmul.f32.gmra.mxu0 %v1796
        %v2570 = vpop.f32.mrf.mxu0
        %v2571 = vadd.f32 %v2518, %v2570
        %2572 = vmatmul.f32.gmra.mxu0 %v1799
        %v2573 = vpop.f32.mrf.mxu0
        %v2574 = vadd.f32 %v2521, %v2573
        %2575 = vmatmul.f32.gmra.mxu0 %v1802
        %v2576 = vpop.f32.mrf.mxu0
        %v2577 = vadd.f32 %v2524, %v2576
        %2578 = vmatmul.f32.gmra.mxu0 %v1805
        %v2579 = vpop.f32.mrf.mxu0
        %v2580 = vadd.f32 %v2527, %v2579
        %2581 = vmatmul.f32.gmra.mxu0 %v1808
        %v2582 = vpop.f32.mrf.mxu0
        %v2583 = vadd.f32 %v2530, %v2582
        %2584 = vmatmul.f32.gmra.mxu0 %v1811
        %v2585 = vpop.f32.mrf.mxu0
        %v2586 = vadd.f32 %v2533, %v2585
        %2587 = vmatmul.f32.gmra.mxu0 %v1814
        %v2588 = vpop.f32.mrf.mxu0
        %v2589 = vadd.f32 %v2536, %v2588
        %2590 = vmatmul.f32.gmra.mxu0 %v1817
        %v2591 = vpop.f32.mrf.mxu0
        %v2592 = vadd.f32 %v2539, %v2591
        %2593 = vmatmul.f32.gmra.mxu0 %v1820
        %v2594 = vpop.f32.mrf.mxu0
        %v2595 = vadd.f32 %v2542, %v2594
        %2596 = vmatmul.f32.gmra.mxu0 %v1823
        %v2597 = vpop.f32.mrf.mxu0
        %v2598 = vadd.f32 %v2545, %v2597
        %2599 = vdwg.mxu0
        %2600 = vmatpush.msra.mxu0 %v2334
        %2601 = vmatpush.msra.mxu0 %v2332
        %2602 = vmatpush.msra.mxu0 %v2330
        %2603 = vmatpush.msra.mxu0 %v2328
        %2604 = vmatpush.msra.mxu0 %v2326
        %2605 = vmatpush.msra.mxu0 %v2324
        %2606 = vmatpush.msra.mxu0 %v2322
        %2607 = vmatpush.msra.mxu0 %v2320
        %2608 = vmatpush.msra.mxu0 %v2318
        %2609 = vmatpush.msra.mxu0 %v2316
        %2610 = vmatpush.msra.mxu0 %v2314
        %2611 = vmatpush.msra.mxu0 %v2312
        %2612 = vmatpush.msra.mxu0 %v2310
        %2613 = vmatpush.msra.mxu0 %v2308
        %2614 = vmatpush.msra.mxu0 %v2306
        %2615 = vmatpush.msra.mxu0 %v2304
        %2616 = vmatmul.f32.gmra.mxu0 %v1791
        %v2617 = vpop.f32.mrf.mxu0
        %v2618 = vadd.f32 %v2565, %v2617
        %2619 = vmatmul.f32.gmra.mxu0 %v1794
        %v2620 = vpop.f32.mrf.mxu0
        %v2621 = vadd.f32 %v2568, %v2620
        %2622 = vmatmul.f32.gmra.mxu0 %v1797
        %v2623 = vpop.f32.mrf.mxu0
        %v2624 = vadd.f32 %v2571, %v2623
        %2625 = vmatmul.f32.gmra.mxu0 %v1800
        %v2626 = vpop.f32.mrf.mxu0
        %v2627 = vadd.f32 %v2574, %v2626
        %2628 = vmatmul.f32.gmra.mxu0 %v1803
        %v2629 = vpop.f32.mrf.mxu0
        %v2630 = vadd.f32 %v2577, %v2629
        %2631 = vmatmul.f32.gmra.mxu0 %v1806
        %v2632 = vpop.f32.mrf.mxu0
        %v2633 = vadd.f32 %v2580, %v2632
        %2634 = vmatmul.f32.gmra.mxu0 %v1809
        %v2635 = vpop.f32.mrf.mxu0
        %v2636 = vadd.f32 %v2583, %v2635
        %2637 = vmatmul.f32.gmra.mxu0 %v1812
        %v2638 = vpop.f32.mrf.mxu0
        %v2639 = vadd.f32 %v2586, %v2638
        %2640 = vmatmul.f32.gmra.mxu0 %v1815
        %v2641 = vpop.f32.mrf.mxu0
        %v2642 = vadd.f32 %v2589, %v2641
        %2643 = vmatmul.f32.gmra.mxu0 %v1818
        %v2644 = vpop.f32.mrf.mxu0
        %v2645 = vadd.f32 %v2592, %v2644
        %2646 = vmatmul.f32.gmra.mxu0 %v1821
        %v2647 = vpop.f32.mrf.mxu0
        %v2648 = vadd.f32 %v2595, %v2647
        %2649 = vmatmul.f32.gmra.mxu0 %v1824
        %v2650 = vpop.f32.mrf.mxu0
        %v2651 = vadd.f32 %v2598, %v2650
        %2652 = vdwg.mxu0
        %v2653 = vmax.f32 %v2045, %v2459
        %v2654 = vmax.f32 %v2204, %v2618
        %v2655 = vmax.f32 %v2048, %v2462
        %v2656 = vmax.f32 %v2207, %v2621
        %v2657 = vmax.f32 %v2051, %v2465
        %v2658 = vmax.f32 %v2210, %v2624
        %v2659 = vmax.f32 %v2054, %v2468
        %v2660 = vmax.f32 %v2213, %v2627
        %v2661 = vmax.f32 %v2057, %v2471
        %v2662 = vmax.f32 %v2216, %v2630
        %v2663 = vmax.f32 %v2060, %v2474
        %v2664 = vmax.f32 %v2219, %v2633
        %v2665 = vmax.f32 %v2063, %v2477
        %v2666 = vmax.f32 %v2222, %v2636
        %v2667 = vmax.f32 %v2066, %v2480
        %v2668 = vmax.f32 %v2225, %v2639
        %v2669 = vmax.f32 %v2069, %v2483
        %v2670 = vmax.f32 %v2228, %v2642
        %v2671 = vmax.f32 %v2072, %v2486
        %v2672 = vmax.f32 %v2231, %v2645
        %v2673 = vmax.f32 %v2075, %v2489
        %v2674 = vmax.f32 %v2234, %v2648
        %v2675 = vmax.f32 %v2078, %v2492
        %v2676 = vmax.f32 %v2237, %v2651
        %v2677 = vld [vmem:[%s5] sm:$0xff]
        %v2678 = vld [vmem:[%s5 + $0x8] sm:$0xff]
        %v2679 = vld [vmem:[%s5 + $0x10] sm:$0xff]
        %v2680 = vld [vmem:[%s5 + $0x18] sm:$0xff]
        %v2681 = vld [vmem:[%s5 + $0x20] sm:$0xff]
        %v2682 = vld [vmem:[%s5 + $0x28] sm:$0xff]
        %vm2683 = vcmask 785408
        %v2685 = vsel %vm2683, %v2677, 0
        %v2688 = vsel %vm2683, %v2678, 0
        %v2691 = vsel %vm2683, %v2679, 0
        %v2694 = vsel %vm2683, %v2680, 0
        %v2697 = vsel %vm2683, %v2681, 0
        %v2700 = vsel %vm2683, %v2682, 0
        %2702 = vmatpush.msra.mxu0 0.0
        %2703 = vmatpush.msra.mxu0 0.0
        %2704 = vmatpush.msra.mxu0 0.0
        %2705 = vmatpush.msra.mxu0 0.0
        %2706 = vmatpush.msra.mxu0 %v2675
        %2707 = vmatpush.msra.mxu0 %v2673
        %2708 = vmatpush.msra.mxu0 %v2671
        %2709 = vmatpush.msra.mxu0 %v2669
        %2710 = vmatpush.msra.mxu0 %v2667
        %2711 = vmatpush.msra.mxu0 %v2665
        %2712 = vmatpush.msra.mxu0 %v2663
        %2713 = vmatpush.msra.mxu0 %v2661
        %2714 = vmatpush.msra.mxu0 %v2659
        %2715 = vmatpush.msra.mxu0 %v2657
        %2716 = vmatpush.msra.mxu0 %v2655
        %2717 = vmatpush.msra.mxu0 %v2653
        %2718 = vmatmul.f32.gmra.mxu0 %v2685
        %v2719 = vpop.f32.mrf.mxu0
        %v2720 = vadd.f32 0.0, %v2719
        %2721 = vmatmul.f32.gmra.mxu0 %v2688
        %v2722 = vpop.f32.mrf.mxu0
        %v2723 = vadd.f32 0.0, %v2722
        %2724 = vmatmul.f32.gmra.mxu0 %v2691
        %v2725 = vpop.f32.mrf.mxu0
        %v2726 = vadd.f32 0.0, %v2725
        %2727 = vmatmul.f32.gmra.mxu0 %v2694
        %v2728 = vpop.f32.mrf.mxu0
        %v2729 = vadd.f32 0.0, %v2728
        %2730 = vmatmul.f32.gmra.mxu0 %v2697
        %v2731 = vpop.f32.mrf.mxu0
        %v2732 = vadd.f32 0.0, %v2731
        %2733 = vmatmul.f32.gmra.mxu0 %v2700
        %v2734 = vpop.f32.mrf.mxu0
        %v2735 = vadd.f32 0.0, %v2734
        %2736 = vdwg.mxu0
        %2737 = vmatpush.msra.mxu0 0.0
        %2738 = vmatpush.msra.mxu0 0.0
        %2739 = vmatpush.msra.mxu0 0.0
        %2740 = vmatpush.msra.mxu0 0.0
        %2741 = vmatpush.msra.mxu0 %v2676
        %2742 = vmatpush.msra.mxu0 %v2674
        %2743 = vmatpush.msra.mxu0 %v2672
        %2744 = vmatpush.msra.mxu0 %v2670
        %2745 = vmatpush.msra.mxu0 %v2668
        %2746 = vmatpush.msra.mxu0 %v2666
        %2747 = vmatpush.msra.mxu0 %v2664
        %2748 = vmatpush.msra.mxu0 %v2662
        %2749 = vmatpush.msra.mxu0 %v2660
        %2750 = vmatpush.msra.mxu0 %v2658
        %2751 = vmatpush.msra.mxu0 %v2656
        %2752 = vmatpush.msra.mxu0 %v2654
        %2753 = vmatmul.f32.gmra.mxu0 %v2685
        %v2754 = vpop.f32.mrf.mxu0
        %v2755 = vadd.f32 0.0, %v2754
        %2756 = vmatmul.f32.gmra.mxu0 %v2688
        %v2757 = vpop.f32.mrf.mxu0
        %v2758 = vadd.f32 0.0, %v2757
        %2759 = vmatmul.f32.gmra.mxu0 %v2691
        %v2760 = vpop.f32.mrf.mxu0
        %v2761 = vadd.f32 0.0, %v2760
        %2762 = vmatmul.f32.gmra.mxu0 %v2694
        %v2763 = vpop.f32.mrf.mxu0
        %v2764 = vadd.f32 0.0, %v2763
        %2765 = vmatmul.f32.gmra.mxu0 %v2697
        %v2766 = vpop.f32.mrf.mxu0
        %v2767 = vadd.f32 0.0, %v2766
        %2768 = vmatmul.f32.gmra.mxu0 %v2700
        %v2769 = vpop.f32.mrf.mxu0
        %v2770 = vadd.f32 0.0, %v2769
        %2771 = vdwg.mxu0
        %v2772 = vld [vmem:[%s6] sm:$0xff]
        %v2773 = vld [vmem:[%s6 + $0x8] sm:$0xff]
        %v2774 = vld [vmem:[%s6 + $0x10] sm:$0xff]
        %v2775 = vld [vmem:[%s6 + $0x18] sm:$0xff]
        %v2776 = vld [vmem:[%s6 + $0x20] sm:$0xff]
        %v2777 = vld [vmem:[%s6 + $0x28] sm:$0xff]
        %v2779 = vsel %vm2683, %v2772, 0
        %v2782 = vsel %vm2683, %v2773, 0
        %v2785 = vsel %vm2683, %v2774, 0
        %v2788 = vsel %vm2683, %v2775, 0
        %v2791 = vsel %vm2683, %v2776, 0
        %v2794 = vsel %vm2683, %v2777, 0
        %2796 = vmatpush.msra.mxu0 0.0
        %2797 = vmatpush.msra.mxu0 0.0
        %2798 = vmatpush.msra.mxu0 0.0
        %2799 = vmatpush.msra.mxu0 0.0
        %2800 = vmatpush.msra.mxu0 %v2675
        %2801 = vmatpush.msra.mxu0 %v2673
        %2802 = vmatpush.msra.mxu0 %v2671
        %2803 = vmatpush.msra.mxu0 %v2669
        %2804 = vmatpush.msra.mxu0 %v2667
        %2805 = vmatpush.msra.mxu0 %v2665
        %2806 = vmatpush.msra.mxu0 %v2663
        %2807 = vmatpush.msra.mxu0 %v2661
        %2808 = vmatpush.msra.mxu0 %v2659
        %2809 = vmatpush.msra.mxu0 %v2657
        %2810 = vmatpush.msra.mxu0 %v2655
        %2811 = vmatpush.msra.mxu0 %v2653
        %2812 = vmatmul.f32.gmra.mxu0 %v2779
        %v2813 = vpop.f32.mrf.mxu0
        %v2814 = vadd.f32 0.0, %v2813
        %2815 = vmatmul.f32.gmra.mxu0 %v2782
        %v2816 = vpop.f32.mrf.mxu0
        %v2817 = vadd.f32 0.0, %v2816
        %2818 = vmatmul.f32.gmra.mxu0 %v2785
        %v2819 = vpop.f32.mrf.mxu0
        %v2820 = vadd.f32 0.0, %v2819
        %2821 = vmatmul.f32.gmra.mxu0 %v2788
        %v2822 = vpop.f32.mrf.mxu0
        %v2823 = vadd.f32 0.0, %v2822
        %2824 = vmatmul.f32.gmra.mxu0 %v2791
        %v2825 = vpop.f32.mrf.mxu0
        %v2826 = vadd.f32 0.0, %v2825
        %2827 = vmatmul.f32.gmra.mxu0 %v2794
        %v2828 = vpop.f32.mrf.mxu0
        %v2829 = vadd.f32 0.0, %v2828
        %2830 = vdwg.mxu0
        %2831 = vmatpush.msra.mxu0 0.0
        %2832 = vmatpush.msra.mxu0 0.0
        %2833 = vmatpush.msra.mxu0 0.0
        %2834 = vmatpush.msra.mxu0 0.0
        %2835 = vmatpush.msra.mxu0 %v2676
        %2836 = vmatpush.msra.mxu0 %v2674
        %2837 = vmatpush.msra.mxu0 %v2672
        %2838 = vmatpush.msra.mxu0 %v2670
        %2839 = vmatpush.msra.mxu0 %v2668
        %2840 = vmatpush.msra.mxu0 %v2666
        %2841 = vmatpush.msra.mxu0 %v2664
        %2842 = vmatpush.msra.mxu0 %v2662
        %2843 = vmatpush.msra.mxu0 %v2660
        %2844 = vmatpush.msra.mxu0 %v2658
        %2845 = vmatpush.msra.mxu0 %v2656
        %2846 = vmatpush.msra.mxu0 %v2654
        %2847 = vmatmul.f32.gmra.mxu0 %v2779
        %v2848 = vpop.f32.mrf.mxu0
        %v2849 = vadd.f32 0.0, %v2848
        %2850 = vmatmul.f32.gmra.mxu0 %v2782
        %v2851 = vpop.f32.mrf.mxu0
        %v2852 = vadd.f32 0.0, %v2851
        %2853 = vmatmul.f32.gmra.mxu0 %v2785
        %v2854 = vpop.f32.mrf.mxu0
        %v2855 = vadd.f32 0.0, %v2854
        %2856 = vmatmul.f32.gmra.mxu0 %v2788
        %v2857 = vpop.f32.mrf.mxu0
        %v2858 = vadd.f32 0.0, %v2857
        %2859 = vmatmul.f32.gmra.mxu0 %v2791
        %v2860 = vpop.f32.mrf.mxu0
        %v2861 = vadd.f32 0.0, %v2860
        %2862 = vmatmul.f32.gmra.mxu0 %v2794
        %v2863 = vpop.f32.mrf.mxu0
        %v2864 = vadd.f32 0.0, %v2863
        %2865 = vdwg.mxu0
        %v2866 = vmax.f32 %v2720, %v2814
        %v2867 = vmax.f32 %v2755, %v2849
        %v2868 = vmax.f32 %v2723, %v2817
        %v2869 = vmax.f32 %v2758, %v2852
        %v2870 = vmax.f32 %v2726, %v2820
        %v2871 = vmax.f32 %v2761, %v2855
        %v2872 = vmax.f32 %v2729, %v2823
        %v2873 = vmax.f32 %v2764, %v2858
        %v2874 = vmax.f32 %v2732, %v2826
        %v2875 = vmax.f32 %v2767, %v2861
        %v2876 = vmax.f32 %v2735, %v2829
        %v2877 = vmax.f32 %v2770, %v2864
        %2878 = vst [vmem:[#allocation2] sm:$0xff] %v2866
        %vm2879 = vcmask 523264
        %2880 = vst.msk [vmem:[#allocation2 + $0x8] sm:$0xff] %vm2879, %v2867
        %2881 = vst [vmem:[#allocation2 + $0x10] sm:$0xff] %v2868
        %2882 = vst.msk [vmem:[#allocation2 + $0x18] sm:$0xff] %vm2879, %v2869
        %2883 = vst [vmem:[#allocation2 + $0x20] sm:$0xff] %v2870
        %2884 = vst.msk [vmem:[#allocation2 + $0x28] sm:$0xff] %vm2879, %v2871
        %2885 = vst [vmem:[#allocation2 + $0x30] sm:$0xff] %v2872
        %2886 = vst.msk [vmem:[#allocation2 + $0x38] sm:$0xff] %vm2879, %v2873
        %2887 = vst [vmem:[#allocation2 + $0x40] sm:$0xff] %v2874
        %2888 = vst.msk [vmem:[#allocation2 + $0x48] sm:$0xff] %vm2879, %v2875
        %2889 = vst [vmem:[#allocation2 + $0x50] sm:$0xff] %v2876
        %2890 = vst.msk [vmem:[#allocation2 + $0x58] sm:$0xff] %vm2879, %v2877
        %v2891 = vld [vmem:[#allocation2] sm:$0xff]
        %v2892 = vld [vmem:[#allocation2 + $0x8] sm:$0xff]
        %v2893 = vld [vmem:[#allocation2 + $0x10] sm:$0xff]
        %v2894 = vld [vmem:[#allocation2 + $0x18] sm:$0xff]
        %v2895 = vld [vmem:[#allocation2 + $0x20] sm:$0xff]
        %v2896 = vld [vmem:[#allocation2 + $0x28] sm:$0xff]
        %v2897 = vld [vmem:[#allocation2 + $0x30] sm:$0xff]
        %v2898 = vld [vmem:[#allocation2 + $0x38] sm:$0xff]
        %v2899 = vld [vmem:[#allocation2 + $0x40] sm:$0xff]
        %v2900 = vld [vmem:[#allocation2 + $0x48] sm:$0xff]
        %v2901 = vld [vmem:[#allocation2 + $0x50] sm:$0xf]
        %v2902 = vld [vmem:[#allocation2 + $0x58] sm:$0xf]
        %v2903 = vld [vmem:[%s7] sm:$0xff]
        %v2904 = vld [vmem:[%s7 + $0x8] sm:$0xff]
        %v2905 = vld [vmem:[%s7 + $0x10] sm:$0xff]
        %v2906 = vld [vmem:[%s7 + $0x18] sm:$0xff]
        %v2907 = vld [vmem:[%s7 + $0x20] sm:$0xff]
        %v2908 = vld [vmem:[%s7 + $0x28] sm:$0xff]
        %v2909 = vld [vmem:[%s7 + $0x30] sm:$0xff]
        %v2910 = vld [vmem:[%s7 + $0x38] sm:$0xff]
        %v2911 = vld [vmem:[%s7 + $0x40] sm:$0xff]
        %v2912 = vld [vmem:[%s7 + $0x48] sm:$0xff]
        %v2913 = vld [vmem:[%s7 + $0x50] sm:$0xff]
        %v2914 = vld [vmem:[%s7 + $0x58] sm:$0xff]
        %v2915 = vld [vmem:[%s7 + $0x60] sm:$0xff]
        %v2916 = vld [vmem:[%s7 + $0x68] sm:$0xff]
        %v2917 = vld [vmem:[%s7 + $0x70] sm:$0xff]
        %v2918 = vld [vmem:[%s7 + $0x78] sm:$0xff]
        %v2919 = vld [vmem:[%s7 + $0x80] sm:$0xff]
        %v2920 = vld [vmem:[%s7 + $0x88] sm:$0xff]
        %v2921 = vld [vmem:[%s7 + $0x90] sm:$0xff]
        %v2922 = vld [vmem:[%s7 + $0x98] sm:$0xff]
        %v2923 = vld [vmem:[%s7 + $0xa0] sm:$0xff]
        %v2924 = vld [vmem:[%s7 + $0xa8] sm:$0xff]
        %v2925 = vld [vmem:[%s7 + $0xb0] sm:$0xff]
        %v2926 = vld [vmem:[%s7 + $0xb8] sm:$0xff]
        %v2927 = vld [vmem:[%s7 + $0xc0] sm:$0xff]
        %v2928 = vld [vmem:[%s7 + $0xc8] sm:$0xff]
        %v2929 = vld [vmem:[%s7 + $0xd0] sm:$0xff]
        %v2930 = vld [vmem:[%s7 + $0xd8] sm:$0xff]
        %v2931 = vld [vmem:[%s7 + $0xe0] sm:$0xff]
        %v2932 = vld [vmem:[%s7 + $0xe8] sm:$0xff]
        %v2933 = vld [vmem:[%s7 + $0xf0] sm:$0xff]
        %v2934 = vld [vmem:[%s7 + $0xf8] sm:$0xff]
        %v2935 = vld [vmem:[%s7 + $0x100] sm:$0xff]
        %v2936 = vld [vmem:[%s7 + $0x108] sm:$0xff]
        %v2937 = vld [vmem:[%s7 + $0x110] sm:$0xff]
        %v2938 = vld [vmem:[%s7 + $0x118] sm:$0xff]
        %v2939 = vld [vmem:[%s7 + $0x120] sm:$0xff]
        %v2940 = vld [vmem:[%s7 + $0x128] sm:$0xff]
        %v2941 = vld [vmem:[%s7 + $0x130] sm:$0xff]
        %v2942 = vld [vmem:[%s7 + $0x138] sm:$0xff]
        %v2943 = vld [vmem:[%s7 + $0x140] sm:$0xff]
        %v2944 = vld [vmem:[%s7 + $0x148] sm:$0xff]
        %v2945 = vld [vmem:[%s7 + $0x150] sm:$0xff]
        %v2946 = vld [vmem:[%s7 + $0x158] sm:$0xff]
        %v2947 = vld [vmem:[%s7 + $0x160] sm:$0xff]
        %v2948 = vld [vmem:[%s7 + $0x168] sm:$0xff]
        %v2949 = vld [vmem:[%s7 + $0x170] sm:$0xff]
        %v2950 = vld [vmem:[%s7 + $0x178] sm:$0xff]
        %v2951 = vld [vmem:[#allocation2] sm:$0xfe]
        %v2952 = vld [vmem:[#allocation2 + $0x8] sm:$0xfe]
        %v2953 = vld [vmem:[#allocation2 + $0x50] sm:$0x1f]
        %v2954 = vld [vmem:[#allocation2 + $0x58] sm:$0x1f]
        %s2955 = scalar_lea.vmem %s7, 384
        %v2956 = vld [vmem:[%s2955] sm:$0xff]
        %v2957 = vld [vmem:[%s2955 + $0x8] sm:$0xff]
        %v2958 = vld [vmem:[%s2955 + $0x10] sm:$0xff]
        %v2959 = vld [vmem:[%s2955 + $0x18] sm:$0xff]
        %v2960 = vld [vmem:[%s2955 + $0x20] sm:$0xff]
        %v2961 = vld [vmem:[%s2955 + $0x28] sm:$0xff]
        %v2962 = vld [vmem:[%s2955 + $0x30] sm:$0xff]
        %v2963 = vld [vmem:[%s2955 + $0x38] sm:$0xff]
        %v2964 = vld [vmem:[%s2955 + $0x40] sm:$0xff]
        %v2965 = vld [vmem:[%s2955 + $0x48] sm:$0xff]
        %v2966 = vld [vmem:[%s2955 + $0x50] sm:$0xff]
        %v2967 = vld [vmem:[%s2955 + $0x58] sm:$0xff]
        %v2968 = vld [vmem:[%s2955 + $0x60] sm:$0xff]
        %v2969 = vld [vmem:[%s2955 + $0x68] sm:$0xff]
        %v2970 = vld [vmem:[%s2955 + $0x70] sm:$0xff]
        %v2971 = vld [vmem:[%s2955 + $0x78] sm:$0xff]
        %v2972 = vld [vmem:[%s2955 + $0x80] sm:$0xff]
        %v2973 = vld [vmem:[%s2955 + $0x88] sm:$0xff]
        %v2974 = vld [vmem:[%s2955 + $0x90] sm:$0xff]
        %v2975 = vld [vmem:[%s2955 + $0x98] sm:$0xff]
        %v2976 = vld [vmem:[%s2955 + $0xa0] sm:$0xff]
        %v2977 = vld [vmem:[%s2955 + $0xa8] sm:$0xff]
        %v2978 = vld [vmem:[%s2955 + $0xb0] sm:$0xff]
        %v2979 = vld [vmem:[%s2955 + $0xb8] sm:$0xff]
        %v2980 = vld [vmem:[%s2955 + $0xc0] sm:$0xff]
        %v2981 = vld [vmem:[%s2955 + $0xc8] sm:$0xff]
        %v2982 = vld [vmem:[%s2955 + $0xd0] sm:$0xff]
        %v2983 = vld [vmem:[%s2955 + $0xd8] sm:$0xff]
        %v2984 = vld [vmem:[%s2955 + $0xe0] sm:$0xff]
        %v2985 = vld [vmem:[%s2955 + $0xe8] sm:$0xff]
        %v2986 = vld [vmem:[%s2955 + $0xf0] sm:$0xff]
        %v2987 = vld [vmem:[%s2955 + $0xf8] sm:$0xff]
        %v2988 = vld [vmem:[%s2955 + $0x100] sm:$0xff]
        %v2989 = vld [vmem:[%s2955 + $0x108] sm:$0xff]
        %v2990 = vld [vmem:[%s2955 + $0x110] sm:$0xff]
        %v2991 = vld [vmem:[%s2955 + $0x118] sm:$0xff]
        %v2992 = vld [vmem:[%s2955 + $0x120] sm:$0xff]
        %v2993 = vld [vmem:[%s2955 + $0x128] sm:$0xff]
        %v2994 = vld [vmem:[%s2955 + $0x130] sm:$0xff]
        %v2995 = vld [vmem:[%s2955 + $0x138] sm:$0xff]
        %v2996 = vld [vmem:[%s2955 + $0x140] sm:$0xff]
        %v2997 = vld [vmem:[%s2955 + $0x148] sm:$0xff]
        %v2998 = vld [vmem:[%s2955 + $0x150] sm:$0xff]
        %v2999 = vld [vmem:[%s2955 + $0x158] sm:$0xff]
        %v3000 = vld [vmem:[%s2955 + $0x160] sm:$0xff]
        %v3001 = vld [vmem:[%s2955 + $0x168] sm:$0xff]
        %v3002 = vld [vmem:[%s2955 + $0x170] sm:$0xff]
        %v3003 = vld [vmem:[%s2955 + $0x178] sm:$0xff]
        %vm3016 = vcmask 1046528
        %v3017 = vrot.slane %v2951, 1
        %v3018 = vrot.slane %v2893, 1
        %v3019 = vsel %vm3016, %v3017, %v3018
        %v3020 = vrot.slane %v2952, 1
        %v3021 = vrot.slane %v2894, 1
        %v3022 = vsel %vm3016, %v3020, %v3021
        %v3023 = vrot.slane %v2895, 1
        %v3024 = vsel %vm3016, %v3018, %v3023
        %v3025 = vrot.slane %v2896, 1
        %v3026 = vsel %vm3016, %v3021, %v3025
        %v3027 = vrot.slane %v2897, 1
        %v3028 = vsel %vm3016, %v3023, %v3027
        %v3029 = vrot.slane %v2898, 1
        %v3030 = vsel %vm3016, %v3025, %v3029
        %v3031 = vrot.slane %v2899, 1
        %v3032 = vsel %vm3016, %v3027, %v3031
        %v3033 = vrot.slane %v2900, 1
        %v3034 = vsel %vm3016, %v3029, %v3033
        %v3035 = vrot.slane %v2953, 1
        %v3036 = vsel %vm3016, %v3031, %v3035
        %v3037 = vrot.slane %v2954, 1
        %v3038 = vsel %vm3016, %v3033, %v3037
        %v3045 = vsel %vm2879, %v3022, 0
        %v3047 = vsel %vm2879, %v3026, 0
        %v3049 = vsel %vm2879, %v3030, 0
        %v3051 = vsel %vm2879, %v3034, 0
        %v3053 = vsel %vm2879, %v3038, 0
        %v3055 = vsel %vm2879, %v3037, 0
        %3057 = vmatpush.msra.mxu0 %v2986
        %3058 = vmatpush.msra.mxu0 %v2984
        %3059 = vmatpush.msra.mxu0 %v2982
        %3060 = vmatpush.msra.mxu0 %v2980
        %3061 = vmatpush.msra.mxu0 %v2978
        %3062 = vmatpush.msra.mxu0 %v2976
        %3063 = vmatpush.msra.mxu0 %v2974
        %3064 = vmatpush.msra.mxu0 %v2972
        %3065 = vmatpush.msra.mxu0 %v2970
        %3066 = vmatpush.msra.mxu0 %v2968
        %3067 = vmatpush.msra.mxu0 %v2966
        %3068 = vmatpush.msra.mxu0 %v2964
        %3069 = vmatpush.msra.mxu0 %v2962
        %3070 = vmatpush.msra.mxu0 %v2960
        %3071 = vmatpush.msra.mxu0 %v2958
        %3072 = vmatpush.msra.mxu0 %v2956
        %3073 = vmatmul.f32.gmra.mxu0 %v3019
        %v3074 = vpop.f32.mrf.mxu0
        %v3075 = vadd.f32 0.0, %v3074
        %3076 = vmatmul.f32.gmra.mxu0 %v3024
        %v3077 = vpop.f32.mrf.mxu0
        %v3078 = vadd.f32 0.0, %v3077
        %3079 = vmatmul.f32.gmra.mxu0 %v3028
        %v3080 = vpop.f32.mrf.mxu0
        %v3081 = vadd.f32 0.0, %v3080
        %3082 = vmatmul.f32.gmra.mxu0 %v3032
        %v3083 = vpop.f32.mrf.mxu0
        %v3084 = vadd.f32 0.0, %v3083
        %3085 = vmatmul.f32.gmra.mxu0 %v3036
        %v3086 = vpop.f32.mrf.mxu0
        %v3087 = vadd.f32 0.0, %v3086
        %3088 = vmatmul.f32.gmra.mxu0 %v3035
        %v3089 = vpop.f32.mrf.mxu0
        %v3090 = vadd.f32 0.0, %v3089
        %3091 = vdwg.mxu0
        %3092 = vmatpush.msra.mxu0 0.0
        %3093 = vmatpush.msra.mxu0 0.0
        %3094 = vmatpush.msra.mxu0 0.0
        %3095 = vmatpush.msra.mxu0 0.0
        %3096 = vmatpush.msra.mxu0 0.0
        %3097 = vmatpush.msra.mxu0 0.0
        %3098 = vmatpush.msra.mxu0 0.0
        %3099 = vmatpush.msra.mxu0 0.0
        %3100 = vmatpush.msra.mxu0 %v3002
        %3101 = vmatpush.msra.mxu0 %v3000
        %3102 = vmatpush.msra.mxu0 %v2998
        %3103 = vmatpush.msra.mxu0 %v2996
        %3104 = vmatpush.msra.mxu0 %v2994
        %3105 = vmatpush.msra.mxu0 %v2992
        %3106 = vmatpush.msra.mxu0 %v2990
        %3107 = vmatpush.msra.mxu0 %v2988
        %3108 = vmatmul.f32.gmra.mxu0 %v3045
        %v3109 = vpop.f32.mrf.mxu0
        %v3110 = vadd.f32 %v3075, %v3109
        %3111 = vmatmul.f32.gmra.mxu0 %v3047
        %v3112 = vpop.f32.mrf.mxu0
        %v3113 = vadd.f32 %v3078, %v3112
        %3114 = vmatmul.f32.gmra.mxu0 %v3049
        %v3115 = vpop.f32.mrf.mxu0
        %v3116 = vadd.f32 %v3081, %v3115
        %3117 = vmatmul.f32.gmra.mxu0 %v3051
        %v3118 = vpop.f32.mrf.mxu0
        %v3119 = vadd.f32 %v3084, %v3118
        %3120 = vmatmul.f32.gmra.mxu0 %v3053
        %v3121 = vpop.f32.mrf.mxu0
        %v3122 = vadd.f32 %v3087, %v3121
        %3123 = vmatmul.f32.gmra.mxu0 %v3055
        %v3124 = vpop.f32.mrf.mxu0
        %v3125 = vadd.f32 %v3090, %v3124
        %3126 = vdwg.mxu0
        %3127 = vmatpush.msra.mxu0 %v2987
        %3128 = vmatpush.msra.mxu0 %v2985
        %3129 = vmatpush.msra.mxu0 %v2983
        %3130 = vmatpush.msra.mxu0 %v2981
        %3131 = vmatpush.msra.mxu0 %v2979
        %3132 = vmatpush.msra.mxu0 %v2977
        %3133 = vmatpush.msra.mxu0 %v2975
        %3134 = vmatpush.msra.mxu0 %v2973
        %3135 = vmatpush.msra.mxu0 %v2971
        %3136 = vmatpush.msra.mxu0 %v2969
        %3137 = vmatpush.msra.mxu0 %v2967
        %3138 = vmatpush.msra.mxu0 %v2965
        %3139 = vmatpush.msra.mxu0 %v2963
        %3140 = vmatpush.msra.mxu0 %v2961
        %3141 = vmatpush.msra.mxu0 %v2959
        %3142 = vmatpush.msra.mxu0 %v2957
        %3143 = vmatmul.f32.gmra.mxu0 %v3019
        %v3144 = vpop.f32.mrf.mxu0
        %v3145 = vadd.f32 0.0, %v3144
        %3146 = vmatmul.f32.gmra.mxu0 %v3024
        %v3147 = vpop.f32.mrf.mxu0
        %v3148 = vadd.f32 0.0, %v3147
        %3149 = vmatmul.f32.gmra.mxu0 %v3028
        %v3150 = vpop.f32.mrf.mxu0
        %v3151 = vadd.f32 0.0, %v3150
        %3152 = vmatmul.f32.gmra.mxu0 %v3032
        %v3153 = vpop.f32.mrf.mxu0
        %v3154 = vadd.f32 0.0, %v3153
        %3155 = vmatmul.f32.gmra.mxu0 %v3036
        %v3156 = vpop.f32.mrf.mxu0
        %v3157 = vadd.f32 0.0, %v3156
        %3158 = vmatmul.f32.gmra.mxu0 %v3035
        %v3159 = vpop.f32.mrf.mxu0
        %v3160 = vadd.f32 0.0, %v3159
        %3161 = vdwg.mxu0
        %3162 = vmatpush.msra.mxu0 0.0
        %3163 = vmatpush.msra.mxu0 0.0
        %3164 = vmatpush.msra.mxu0 0.0
        %3165 = vmatpush.msra.mxu0 0.0
        %3166 = vmatpush.msra.mxu0 0.0
        %3167 = vmatpush.msra.mxu0 0.0
        %3168 = vmatpush.msra.mxu0 0.0
        %3169 = vmatpush.msra.mxu0 0.0
        %3170 = vmatpush.msra.mxu0 %v3003
        %3171 = vmatpush.msra.mxu0 %v3001
        %3172 = vmatpush.msra.mxu0 %v2999
        %3173 = vmatpush.msra.mxu0 %v2997
        %3174 = vmatpush.msra.mxu0 %v2995
        %3175 = vmatpush.msra.mxu0 %v2993
        %3176 = vmatpush.msra.mxu0 %v2991
        %3177 = vmatpush.msra.mxu0 %v2989
        %3178 = vmatmul.f32.gmra.mxu0 %v3045
        %v3179 = vpop.f32.mrf.mxu0
        %v3180 = vadd.f32 %v3145, %v3179
        %3181 = vmatmul.f32.gmra.mxu0 %v3047
        %v3182 = vpop.f32.mrf.mxu0
        %v3183 = vadd.f32 %v3148, %v3182
        %3184 = vmatmul.f32.gmra.mxu0 %v3049
        %v3185 = vpop.f32.mrf.mxu0
        %v3186 = vadd.f32 %v3151, %v3185
        %3187 = vmatmul.f32.gmra.mxu0 %v3051
        %v3188 = vpop.f32.mrf.mxu0
        %v3189 = vadd.f32 %v3154, %v3188
        %3190 = vmatmul.f32.gmra.mxu0 %v3053
        %v3191 = vpop.f32.mrf.mxu0
        %v3192 = vadd.f32 %v3157, %v3191
        %3193 = vmatmul.f32.gmra.mxu0 %v3055
        %v3194 = vpop.f32.mrf.mxu0
        %v3195 = vadd.f32 %v3160, %v3194
        %3196 = vdwg.mxu0
        %v3198 = vsel %vm2879, %v2892, 0
        %v3200 = vsel %vm2879, %v2894, 0
        %v3202 = vsel %vm2879, %v2896, 0
        %v3204 = vsel %vm2879, %v2898, 0
        %v3206 = vsel %vm2879, %v2900, 0
        %v3209 = vsel %vm2879, %v2902, 0
        %3211 = vmatpush.msra.mxu0 %v2933
        %3212 = vmatpush.msra.mxu0 %v2931
        %3213 = vmatpush.msra.mxu0 %v2929
        %3214 = vmatpush.msra.mxu0 %v2927
        %3215 = vmatpush.msra.mxu0 %v2925
        %3216 = vmatpush.msra.mxu0 %v2923
        %3217 = vmatpush.msra.mxu0 %v2921
        %3218 = vmatpush.msra.mxu0 %v2919
        %3219 = vmatpush.msra.mxu0 %v2917
        %3220 = vmatpush.msra.mxu0 %v2915
        %3221 = vmatpush.msra.mxu0 %v2913
        %3222 = vmatpush.msra.mxu0 %v2911
        %3223 = vmatpush.msra.mxu0 %v2909
        %3224 = vmatpush.msra.mxu0 %v2907
        %3225 = vmatpush.msra.mxu0 %v2905
        %3226 = vmatpush.msra.mxu0 %v2903
        %3227 = vmatmul.f32.gmra.mxu0 %v2891
        %v3228 = vpop.f32.mrf.mxu0
        %v3229 = vadd.f32 %v3110, %v3228
        %3230 = vmatmul.f32.gmra.mxu0 %v2893
        %v3231 = vpop.f32.mrf.mxu0
        %v3232 = vadd.f32 %v3113, %v3231
        %3233 = vmatmul.f32.gmra.mxu0 %v2895
        %v3234 = vpop.f32.mrf.mxu0
        %v3235 = vadd.f32 %v3116, %v3234
        %3236 = vmatmul.f32.gmra.mxu0 %v2897
        %v3237 = vpop.f32.mrf.mxu0
        %v3238 = vadd.f32 %v3119, %v3237
        %3239 = vmatmul.f32.gmra.mxu0 %v2899
        %v3240 = vpop.f32.mrf.mxu0
        %v3241 = vadd.f32 %v3122, %v3240
        %3242 = vmatmul.f32.gmra.mxu0 %v2901
        %v3243 = vpop.f32.mrf.mxu0
        %v3244 = vadd.f32 %v3125, %v3243
        %3245 = vdwg.mxu0
        %3246 = vmatpush.msra.mxu0 0.0
        %3247 = vmatpush.msra.mxu0 0.0
        %3248 = vmatpush.msra.mxu0 0.0
        %3249 = vmatpush.msra.mxu0 0.0
        %3250 = vmatpush.msra.mxu0 0.0
        %3251 = vmatpush.msra.mxu0 0.0
        %3252 = vmatpush.msra.mxu0 0.0
        %3253 = vmatpush.msra.mxu0 0.0
        %3254 = vmatpush.msra.mxu0 %v2949
        %3255 = vmatpush.msra.mxu0 %v2947
        %3256 = vmatpush.msra.mxu0 %v2945
        %3257 = vmatpush.msra.mxu0 %v2943
        %3258 = vmatpush.msra.mxu0 %v2941
        %3259 = vmatpush.msra.mxu0 %v2939
        %3260 = vmatpush.msra.mxu0 %v2937
        %3261 = vmatpush.msra.mxu0 %v2935
        %3262 = vmatmul.f32.gmra.mxu0 %v3198
        %v3263 = vpop.f32.mrf.mxu0
        %v3264 = vadd.f32 %v3229, %v3263
        %3265 = vmatmul.f32.gmra.mxu0 %v3200
        %v3266 = vpop.f32.mrf.mxu0
        %v3267 = vadd.f32 %v3232, %v3266
        %3268 = vmatmul.f32.gmra.mxu0 %v3202
        %v3269 = vpop.f32.mrf.mxu0
        %v3270 = vadd.f32 %v3235, %v3269
        %3271 = vmatmul.f32.gmra.mxu0 %v3204
        %v3272 = vpop.f32.mrf.mxu0
        %v3273 = vadd.f32 %v3238, %v3272
        %3274 = vmatmul.f32.gmra.mxu0 %v3206
        %v3275 = vpop.f32.mrf.mxu0
        %v3276 = vadd.f32 %v3241, %v3275
        %3277 = vmatmul.f32.gmra.mxu0 %v3209
        %v3278 = vpop.f32.mrf.mxu0
        %v3279 = vadd.f32 %v3244, %v3278
        %3280 = vdwg.mxu0
        %3281 = vmatpush.msra.mxu0 %v2934
        %3282 = vmatpush.msra.mxu0 %v2932
        %3283 = vmatpush.msra.mxu0 %v2930
        %3284 = vmatpush.msra.mxu0 %v2928
        %3285 = vmatpush.msra.mxu0 %v2926
        %3286 = vmatpush.msra.mxu0 %v2924
        %3287 = vmatpush.msra.mxu0 %v2922
        %3288 = vmatpush.msra.mxu0 %v2920
        %3289 = vmatpush.msra.mxu0 %v2918
        %3290 = vmatpush.msra.mxu0 %v2916
        %3291 = vmatpush.msra.mxu0 %v2914
        %3292 = vmatpush.msra.mxu0 %v2912
        %3293 = vmatpush.msra.mxu0 %v2910
        %3294 = vmatpush.msra.mxu0 %v2908
        %3295 = vmatpush.msra.mxu0 %v2906
        %3296 = vmatpush.msra.mxu0 %v2904
        %3297 = vmatmul.f32.gmra.mxu0 %v2891
        %v3298 = vpop.f32.mrf.mxu0
        %v3299 = vadd.f32 %v3180, %v3298
        %3300 = vmatmul.f32.gmra.mxu0 %v2893
        %v3301 = vpop.f32.mrf.mxu0
        %v3302 = vadd.f32 %v3183, %v3301
        %3303 = vmatmul.f32.gmra.mxu0 %v2895
        %v3304 = vpop.f32.mrf.mxu0
        %v3305 = vadd.f32 %v3186, %v3304
        %3306 = vmatmul.f32.gmra.mxu0 %v2897
        %v3307 = vpop.f32.mrf.mxu0
        %v3308 = vadd.f32 %v3189, %v3307
        %3309 = vmatmul.f32.gmra.mxu0 %v2899
        %v3310 = vpop.f32.mrf.mxu0
        %v3311 = vadd.f32 %v3192, %v3310
        %3312 = vmatmul.f32.gmra.mxu0 %v2901
        %v3313 = vpop.f32.mrf.mxu0
        %v3314 = vadd.f32 %v3195, %v3313
        %3315 = vdwg.mxu0
        %3316 = vmatpush.msra.mxu0 0.0
        %3317 = vmatpush.msra.mxu0 0.0
        %3318 = vmatpush.msra.mxu0 0.0
        %3319 = vmatpush.msra.mxu0 0.0
        %3320 = vmatpush.msra.mxu0 0.0
        %3321 = vmatpush.msra.mxu0 0.0
        %3322 = vmatpush.msra.mxu0 0.0
        %3323 = vmatpush.msra.mxu0 0.0
        %3324 = vmatpush.msra.mxu0 %v2950
        %3325 = vmatpush.msra.mxu0 %v2948
        %3326 = vmatpush.msra.mxu0 %v2946
        %3327 = vmatpush.msra.mxu0 %v2944
        %3328 = vmatpush.msra.mxu0 %v2942
        %3329 = vmatpush.msra.mxu0 %v2940
        %3330 = vmatpush.msra.mxu0 %v2938
        %3331 = vmatpush.msra.mxu0 %v2936
        %3332 = vmatmul.f32.gmra.mxu0 %v3198
        %v3333 = vpop.f32.mrf.mxu0
        %v3334 = vadd.f32 %v3299, %v3333
        %3335 = vmatmul.f32.gmra.mxu0 %v3200
        %v3336 = vpop.f32.mrf.mxu0
        %v3337 = vadd.f32 %v3302, %v3336
        %3338 = vmatmul.f32.gmra.mxu0 %v3202
        %v3339 = vpop.f32.mrf.mxu0
        %v3340 = vadd.f32 %v3305, %v3339
        %3341 = vmatmul.f32.gmra.mxu0 %v3204
        %v3342 = vpop.f32.mrf.mxu0
        %v3343 = vadd.f32 %v3308, %v3342
        %3344 = vmatmul.f32.gmra.mxu0 %v3206
        %v3345 = vpop.f32.mrf.mxu0
        %v3346 = vadd.f32 %v3311, %v3345
        %3347 = vmatmul.f32.gmra.mxu0 %v3209
        %v3348 = vpop.f32.mrf.mxu0
        %v3349 = vadd.f32 %v3314, %v3348
        %3350 = vdwg.mxu0
        %v3351 = vld [vmem:[#allocation2] sm:$0xfc]
        %v3352 = vld [vmem:[#allocation2 + $0x8] sm:$0xfc]
        %v3353 = vld [vmem:[#allocation2 + $0x50] sm:$0x3f]
        %v3354 = vld [vmem:[#allocation2 + $0x58] sm:$0x3f]
        %s3355 = scalar_lea.vmem %s7, 768
        %v3356 = vld [vmem:[%s3355] sm:$0xff]
        %v3357 = vld [vmem:[%s3355 + $0x8] sm:$0xff]
        %v3358 = vld [vmem:[%s3355 + $0x10] sm:$0xff]
        %v3359 = vld [vmem:[%s3355 + $0x18] sm:$0xff]
        %v3360 = vld [vmem:[%s3355 + $0x20] sm:$0xff]
        %v3361 = vld [vmem:[%s3355 + $0x28] sm:$0xff]
        %v3362 = vld [vmem:[%s3355 + $0x30] sm:$0xff]
        %v3363 = vld [vmem:[%s3355 + $0x38] sm:$0xff]
        %v3364 = vld [vmem:[%s3355 + $0x40] sm:$0xff]
        %v3365 = vld [vmem:[%s3355 + $0x48] sm:$0xff]
        %v3366 = vld [vmem:[%s3355 + $0x50] sm:$0xff]
        %v3367 = vld [vmem:[%s3355 + $0x58] sm:$0xff]
        %v3368 = vld [vmem:[%s3355 + $0x60] sm:$0xff]
        %v3369 = vld [vmem:[%s3355 + $0x68] sm:$0xff]
        %v3370 = vld [vmem:[%s3355 + $0x70] sm:$0xff]
        %v3371 = vld [vmem:[%s3355 + $0x78] sm:$0xff]
        %v3372 = vld [vmem:[%s3355 + $0x80] sm:$0xff]
        %v3373 = vld [vmem:[%s3355 + $0x88] sm:$0xff]
        %v3374 = vld [vmem:[%s3355 + $0x90] sm:$0xff]
        %v3375 = vld [vmem:[%s3355 + $0x98] sm:$0xff]
        %v3376 = vld [vmem:[%s3355 + $0xa0] sm:$0xff]
        %v3377 = vld [vmem:[%s3355 + $0xa8] sm:$0xff]
        %v3378 = vld [vmem:[%s3355 + $0xb0] sm:$0xff]
        %v3379 = vld [vmem:[%s3355 + $0xb8] sm:$0xff]
        %v3380 = vld [vmem:[%s3355 + $0xc0] sm:$0xff]
        %v3381 = vld [vmem:[%s3355 + $0xc8] sm:$0xff]
        %v3382 = vld [vmem:[%s3355 + $0xd0] sm:$0xff]
        %v3383 = vld [vmem:[%s3355 + $0xd8] sm:$0xff]
        %v3384 = vld [vmem:[%s3355 + $0xe0] sm:$0xff]
        %v3385 = vld [vmem:[%s3355 + $0xe8] sm:$0xff]
        %v3386 = vld [vmem:[%s3355 + $0xf0] sm:$0xff]
        %v3387 = vld [vmem:[%s3355 + $0xf8] sm:$0xff]
        %v3388 = vld [vmem:[%s3355 + $0x100] sm:$0xff]
        %v3389 = vld [vmem:[%s3355 + $0x108] sm:$0xff]
        %v3390 = vld [vmem:[%s3355 + $0x110] sm:$0xff]
        %v3391 = vld [vmem:[%s3355 + $0x118] sm:$0xff]
        %v3392 = vld [vmem:[%s3355 + $0x120] sm:$0xff]
        %v3393 = vld [vmem:[%s3355 + $0x128] sm:$0xff]
        %v3394 = vld [vmem:[%s3355 + $0x130] sm:$0xff]
        %v3395 = vld [vmem:[%s3355 + $0x138] sm:$0xff]
        %v3396 = vld [vmem:[%s3355 + $0x140] sm:$0xff]
        %v3397 = vld [vmem:[%s3355 + $0x148] sm:$0xff]
        %v3398 = vld [vmem:[%s3355 + $0x150] sm:$0xff]
        %v3399 = vld [vmem:[%s3355 + $0x158] sm:$0xff]
        %v3400 = vld [vmem:[%s3355 + $0x160] sm:$0xff]
        %v3401 = vld [vmem:[%s3355 + $0x168] sm:$0xff]
        %v3402 = vld [vmem:[%s3355 + $0x170] sm:$0xff]
        %v3403 = vld [vmem:[%s3355 + $0x178] sm:$0xff]
        %vm3408 = vcmask 1045504
        %v3409 = vrot.slane %v3351, 2
        %v3410 = vrot.slane %v2893, 2
        %v3411 = vsel %vm3408, %v3409, %v3410
        %v3412 = vrot.slane %v3352, 2
        %v3413 = vrot.slane %v2894, 2
        %v3414 = vsel %vm3408, %v3412, %v3413
        %v3415 = vrot.slane %v2895, 2
        %v3416 = vsel %vm3408, %v3410, %v3415
        %v3417 = vrot.slane %v2896, 2
        %v3418 = vsel %vm3408, %v3413, %v3417
        %v3419 = vrot.slane %v2897, 2
        %v3420 = vsel %vm3408, %v3415, %v3419
        %v3421 = vrot.slane %v2898, 2
        %v3422 = vsel %vm3408, %v3417, %v3421
        %v3423 = vrot.slane %v2899, 2
        %v3424 = vsel %vm3408, %v3419, %v3423
        %v3425 = vrot.slane %v2900, 2
        %v3426 = vsel %vm3408, %v3421, %v3425
        %v3427 = vrot.slane %v3353, 2
        %v3428 = vsel %vm3408, %v3423, %v3427
        %v3429 = vrot.slane %v3354, 2
        %v3430 = vsel %vm3408, %v3425, %v3429
        %v3437 = vsel %vm2879, %v3414, 0
        %v3439 = vsel %vm2879, %v3418, 0
        %v3441 = vsel %vm2879, %v3422, 0
        %v3443 = vsel %vm2879, %v3426, 0
        %v3445 = vsel %vm2879, %v3430, 0
        %v3447 = vsel %vm2879, %v3429, 0
        %3449 = vmatpush.msra.mxu0 %v3386
        %3450 = vmatpush.msra.mxu0 %v3384
        %3451 = vmatpush.msra.mxu0 %v3382
        %3452 = vmatpush.msra.mxu0 %v3380
        %3453 = vmatpush.msra.mxu0 %v3378
        %3454 = vmatpush.msra.mxu0 %v3376
        %3455 = vmatpush.msra.mxu0 %v3374
        %3456 = vmatpush.msra.mxu0 %v3372
        %3457 = vmatpush.msra.mxu0 %v3370
        %3458 = vmatpush.msra.mxu0 %v3368
        %3459 = vmatpush.msra.mxu0 %v3366
        %3460 = vmatpush.msra.mxu0 %v3364
        %3461 = vmatpush.msra.mxu0 %v3362
        %3462 = vmatpush.msra.mxu0 %v3360
        %3463 = vmatpush.msra.mxu0 %v3358
        %3464 = vmatpush.msra.mxu0 %v3356
        %3465 = vmatmul.f32.gmra.mxu0 %v3411
        %v3466 = vpop.f32.mrf.mxu0
        %v3467 = vadd.f32 0.0, %v3466
        %3468 = vmatmul.f32.gmra.mxu0 %v3416
        %v3469 = vpop.f32.mrf.mxu0
        %v3470 = vadd.f32 0.0, %v3469
        %3471 = vmatmul.f32.gmra.mxu0 %v3420
        %v3472 = vpop.f32.mrf.mxu0
        %v3473 = vadd.f32 0.0, %v3472
        %3474 = vmatmul.f32.gmra.mxu0 %v3424
        %v3475 = vpop.f32.mrf.mxu0
        %v3476 = vadd.f32 0.0, %v3475
        %3477 = vmatmul.f32.gmra.mxu0 %v3428
        %v3478 = vpop.f32.mrf.mxu0
        %v3479 = vadd.f32 0.0, %v3478
        %3480 = vmatmul.f32.gmra.mxu0 %v3427
        %v3481 = vpop.f32.mrf.mxu0
        %v3482 = vadd.f32 0.0, %v3481
        %3483 = vdwg.mxu0
        %3484 = vmatpush.msra.mxu0 0.0
        %3485 = vmatpush.msra.mxu0 0.0
        %3486 = vmatpush.msra.mxu0 0.0
        %3487 = vmatpush.msra.mxu0 0.0
        %3488 = vmatpush.msra.mxu0 0.0
        %3489 = vmatpush.msra.mxu0 0.0
        %3490 = vmatpush.msra.mxu0 0.0
        %3491 = vmatpush.msra.mxu0 0.0
        %3492 = vmatpush.msra.mxu0 %v3402
        %3493 = vmatpush.msra.mxu0 %v3400
        %3494 = vmatpush.msra.mxu0 %v3398
        %3495 = vmatpush.msra.mxu0 %v3396
        %3496 = vmatpush.msra.mxu0 %v3394
        %3497 = vmatpush.msra.mxu0 %v3392
        %3498 = vmatpush.msra.mxu0 %v3390
        %3499 = vmatpush.msra.mxu0 %v3388
        %3500 = vmatmul.f32.gmra.mxu0 %v3437
        %v3501 = vpop.f32.mrf.mxu0
        %v3502 = vadd.f32 %v3467, %v3501
        %3503 = vmatmul.f32.gmra.mxu0 %v3439
        %v3504 = vpop.f32.mrf.mxu0
        %v3505 = vadd.f32 %v3470, %v3504
        %3506 = vmatmul.f32.gmra.mxu0 %v3441
        %v3507 = vpop.f32.mrf.mxu0
        %v3508 = vadd.f32 %v3473, %v3507
        %3509 = vmatmul.f32.gmra.mxu0 %v3443
        %v3510 = vpop.f32.mrf.mxu0
        %v3511 = vadd.f32 %v3476, %v3510
        %3512 = vmatmul.f32.gmra.mxu0 %v3445
        %v3513 = vpop.f32.mrf.mxu0
        %v3514 = vadd.f32 %v3479, %v3513
        %3515 = vmatmul.f32.gmra.mxu0 %v3447
        %v3516 = vpop.f32.mrf.mxu0
        %v3517 = vadd.f32 %v3482, %v3516
        %3518 = vdwg.mxu0
        %3519 = vmatpush.msra.mxu0 %v3387
        %3520 = vmatpush.msra.mxu0 %v3385
        %3521 = vmatpush.msra.mxu0 %v3383
        %3522 = vmatpush.msra.mxu0 %v3381
        %3523 = vmatpush.msra.mxu0 %v3379
        %3524 = vmatpush.msra.mxu0 %v3377
        %3525 = vmatpush.msra.mxu0 %v3375
        %3526 = vmatpush.msra.mxu0 %v3373
        %3527 = vmatpush.msra.mxu0 %v3371
        %3528 = vmatpush.msra.mxu0 %v3369
        %3529 = vmatpush.msra.mxu0 %v3367
        %3530 = vmatpush.msra.mxu0 %v3365
        %3531 = vmatpush.msra.mxu0 %v3363
        %3532 = vmatpush.msra.mxu0 %v3361
        %3533 = vmatpush.msra.mxu0 %v3359
        %3534 = vmatpush.msra.mxu0 %v3357
        %3535 = vmatmul.f32.gmra.mxu0 %v3411
        %v3536 = vpop.f32.mrf.mxu0
        %v3537 = vadd.f32 0.0, %v3536
        %3538 = vmatmul.f32.gmra.mxu0 %v3416
        %v3539 = vpop.f32.mrf.mxu0
        %v3540 = vadd.f32 0.0, %v3539
        %3541 = vmatmul.f32.gmra.mxu0 %v3420
        %v3542 = vpop.f32.mrf.mxu0
        %v3543 = vadd.f32 0.0, %v3542
        %3544 = vmatmul.f32.gmra.mxu0 %v3424
        %v3545 = vpop.f32.mrf.mxu0
        %v3546 = vadd.f32 0.0, %v3545
        %3547 = vmatmul.f32.gmra.mxu0 %v3428
        %v3548 = vpop.f32.mrf.mxu0
        %v3549 = vadd.f32 0.0, %v3548
        %3550 = vmatmul.f32.gmra.mxu0 %v3427
        %v3551 = vpop.f32.mrf.mxu0
        %v3552 = vadd.f32 0.0, %v3551
        %3553 = vdwg.mxu0
        %3554 = vmatpush.msra.mxu0 0.0
        %3555 = vmatpush.msra.mxu0 0.0
        %3556 = vmatpush.msra.mxu0 0.0
        %3557 = vmatpush.msra.mxu0 0.0
        %3558 = vmatpush.msra.mxu0 0.0
        %3559 = vmatpush.msra.mxu0 0.0
        %3560 = vmatpush.msra.mxu0 0.0
        %3561 = vmatpush.msra.mxu0 0.0
        %3562 = vmatpush.msra.mxu0 %v3403
        %3563 = vmatpush.msra.mxu0 %v3401
        %3564 = vmatpush.msra.mxu0 %v3399
        %3565 = vmatpush.msra.mxu0 %v3397
        %3566 = vmatpush.msra.mxu0 %v3395
        %3567 = vmatpush.msra.mxu0 %v3393
        %3568 = vmatpush.msra.mxu0 %v3391
        %3569 = vmatpush.msra.mxu0 %v3389
        %3570 = vmatmul.f32.gmra.mxu0 %v3437
        %v3571 = vpop.f32.mrf.mxu0
        %v3572 = vadd.f32 %v3537, %v3571
        %3573 = vmatmul.f32.gmra.mxu0 %v3439
        %v3574 = vpop.f32.mrf.mxu0
        %v3575 = vadd.f32 %v3540, %v3574
        %3576 = vmatmul.f32.gmra.mxu0 %v3441
        %v3577 = vpop.f32.mrf.mxu0
        %v3578 = vadd.f32 %v3543, %v3577
        %3579 = vmatmul.f32.gmra.mxu0 %v3443
        %v3580 = vpop.f32.mrf.mxu0
        %v3581 = vadd.f32 %v3546, %v3580
        %3582 = vmatmul.f32.gmra.mxu0 %v3445
        %v3583 = vpop.f32.mrf.mxu0
        %v3584 = vadd.f32 %v3549, %v3583
        %3585 = vmatmul.f32.gmra.mxu0 %v3447
        %v3586 = vpop.f32.mrf.mxu0
        %v3587 = vadd.f32 %v3552, %v3586
        %3588 = vdwg.mxu0
        %v3589 = vadd.f32 %v3264, %v3502
        %v3590 = vadd.f32 %v3334, %v3572
        %v3591 = vadd.f32 %v3267, %v3505
        %v3592 = vadd.f32 %v3337, %v3575
        %v3593 = vadd.f32 %v3270, %v3508
        %v3594 = vadd.f32 %v3340, %v3578
        %v3595 = vadd.f32 %v3273, %v3511
        %v3596 = vadd.f32 %v3343, %v3581
        %v3597 = vadd.f32 %v3276, %v3514
        %v3598 = vadd.f32 %v3346, %v3584
        %v3599 = vadd.f32 %v3279, %v3517
        %v3600 = vadd.f32 %v3349, %v3587
        %v3601 = vld [vmem:[#allocation2] sm:$0xf8]
        %v3602 = vld [vmem:[#allocation2 + $0x8] sm:$0xf8]
        %v3603 = vld [vmem:[#allocation2 + $0x50] sm:$0x7f]
        %v3604 = vld [vmem:[#allocation2 + $0x58] sm:$0x7f]
        %s3605 = scalar_lea.vmem %s7, 1152
        %v3606 = vld [vmem:[%s3605] sm:$0xff]
        %v3607 = vld [vmem:[%s3605 + $0x8] sm:$0xff]
        %v3608 = vld [vmem:[%s3605 + $0x10] sm:$0xff]
        %v3609 = vld [vmem:[%s3605 + $0x18] sm:$0xff]
        %v3610 = vld [vmem:[%s3605 + $0x20] sm:$0xff]
        %v3611 = vld [vmem:[%s3605 + $0x28] sm:$0xff]
        %v3612 = vld [vmem:[%s3605 + $0x30] sm:$0xff]
        %v3613 = vld [vmem:[%s3605 + $0x38] sm:$0xff]
        %v3614 = vld [vmem:[%s3605 + $0x40] sm:$0xff]
        %v3615 = vld [vmem:[%s3605 + $0x48] sm:$0xff]
        %v3616 = vld [vmem:[%s3605 + $0x50] sm:$0xff]
        %v3617 = vld [vmem:[%s3605 + $0x58] sm:$0xff]
        %v3618 = vld [vmem:[%s3605 + $0x60] sm:$0xff]
        %v3619 = vld [vmem:[%s3605 + $0x68] sm:$0xff]
        %v3620 = vld [vmem:[%s3605 + $0x70] sm:$0xff]
        %v3621 = vld [vmem:[%s3605 + $0x78] sm:$0xff]
        %v3622 = vld [vmem:[%s3605 + $0x80] sm:$0xff]
        %v3623 = vld [vmem:[%s3605 + $0x88] sm:$0xff]
        %v3624 = vld [vmem:[%s3605 + $0x90] sm:$0xff]
        %v3625 = vld [vmem:[%s3605 + $0x98] sm:$0xff]
        %v3626 = vld [vmem:[%s3605 + $0xa0] sm:$0xff]
        %v3627 = vld [vmem:[%s3605 + $0xa8] sm:$0xff]
        %v3628 = vld [vmem:[%s3605 + $0xb0] sm:$0xff]
        %v3629 = vld [vmem:[%s3605 + $0xb8] sm:$0xff]
        %v3630 = vld [vmem:[%s3605 + $0xc0] sm:$0xff]
        %v3631 = vld [vmem:[%s3605 + $0xc8] sm:$0xff]
        %v3632 = vld [vmem:[%s3605 + $0xd0] sm:$0xff]
        %v3633 = vld [vmem:[%s3605 + $0xd8] sm:$0xff]
        %v3634 = vld [vmem:[%s3605 + $0xe0] sm:$0xff]
        %v3635 = vld [vmem:[%s3605 + $0xe8] sm:$0xff]
        %v3636 = vld [vmem:[%s3605 + $0xf0] sm:$0xff]
        %v3637 = vld [vmem:[%s3605 + $0xf8] sm:$0xff]
        %v3638 = vld [vmem:[%s3605 + $0x100] sm:$0xff]
        %v3639 = vld [vmem:[%s3605 + $0x108] sm:$0xff]
        %v3640 = vld [vmem:[%s3605 + $0x110] sm:$0xff]
        %v3641 = vld [vmem:[%s3605 + $0x118] sm:$0xff]
        %v3642 = vld [vmem:[%s3605 + $0x120] sm:$0xff]
        %v3643 = vld [vmem:[%s3605 + $0x128] sm:$0xff]
        %v3644 = vld [vmem:[%s3605 + $0x130] sm:$0xff]
        %v3645 = vld [vmem:[%s3605 + $0x138] sm:$0xff]
        %v3646 = vld [vmem:[%s3605 + $0x140] sm:$0xff]
        %v3647 = vld [vmem:[%s3605 + $0x148] sm:$0xff]
        %v3648 = vld [vmem:[%s3605 + $0x150] sm:$0xff]
        %v3649 = vld [vmem:[%s3605 + $0x158] sm:$0xff]
        %v3650 = vld [vmem:[%s3605 + $0x160] sm:$0xff]
        %v3651 = vld [vmem:[%s3605 + $0x168] sm:$0xff]
        %v3652 = vld [vmem:[%s3605 + $0x170] sm:$0xff]
        %v3653 = vld [vmem:[%s3605 + $0x178] sm:$0xff]
        %vm3658 = vcmask 1044480
        %v3659 = vrot.slane %v3601, 3
        %v3660 = vrot.slane %v2893, 3
        %v3661 = vsel %vm3658, %v3659, %v3660
        %v3662 = vrot.slane %v3602, 3
        %v3663 = vrot.slane %v2894, 3
        %v3664 = vsel %vm3658, %v3662, %v3663
        %v3665 = vrot.slane %v2895, 3
        %v3666 = vsel %vm3658, %v3660, %v3665
        %v3667 = vrot.slane %v2896, 3
        %v3668 = vsel %vm3658, %v3663, %v3667
        %v3669 = vrot.slane %v2897, 3
        %v3670 = vsel %vm3658, %v3665, %v3669
        %v3671 = vrot.slane %v2898, 3
        %v3672 = vsel %vm3658, %v3667, %v3671
        %v3673 = vrot.slane %v2899, 3
        %v3674 = vsel %vm3658, %v3669, %v3673
        %v3675 = vrot.slane %v2900, 3
        %v3676 = vsel %vm3658, %v3671, %v3675
        %v3677 = vrot.slane %v3603, 3
        %v3678 = vsel %vm3658, %v3673, %v3677
        %v3679 = vrot.slane %v3604, 3
        %v3680 = vsel %vm3658, %v3675, %v3679
        %v3687 = vsel %vm2879, %v3664, 0
        %v3689 = vsel %vm2879, %v3668, 0
        %v3691 = vsel %vm2879, %v3672, 0
        %v3693 = vsel %vm2879, %v3676, 0
        %v3695 = vsel %vm2879, %v3680, 0
        %v3697 = vsel %vm2879, %v3679, 0
        %3699 = vmatpush.msra.mxu0 %v3636
        %3700 = vmatpush.msra.mxu0 %v3634
        %3701 = vmatpush.msra.mxu0 %v3632
        %3702 = vmatpush.msra.mxu0 %v3630
        %3703 = vmatpush.msra.mxu0 %v3628
        %3704 = vmatpush.msra.mxu0 %v3626
        %3705 = vmatpush.msra.mxu0 %v3624
        %3706 = vmatpush.msra.mxu0 %v3622
        %3707 = vmatpush.msra.mxu0 %v3620
        %3708 = vmatpush.msra.mxu0 %v3618
        %3709 = vmatpush.msra.mxu0 %v3616
        %3710 = vmatpush.msra.mxu0 %v3614
        %3711 = vmatpush.msra.mxu0 %v3612
        %3712 = vmatpush.msra.mxu0 %v3610
        %3713 = vmatpush.msra.mxu0 %v3608
        %3714 = vmatpush.msra.mxu0 %v3606
        %3715 = vmatmul.f32.gmra.mxu0 %v3661
        %v3716 = vpop.f32.mrf.mxu0
        %v3717 = vadd.f32 0.0, %v3716
        %3718 = vmatmul.f32.gmra.mxu0 %v3666
        %v3719 = vpop.f32.mrf.mxu0
        %v3720 = vadd.f32 0.0, %v3719
        %3721 = vmatmul.f32.gmra.mxu0 %v3670
        %v3722 = vpop.f32.mrf.mxu0
        %v3723 = vadd.f32 0.0, %v3722
        %3724 = vmatmul.f32.gmra.mxu0 %v3674
        %v3725 = vpop.f32.mrf.mxu0
        %v3726 = vadd.f32 0.0, %v3725
        %3727 = vmatmul.f32.gmra.mxu0 %v3678
        %v3728 = vpop.f32.mrf.mxu0
        %v3729 = vadd.f32 0.0, %v3728
        %3730 = vmatmul.f32.gmra.mxu0 %v3677
        %v3731 = vpop.f32.mrf.mxu0
        %v3732 = vadd.f32 0.0, %v3731
        %3733 = vdwg.mxu0
        %3734 = vmatpush.msra.mxu0 0.0
        %3735 = vmatpush.msra.mxu0 0.0
        %3736 = vmatpush.msra.mxu0 0.0
        %3737 = vmatpush.msra.mxu0 0.0
        %3738 = vmatpush.msra.mxu0 0.0
        %3739 = vmatpush.msra.mxu0 0.0
        %3740 = vmatpush.msra.mxu0 0.0
        %3741 = vmatpush.msra.mxu0 0.0
        %3742 = vmatpush.msra.mxu0 %v3652
        %3743 = vmatpush.msra.mxu0 %v3650
        %3744 = vmatpush.msra.mxu0 %v3648
        %3745 = vmatpush.msra.mxu0 %v3646
        %3746 = vmatpush.msra.mxu0 %v3644
        %3747 = vmatpush.msra.mxu0 %v3642
        %3748 = vmatpush.msra.mxu0 %v3640
        %3749 = vmatpush.msra.mxu0 %v3638
        %3750 = vmatmul.f32.gmra.mxu0 %v3687
        %v3751 = vpop.f32.mrf.mxu0
        %v3752 = vadd.f32 %v3717, %v3751
        %3753 = vmatmul.f32.gmra.mxu0 %v3689
        %v3754 = vpop.f32.mrf.mxu0
        %v3755 = vadd.f32 %v3720, %v3754
        %3756 = vmatmul.f32.gmra.mxu0 %v3691
        %v3757 = vpop.f32.mrf.mxu0
        %v3758 = vadd.f32 %v3723, %v3757
        %3759 = vmatmul.f32.gmra.mxu0 %v3693
        %v3760 = vpop.f32.mrf.mxu0
        %v3761 = vadd.f32 %v3726, %v3760
        %3762 = vmatmul.f32.gmra.mxu0 %v3695
        %v3763 = vpop.f32.mrf.mxu0
        %v3764 = vadd.f32 %v3729, %v3763
        %3765 = vmatmul.f32.gmra.mxu0 %v3697
        %v3766 = vpop.f32.mrf.mxu0
        %v3767 = vadd.f32 %v3732, %v3766
        %3768 = vdwg.mxu0
        %3769 = vmatpush.msra.mxu0 %v3637
        %3770 = vmatpush.msra.mxu0 %v3635
        %3771 = vmatpush.msra.mxu0 %v3633
        %3772 = vmatpush.msra.mxu0 %v3631
        %3773 = vmatpush.msra.mxu0 %v3629
        %3774 = vmatpush.msra.mxu0 %v3627
        %3775 = vmatpush.msra.mxu0 %v3625
        %3776 = vmatpush.msra.mxu0 %v3623
        %3777 = vmatpush.msra.mxu0 %v3621
        %3778 = vmatpush.msra.mxu0 %v3619
        %3779 = vmatpush.msra.mxu0 %v3617
        %3780 = vmatpush.msra.mxu0 %v3615
        %3781 = vmatpush.msra.mxu0 %v3613
        %3782 = vmatpush.msra.mxu0 %v3611
        %3783 = vmatpush.msra.mxu0 %v3609
        %3784 = vmatpush.msra.mxu0 %v3607
        %3785 = vmatmul.f32.gmra.mxu0 %v3661
        %v3786 = vpop.f32.mrf.mxu0
        %v3787 = vadd.f32 0.0, %v3786
        %3788 = vmatmul.f32.gmra.mxu0 %v3666
        %v3789 = vpop.f32.mrf.mxu0
        %v3790 = vadd.f32 0.0, %v3789
        %3791 = vmatmul.f32.gmra.mxu0 %v3670
        %v3792 = vpop.f32.mrf.mxu0
        %v3793 = vadd.f32 0.0, %v3792
        %3794 = vmatmul.f32.gmra.mxu0 %v3674
        %v3795 = vpop.f32.mrf.mxu0
        %v3796 = vadd.f32 0.0, %v3795
        %3797 = vmatmul.f32.gmra.mxu0 %v3678
        %v3798 = vpop.f32.mrf.mxu0
        %v3799 = vadd.f32 0.0, %v3798
        %3800 = vmatmul.f32.gmra.mxu0 %v3677
        %v3801 = vpop.f32.mrf.mxu0
        %v3802 = vadd.f32 0.0, %v3801
        %3803 = vdwg.mxu0
        %3804 = vmatpush.msra.mxu0 0.0
        %3805 = vmatpush.msra.mxu0 0.0
        %3806 = vmatpush.msra.mxu0 0.0
        %3807 = vmatpush.msra.mxu0 0.0
        %3808 = vmatpush.msra.mxu0 0.0
        %3809 = vmatpush.msra.mxu0 0.0
        %3810 = vmatpush.msra.mxu0 0.0
        %3811 = vmatpush.msra.mxu0 0.0
        %3812 = vmatpush.msra.mxu0 %v3653
        %3813 = vmatpush.msra.mxu0 %v3651
        %3814 = vmatpush.msra.mxu0 %v3649
        %3815 = vmatpush.msra.mxu0 %v3647
        %3816 = vmatpush.msra.mxu0 %v3645
        %3817 = vmatpush.msra.mxu0 %v3643
        %3818 = vmatpush.msra.mxu0 %v3641
        %3819 = vmatpush.msra.mxu0 %v3639
        %3820 = vmatmul.f32.gmra.mxu0 %v3687
        %v3821 = vpop.f32.mrf.mxu0
        %v3822 = vadd.f32 %v3787, %v3821
        %3823 = vmatmul.f32.gmra.mxu0 %v3689
        %v3824 = vpop.f32.mrf.mxu0
        %v3825 = vadd.f32 %v3790, %v3824
        %3826 = vmatmul.f32.gmra.mxu0 %v3691
        %v3827 = vpop.f32.mrf.mxu0
        %v3828 = vadd.f32 %v3793, %v3827
        %3829 = vmatmul.f32.gmra.mxu0 %v3693
        %v3830 = vpop.f32.mrf.mxu0
        %v3831 = vadd.f32 %v3796, %v3830
        %3832 = vmatmul.f32.gmra.mxu0 %v3695
        %v3833 = vpop.f32.mrf.mxu0
        %v3834 = vadd.f32 %v3799, %v3833
        %3835 = vmatmul.f32.gmra.mxu0 %v3697
        %v3836 = vpop.f32.mrf.mxu0
        %v3837 = vadd.f32 %v3802, %v3836
        %3838 = vdwg.mxu0
        %v3839 = vadd.f32 %v3589, %v3752
        %v3840 = vadd.f32 %v3590, %v3822
        %v3841 = vadd.f32 %v3591, %v3755
        %v3842 = vadd.f32 %v3592, %v3825
        %v3843 = vadd.f32 %v3593, %v3758
        %v3844 = vadd.f32 %v3594, %v3828
        %v3845 = vadd.f32 %v3595, %v3761
        %v3846 = vadd.f32 %v3596, %v3831
        %v3847 = vadd.f32 %v3597, %v3764
        %v3848 = vadd.f32 %v3598, %v3834
        %v3849 = vadd.f32 %v3599, %v3767
        %v3850 = vadd.f32 %v3600, %v3837
        %v3851 = vld [vmem:[#allocation2] sm:$0xf0]
        %v3852 = vld [vmem:[#allocation2 + $0x8] sm:$0xf0]
        %v3853 = vld [vmem:[#allocation2 + $0x50] sm:$0xff]
        %v3854 = vld [vmem:[#allocation2 + $0x58] sm:$0xff]
        %s3855 = scalar_lea.vmem %s7, 1536
        %v3856 = vld [vmem:[%s3855] sm:$0xff]
        %v3857 = vld [vmem:[%s3855 + $0x8] sm:$0xff]
        %v3858 = vld [vmem:[%s3855 + $0x10] sm:$0xff]
        %v3859 = vld [vmem:[%s3855 + $0x18] sm:$0xff]
        %v3860 = vld [vmem:[%s3855 + $0x20] sm:$0xff]
        %v3861 = vld [vmem:[%s3855 + $0x28] sm:$0xff]
        %v3862 = vld [vmem:[%s3855 + $0x30] sm:$0xff]
        %v3863 = vld [vmem:[%s3855 + $0x38] sm:$0xff]
        %v3864 = vld [vmem:[%s3855 + $0x40] sm:$0xff]
        %v3865 = vld [vmem:[%s3855 + $0x48] sm:$0xff]
        %v3866 = vld [vmem:[%s3855 + $0x50] sm:$0xff]
        %v3867 = vld [vmem:[%s3855 + $0x58] sm:$0xff]
        %v3868 = vld [vmem:[%s3855 + $0x60] sm:$0xff]
        %v3869 = vld [vmem:[%s3855 + $0x68] sm:$0xff]
        %v3870 = vld [vmem:[%s3855 + $0x70] sm:$0xff]
        %v3871 = vld [vmem:[%s3855 + $0x78] sm:$0xff]
        %v3872 = vld [vmem:[%s3855 + $0x80] sm:$0xff]
        %v3873 = vld [vmem:[%s3855 + $0x88] sm:$0xff]
        %v3874 = vld [vmem:[%s3855 + $0x90] sm:$0xff]
        %v3875 = vld [vmem:[%s3855 + $0x98] sm:$0xff]
        %v3876 = vld [vmem:[%s3855 + $0xa0] sm:$0xff]
        %v3877 = vld [vmem:[%s3855 + $0xa8] sm:$0xff]
        %v3878 = vld [vmem:[%s3855 + $0xb0] sm:$0xff]
        %v3879 = vld [vmem:[%s3855 + $0xb8] sm:$0xff]
        %v3880 = vld [vmem:[%s3855 + $0xc0] sm:$0xff]
        %v3881 = vld [vmem:[%s3855 + $0xc8] sm:$0xff]
        %v3882 = vld [vmem:[%s3855 + $0xd0] sm:$0xff]
        %v3883 = vld [vmem:[%s3855 + $0xd8] sm:$0xff]
        %v3884 = vld [vmem:[%s3855 + $0xe0] sm:$0xff]
        %v3885 = vld [vmem:[%s3855 + $0xe8] sm:$0xff]
        %v3886 = vld [vmem:[%s3855 + $0xf0] sm:$0xff]
        %v3887 = vld [vmem:[%s3855 + $0xf8] sm:$0xff]
        %v3888 = vld [vmem:[%s3855 + $0x100] sm:$0xff]
        %v3889 = vld [vmem:[%s3855 + $0x108] sm:$0xff]
        %v3890 = vld [vmem:[%s3855 + $0x110] sm:$0xff]
        %v3891 = vld [vmem:[%s3855 + $0x118] sm:$0xff]
        %v3892 = vld [vmem:[%s3855 + $0x120] sm:$0xff]
        %v3893 = vld [vmem:[%s3855 + $0x128] sm:$0xff]
        %v3894 = vld [vmem:[%s3855 + $0x130] sm:$0xff]
        %v3895 = vld [vmem:[%s3855 + $0x138] sm:$0xff]
        %v3896 = vld [vmem:[%s3855 + $0x140] sm:$0xff]
        %v3897 = vld [vmem:[%s3855 + $0x148] sm:$0xff]
        %v3898 = vld [vmem:[%s3855 + $0x150] sm:$0xff]
        %v3899 = vld [vmem:[%s3855 + $0x158] sm:$0xff]
        %v3900 = vld [vmem:[%s3855 + $0x160] sm:$0xff]
        %v3901 = vld [vmem:[%s3855 + $0x168] sm:$0xff]
        %v3902 = vld [vmem:[%s3855 + $0x170] sm:$0xff]
        %v3903 = vld [vmem:[%s3855 + $0x178] sm:$0xff]
        %v3908 = vrot.slane %v3851, 4
        %v3909 = vrot.slane %v2893, 4
        %v3910 = vsel %vm577, %v3908, %v3909
        %v3911 = vrot.slane %v3852, 4
        %v3912 = vrot.slane %v2894, 4
        %v3913 = vsel %vm577, %v3911, %v3912
        %v3914 = vrot.slane %v2895, 4
        %v3915 = vsel %vm577, %v3909, %v3914
        %v3916 = vrot.slane %v2896, 4
        %v3917 = vsel %vm577, %v3912, %v3916
        %v3918 = vrot.slane %v2897, 4
        %v3919 = vsel %vm577, %v3914, %v3918
        %v3920 = vrot.slane %v2898, 4
        %v3921 = vsel %vm577, %v3916, %v3920
        %v3922 = vrot.slane %v2899, 4
        %v3923 = vsel %vm577, %v3918, %v3922
        %v3924 = vrot.slane %v2900, 4
        %v3925 = vsel %vm577, %v3920, %v3924
        %v3926 = vrot.slane %v3853, 4
        %v3927 = vsel %vm577, %v3922, %v3926
        %v3928 = vrot.slane %v3854, 4
        %v3929 = vsel %vm577, %v3924, %v3928
        %v3936 = vsel %vm2879, %v3913, 0
        %v3938 = vsel %vm2879, %v3917, 0
        %v3940 = vsel %vm2879, %v3921, 0
        %v3942 = vsel %vm2879, %v3925, 0
        %v3944 = vsel %vm2879, %v3929, 0
        %v3946 = vsel %vm2879, %v3928, 0
        %3948 = vmatpush.msra.mxu0 %v3886
        %3949 = vmatpush.msra.mxu0 %v3884
        %3950 = vmatpush.msra.mxu0 %v3882
        %3951 = vmatpush.msra.mxu0 %v3880
        %3952 = vmatpush.msra.mxu0 %v3878
        %3953 = vmatpush.msra.mxu0 %v3876
        %3954 = vmatpush.msra.mxu0 %v3874
        %3955 = vmatpush.msra.mxu0 %v3872
        %3956 = vmatpush.msra.mxu0 %v3870
        %3957 = vmatpush.msra.mxu0 %v3868
        %3958 = vmatpush.msra.mxu0 %v3866
        %3959 = vmatpush.msra.mxu0 %v3864
        %3960 = vmatpush.msra.mxu0 %v3862
        %3961 = vmatpush.msra.mxu0 %v3860
        %3962 = vmatpush.msra.mxu0 %v3858
        %3963 = vmatpush.msra.mxu0 %v3856
        %3964 = vmatmul.f32.gmra.mxu0 %v3910
        %v3965 = vpop.f32.mrf.mxu0
        %v3966 = vadd.f32 0.0, %v3965
        %3967 = vmatmul.f32.gmra.mxu0 %v3915
        %v3968 = vpop.f32.mrf.mxu0
        %v3969 = vadd.f32 0.0, %v3968
        %3970 = vmatmul.f32.gmra.mxu0 %v3919
        %v3971 = vpop.f32.mrf.mxu0
        %v3972 = vadd.f32 0.0, %v3971
        %3973 = vmatmul.f32.gmra.mxu0 %v3923
        %v3974 = vpop.f32.mrf.mxu0
        %v3975 = vadd.f32 0.0, %v3974
        %3976 = vmatmul.f32.gmra.mxu0 %v3927
        %v3977 = vpop.f32.mrf.mxu0
        %v3978 = vadd.f32 0.0, %v3977
        %3979 = vmatmul.f32.gmra.mxu0 %v3926
        %v3980 = vpop.f32.mrf.mxu0
        %v3981 = vadd.f32 0.0, %v3980
        %3982 = vdwg.mxu0
        %3983 = vmatpush.msra.mxu0 0.0
        %3984 = vmatpush.msra.mxu0 0.0
        %3985 = vmatpush.msra.mxu0 0.0
        %3986 = vmatpush.msra.mxu0 0.0
        %3987 = vmatpush.msra.mxu0 0.0
        %3988 = vmatpush.msra.mxu0 0.0
        %3989 = vmatpush.msra.mxu0 0.0
        %3990 = vmatpush.msra.mxu0 0.0
        %3991 = vmatpush.msra.mxu0 %v3902
        %3992 = vmatpush.msra.mxu0 %v3900
        %3993 = vmatpush.msra.mxu0 %v3898
        %3994 = vmatpush.msra.mxu0 %v3896
        %3995 = vmatpush.msra.mxu0 %v3894
        %3996 = vmatpush.msra.mxu0 %v3892
        %3997 = vmatpush.msra.mxu0 %v3890
        %3998 = vmatpush.msra.mxu0 %v3888
        %3999 = vmatmul.f32.gmra.mxu0 %v3936
        %v4000 = vpop.f32.mrf.mxu0
        %v4001 = vadd.f32 %v3966, %v4000
        %4002 = vmatmul.f32.gmra.mxu0 %v3938
        %v4003 = vpop.f32.mrf.mxu0
        %v4004 = vadd.f32 %v3969, %v4003
        %4005 = vmatmul.f32.gmra.mxu0 %v3940
        %v4006 = vpop.f32.mrf.mxu0
        %v4007 = vadd.f32 %v3972, %v4006
        %4008 = vmatmul.f32.gmra.mxu0 %v3942
        %v4009 = vpop.f32.mrf.mxu0
        %v4010 = vadd.f32 %v3975, %v4009
        %4011 = vmatmul.f32.gmra.mxu0 %v3944
        %v4012 = vpop.f32.mrf.mxu0
        %v4013 = vadd.f32 %v3978, %v4012
        %4014 = vmatmul.f32.gmra.mxu0 %v3946
        %v4015 = vpop.f32.mrf.mxu0
        %v4016 = vadd.f32 %v3981, %v4015
        %4017 = vdwg.mxu0
        %4018 = vmatpush.msra.mxu0 %v3887
        %4019 = vmatpush.msra.mxu0 %v3885
        %4020 = vmatpush.msra.mxu0 %v3883
        %4021 = vmatpush.msra.mxu0 %v3881
        %4022 = vmatpush.msra.mxu0 %v3879
        %4023 = vmatpush.msra.mxu0 %v3877
        %4024 = vmatpush.msra.mxu0 %v3875
        %4025 = vmatpush.msra.mxu0 %v3873
        %4026 = vmatpush.msra.mxu0 %v3871
        %4027 = vmatpush.msra.mxu0 %v3869
        %4028 = vmatpush.msra.mxu0 %v3867
        %4029 = vmatpush.msra.mxu0 %v3865
        %4030 = vmatpush.msra.mxu0 %v3863
        %4031 = vmatpush.msra.mxu0 %v3861
        %4032 = vmatpush.msra.mxu0 %v3859
        %4033 = vmatpush.msra.mxu0 %v3857
        %4034 = vmatmul.f32.gmra.mxu0 %v3910
        %v4035 = vpop.f32.mrf.mxu0
        %v4036 = vadd.f32 0.0, %v4035
        %4037 = vmatmul.f32.gmra.mxu0 %v3915
        %v4038 = vpop.f32.mrf.mxu0
        %v4039 = vadd.f32 0.0, %v4038
        %4040 = vmatmul.f32.gmra.mxu0 %v3919
        %v4041 = vpop.f32.mrf.mxu0
        %v4042 = vadd.f32 0.0, %v4041
        %4043 = vmatmul.f32.gmra.mxu0 %v3923
        %v4044 = vpop.f32.mrf.mxu0
        %v4045 = vadd.f32 0.0, %v4044
        %4046 = vmatmul.f32.gmra.mxu0 %v3927
        %v4047 = vpop.f32.mrf.mxu0
        %v4048 = vadd.f32 0.0, %v4047
        %4049 = vmatmul.f32.gmra.mxu0 %v3926
        %v4050 = vpop.f32.mrf.mxu0
        %v4051 = vadd.f32 0.0, %v4050
        %4052 = vdwg.mxu0
        %4053 = vmatpush.msra.mxu0 0.0
        %4054 = vmatpush.msra.mxu0 0.0
        %4055 = vmatpush.msra.mxu0 0.0
        %4056 = vmatpush.msra.mxu0 0.0
        %4057 = vmatpush.msra.mxu0 0.0
        %4058 = vmatpush.msra.mxu0 0.0
        %4059 = vmatpush.msra.mxu0 0.0
        %4060 = vmatpush.msra.mxu0 0.0
        %4061 = vmatpush.msra.mxu0 %v3903
        %4062 = vmatpush.msra.mxu0 %v3901
        %4063 = vmatpush.msra.mxu0 %v3899
        %4064 = vmatpush.msra.mxu0 %v3897
        %4065 = vmatpush.msra.mxu0 %v3895
        %4066 = vmatpush.msra.mxu0 %v3893
        %4067 = vmatpush.msra.mxu0 %v3891
        %4068 = vmatpush.msra.mxu0 %v3889
        %4069 = vmatmul.f32.gmra.mxu0 %v3936
        %v4070 = vpop.f32.mrf.mxu0
        %v4071 = vadd.f32 %v4036, %v4070
        %4072 = vmatmul.f32.gmra.mxu0 %v3938
        %v4073 = vpop.f32.mrf.mxu0
        %v4074 = vadd.f32 %v4039, %v4073
        %4075 = vmatmul.f32.gmra.mxu0 %v3940
        %v4076 = vpop.f32.mrf.mxu0
        %v4077 = vadd.f32 %v4042, %v4076
        %4078 = vmatmul.f32.gmra.mxu0 %v3942
        %v4079 = vpop.f32.mrf.mxu0
        %v4080 = vadd.f32 %v4045, %v4079
        %4081 = vmatmul.f32.gmra.mxu0 %v3944
        %v4082 = vpop.f32.mrf.mxu0
        %v4083 = vadd.f32 %v4048, %v4082
        %4084 = vmatmul.f32.gmra.mxu0 %v3946
        %v4085 = vpop.f32.mrf.mxu0
        %v4086 = vadd.f32 %v4051, %v4085
        %4087 = vdwg.mxu0
        %v4088 = vadd.f32 %v3839, %v4001
        %v4089 = vadd.f32 %v3840, %v4071
        %v4090 = vadd.f32 %v3841, %v4004
        %v4091 = vadd.f32 %v3842, %v4074
        %v4092 = vadd.f32 %v3843, %v4007
        %v4093 = vadd.f32 %v3844, %v4077
        %v4094 = vadd.f32 %v3845, %v4010
        %v4095 = vadd.f32 %v3846, %v4080
        %v4096 = vadd.f32 %v3847, %v4013
        %v4097 = vadd.f32 %v3848, %v4083
        %v4098 = vadd.f32 %v3849, %v4016
        %v4099 = vadd.f32 %v3850, %v4086
        %v4100 = vld [vmem:[%s8] sm:$0x3]
        %v4102 = vperm.slane %v4100, 0
        %v4103 = vperm.slane %v4100, 1
        %v4106 = vadd.f32 %v4088, %v4102
        %v4107 = vadd.f32 %v4089, %v4103
        %v4108 = vadd.f32 %v4090, %v4102
        %v4109 = vadd.f32 %v4091, %v4103
        %v4110 = vadd.f32 %v4092, %v4102
        %v4111 = vadd.f32 %v4093, %v4103
        %v4112 = vadd.f32 %v4094, %v4102
        %v4113 = vadd.f32 %v4095, %v4103
        %v4114 = vadd.f32 %v4096, %v4102
        %v4115 = vadd.f32 %v4097, %v4103
        %v4116 = vadd.f32 %v4098, %v4102
        %v4117 = vadd.f32 %v4099, %v4103
        %v4118 = vmax.f32 %v4106, 0.0
        %v4119 = vmax.f32 %v4107, 0.0
        %v4120 = vmax.f32 %v4108, 0.0
        %v4121 = vmax.f32 %v4109, 0.0
        %v4122 = vmax.f32 %v4110, 0.0
        %v4123 = vmax.f32 %v4111, 0.0
        %v4124 = vmax.f32 %v4112, 0.0
        %v4125 = vmax.f32 %v4113, 0.0
        %v4126 = vmax.f32 %v4114, 0.0
        %v4127 = vmax.f32 %v4115, 0.0
        %v4128 = vmax.f32 %v4116, 0.0
        %v4129 = vmax.f32 %v4117, 0.0
        %v4130 = vld [vmem:[#allocation5] sm:$0xff]
        %v4131 = vld [vmem:[#allocation5 + $0x8] sm:$0xff]
        %v4132 = vld [vmem:[#allocation5 + $0x10] sm:$0xff]
        %v4133 = vld [vmem:[#allocation5 + $0x18] sm:$0xff]
        %v4134 = vld [vmem:[#allocation5 + $0x20] sm:$0xff]
        %v4135 = vld [vmem:[#allocation5 + $0x28] sm:$0xff]
        %v4136 = vld [vmem:[#allocation5 + $0x30] sm:$0xff]
        %v4137 = vld [vmem:[#allocation5 + $0x38] sm:$0xff]
        %v4138 = vld [vmem:[#allocation5 + $0x40] sm:$0xff]
        %v4139 = vld [vmem:[#allocation5 + $0x48] sm:$0xff]
        %v4140 = vld [vmem:[#allocation5 + $0x50] sm:$0xff]
        %v4141 = vld [vmem:[#allocation5 + $0x58] sm:$0xff]
        %v4142 = vld [vmem:[#allocation5 + $0x60] sm:$0xff]
        %v4143 = vld [vmem:[#allocation5 + $0x68] sm:$0xff]
        %v4144 = vld [vmem:[#allocation5 + $0x70] sm:$0xff]
        %v4145 = vld [vmem:[#allocation5 + $0x78] sm:$0xff]
        %v4146 = vld [vmem:[#allocation5 + $0x80] sm:$0xff]
        %v4147 = vld [vmem:[#allocation5 + $0x88] sm:$0xff]
        %v4148 = vld [vmem:[#allocation5 + $0x90] sm:$0xff]
        %v4149 = vld [vmem:[#allocation5 + $0x98] sm:$0xff]
        %v4150 = vld [vmem:[#allocation5 + $0xa0] sm:$0xff]
        %v4151 = vld [vmem:[#allocation5 + $0xa8] sm:$0xff]
        %v4152 = vld [vmem:[#allocation5 + $0xb0] sm:$0xff]
        %v4153 = vld [vmem:[#allocation5 + $0xb8] sm:$0xff]
        %v4154 = vld [vmem:[#allocation5 + $0xc0] sm:$0xff]
        %v4155 = vld [vmem:[#allocation5 + $0xc8] sm:$0xff]
        %v4156 = vld [vmem:[#allocation5 + $0xd0] sm:$0xff]
        %v4157 = vld [vmem:[#allocation5 + $0xd8] sm:$0xff]
        %v4158 = vld [vmem:[#allocation5 + $0xe0] sm:$0xff]
        %v4159 = vld [vmem:[#allocation5 + $0xe8] sm:$0xff]
        %v4160 = vld [vmem:[#allocation5 + $0xf0] sm:$0xff]
        %v4161 = vld [vmem:[#allocation5 + $0xf8] sm:$0xff]
        %4162 = vmatpush.msra.mxu0 %v4145
        %4163 = vmatpush.msra.mxu0 %v4144
        %4164 = vmatpush.msra.mxu0 %v4143
        %4165 = vmatpush.msra.mxu0 %v4142
        %4166 = vmatpush.msra.mxu0 %v4141
        %4167 = vmatpush.msra.mxu0 %v4140
        %4168 = vmatpush.msra.mxu0 %v4139
        %4169 = vmatpush.msra.mxu0 %v4138
        %4170 = vmatpush.msra.mxu0 %v4137
        %4171 = vmatpush.msra.mxu0 %v4136
        %4172 = vmatpush.msra.mxu0 %v4135
        %4173 = vmatpush.msra.mxu0 %v4134
        %4174 = vmatpush.msra.mxu0 %v4133
        %4175 = vmatpush.msra.mxu0 %v4132
        %4176 = vmatpush.msra.mxu0 %v4131
        %4177 = vmatpush.msra.mxu0 %v4130
        %4178 = vmatmul.f32.gmra.mxu0 %v4118
        %v4179 = vpop.f32.mrf.mxu0
        %v4180 = vadd.f32 0.0, %v4179
        %4181 = vmatmul.f32.gmra.mxu0 %v4120
        %v4182 = vpop.f32.mrf.mxu0
        %v4183 = vadd.f32 0.0, %v4182
        %4184 = vmatmul.f32.gmra.mxu0 %v4122
        %v4185 = vpop.f32.mrf.mxu0
        %v4186 = vadd.f32 0.0, %v4185
        %4187 = vmatmul.f32.gmra.mxu0 %v4124
        %v4188 = vpop.f32.mrf.mxu0
        %v4189 = vadd.f32 0.0, %v4188
        %4190 = vmatmul.f32.gmra.mxu0 %v4126
        %v4191 = vpop.f32.mrf.mxu0
        %v4192 = vadd.f32 0.0, %v4191
        %4193 = vmatmul.f32.gmra.mxu0 %v4128
        %v4194 = vpop.f32.mrf.mxu0
        %v4195 = vadd.f32 0.0, %v4194
        %4196 = vdwg.mxu0
        %4197 = vmatpush.msra.mxu0 %v4161
        %4198 = vmatpush.msra.mxu0 %v4160
        %4199 = vmatpush.msra.mxu0 %v4159
        %4200 = vmatpush.msra.mxu0 %v4158
        %4201 = vmatpush.msra.mxu0 %v4157
        %4202 = vmatpush.msra.mxu0 %v4156
        %4203 = vmatpush.msra.mxu0 %v4155
        %4204 = vmatpush.msra.mxu0 %v4154
        %4205 = vmatpush.msra.mxu0 %v4153
        %4206 = vmatpush.msra.mxu0 %v4152
        %4207 = vmatpush.msra.mxu0 %v4151
        %4208 = vmatpush.msra.mxu0 %v4150
        %4209 = vmatpush.msra.mxu0 %v4149
        %4210 = vmatpush.msra.mxu0 %v4148
        %4211 = vmatpush.msra.mxu0 %v4147
        %4212 = vmatpush.msra.mxu0 %v4146
        %4213 = vmatmul.f32.gmra.mxu0 %v4119
        %v4214 = vpop.f32.mrf.mxu0
        %v4215 = vadd.f32 %v4180, %v4214
        %4216 = vmatmul.f32.gmra.mxu0 %v4121
        %v4217 = vpop.f32.mrf.mxu0
        %v4218 = vadd.f32 %v4183, %v4217
        %4219 = vmatmul.f32.gmra.mxu0 %v4123
        %v4220 = vpop.f32.mrf.mxu0
        %v4221 = vadd.f32 %v4186, %v4220
        %4222 = vmatmul.f32.gmra.mxu0 %v4125
        %v4223 = vpop.f32.mrf.mxu0
        %v4224 = vadd.f32 %v4189, %v4223
        %4225 = vmatmul.f32.gmra.mxu0 %v4127
        %v4226 = vpop.f32.mrf.mxu0
        %v4227 = vadd.f32 %v4192, %v4226
        %4228 = vmatmul.f32.gmra.mxu0 %v4129
        %v4229 = vpop.f32.mrf.mxu0
        %v4230 = vadd.f32 %v4195, %v4229
        %4231 = vdwg.mxu0
        %v4232 = vld [vmem:[#allocation7] sm:$0xff]
        %v4233 = vld [vmem:[#allocation7 + $0x8] sm:$0xff]
        %v4234 = vld [vmem:[#allocation7 + $0x10] sm:$0xff]
        %v4235 = vld [vmem:[#allocation7 + $0x18] sm:$0xff]
        %v4236 = vld [vmem:[#allocation7 + $0x20] sm:$0xff]
        %v4237 = vld [vmem:[#allocation7 + $0x28] sm:$0xff]
        %v4238 = vld [vmem:[#allocation7 + $0x30] sm:$0xff]
        %v4239 = vld [vmem:[#allocation7 + $0x38] sm:$0xff]
        %v4240 = vld [vmem:[#allocation7 + $0x40] sm:$0xff]
        %v4241 = vld [vmem:[#allocation7 + $0x48] sm:$0xff]
        %v4242 = vld [vmem:[#allocation7 + $0x50] sm:$0xff]
        %v4243 = vld [vmem:[#allocation7 + $0x58] sm:$0xff]
        %v4244 = vld [vmem:[#allocation7 + $0x60] sm:$0xff]
        %v4245 = vld [vmem:[#allocation7 + $0x68] sm:$0xff]
        %v4246 = vld [vmem:[#allocation7 + $0x70] sm:$0xff]
        %v4247 = vld [vmem:[#allocation7 + $0x78] sm:$0xff]
        %v4248 = vld [vmem:[#allocation7 + $0x80] sm:$0xff]
        %v4249 = vld [vmem:[#allocation7 + $0x88] sm:$0xff]
        %v4250 = vld [vmem:[#allocation7 + $0x90] sm:$0xff]
        %v4251 = vld [vmem:[#allocation7 + $0x98] sm:$0xff]
        %v4252 = vld [vmem:[#allocation7 + $0xa0] sm:$0xff]
        %v4253 = vld [vmem:[#allocation7 + $0xa8] sm:$0xff]
        %v4254 = vld [vmem:[#allocation7 + $0xb0] sm:$0xff]
        %v4255 = vld [vmem:[#allocation7 + $0xb8] sm:$0xff]
        %v4256 = vld [vmem:[#allocation7 + $0xc0] sm:$0xff]
        %v4257 = vld [vmem:[#allocation7 + $0xc8] sm:$0xff]
        %v4258 = vld [vmem:[#allocation7 + $0xd0] sm:$0xff]
        %v4259 = vld [vmem:[#allocation7 + $0xd8] sm:$0xff]
        %v4260 = vld [vmem:[#allocation7 + $0xe0] sm:$0xff]
        %v4261 = vld [vmem:[#allocation7 + $0xe8] sm:$0xff]
        %v4262 = vld [vmem:[#allocation7 + $0xf0] sm:$0xff]
        %v4263 = vld [vmem:[#allocation7 + $0xf8] sm:$0xff]
        %4264 = vmatpush.msra.mxu0 %v4247
        %4265 = vmatpush.msra.mxu0 %v4246
        %4266 = vmatpush.msra.mxu0 %v4245
        %4267 = vmatpush.msra.mxu0 %v4244
        %4268 = vmatpush.msra.mxu0 %v4243
        %4269 = vmatpush.msra.mxu0 %v4242
        %4270 = vmatpush.msra.mxu0 %v4241
        %4271 = vmatpush.msra.mxu0 %v4240
        %4272 = vmatpush.msra.mxu0 %v4239
        %4273 = vmatpush.msra.mxu0 %v4238
        %4274 = vmatpush.msra.mxu0 %v4237
        %4275 = vmatpush.msra.mxu0 %v4236
        %4276 = vmatpush.msra.mxu0 %v4235
        %4277 = vmatpush.msra.mxu0 %v4234
        %4278 = vmatpush.msra.mxu0 %v4233
        %4279 = vmatpush.msra.mxu0 %v4232
        %4280 = vmatmul.f32.gmra.mxu0 %v4118
        %v4281 = vpop.f32.mrf.mxu0
        %v4282 = vadd.f32 0.0, %v4281
        %4283 = vmatmul.f32.gmra.mxu0 %v4120
        %v4284 = vpop.f32.mrf.mxu0
        %v4285 = vadd.f32 0.0, %v4284
        %4286 = vmatmul.f32.gmra.mxu0 %v4122
        %v4287 = vpop.f32.mrf.mxu0
        %v4288 = vadd.f32 0.0, %v4287
        %4289 = vmatmul.f32.gmra.mxu0 %v4124
        %v4290 = vpop.f32.mrf.mxu0
        %v4291 = vadd.f32 0.0, %v4290
        %4292 = vmatmul.f32.gmra.mxu0 %v4126
        %v4293 = vpop.f32.mrf.mxu0
        %v4294 = vadd.f32 0.0, %v4293
        %4295 = vmatmul.f32.gmra.mxu0 %v4128
        %v4296 = vpop.f32.mrf.mxu0
        %v4297 = vadd.f32 0.0, %v4296
        %4298 = vdwg.mxu0
        %4299 = vmatpush.msra.mxu0 %v4263
        %4300 = vmatpush.msra.mxu0 %v4262
        %4301 = vmatpush.msra.mxu0 %v4261
        %4302 = vmatpush.msra.mxu0 %v4260
        %4303 = vmatpush.msra.mxu0 %v4259
        %4304 = vmatpush.msra.mxu0 %v4258
        %4305 = vmatpush.msra.mxu0 %v4257
        %4306 = vmatpush.msra.mxu0 %v4256
        %4307 = vmatpush.msra.mxu0 %v4255
        %4308 = vmatpush.msra.mxu0 %v4254
        %4309 = vmatpush.msra.mxu0 %v4253
        %4310 = vmatpush.msra.mxu0 %v4252
        %4311 = vmatpush.msra.mxu0 %v4251
        %4312 = vmatpush.msra.mxu0 %v4250
        %4313 = vmatpush.msra.mxu0 %v4249
        %4314 = vmatpush.msra.mxu0 %v4248
        %4315 = vmatmul.f32.gmra.mxu0 %v4119
        %v4316 = vpop.f32.mrf.mxu0
        %v4317 = vadd.f32 %v4282, %v4316
        %4318 = vmatmul.f32.gmra.mxu0 %v4121
        %v4319 = vpop.f32.mrf.mxu0
        %v4320 = vadd.f32 %v4285, %v4319
        %4321 = vmatmul.f32.gmra.mxu0 %v4123
        %v4322 = vpop.f32.mrf.mxu0
        %v4323 = vadd.f32 %v4288, %v4322
        %4324 = vmatmul.f32.gmra.mxu0 %v4125
        %v4325 = vpop.f32.mrf.mxu0
        %v4326 = vadd.f32 %v4291, %v4325
        %4327 = vmatmul.f32.gmra.mxu0 %v4127
        %v4328 = vpop.f32.mrf.mxu0
        %v4329 = vadd.f32 %v4294, %v4328
        %4330 = vmatmul.f32.gmra.mxu0 %v4129
        %v4331 = vpop.f32.mrf.mxu0
        %v4332 = vadd.f32 %v4297, %v4331
        %4333 = vdwg.mxu0
        %v4334 = vmax.f32 %v4215, %v4317
        %v4335 = vmax.f32 %v4218, %v4320
        %v4336 = vmax.f32 %v4221, %v4323
        %v4337 = vmax.f32 %v4224, %v4326
        %v4338 = vmax.f32 %v4227, %v4329
        %v4339 = vmax.f32 %v4230, %v4332
        %v4340 = vld [vmem:[%s11] sm:$0xff]
        %v4341 = vld [vmem:[%s11 + $0x8] sm:$0xff]
        %v4342 = vld [vmem:[%s11 + $0x10] sm:$0x3f]
        %vm4343 = vcmask 359424
        %v4345 = vsel %vm4343, %v4340, 0
        %v4348 = vsel %vm4343, %v4341, 0
        %v4351 = vsel %vm4343, %v4342, 0
        %v4354 = vsel %vm577, %v4339, 0
        %4356 = vmatpush.msra.mxu0 0.0
        %4357 = vmatpush.msra.mxu0 0.0
        %4358 = vmatpush.msra.mxu0 0.0
        %4359 = vmatpush.msra.mxu0 0.0
        %4360 = vmatpush.msra.mxu0 0.0
        %4361 = vmatpush.msra.mxu0 0.0
        %4362 = vmatpush.msra.mxu0 0.0
        %4363 = vmatpush.msra.mxu0 0.0
        %4364 = vmatpush.msra.mxu0 0.0
        %4365 = vmatpush.msra.mxu0 0.0
        %4366 = vmatpush.msra.mxu0 %v4354
        %4367 = vmatpush.msra.mxu0 %v4338
        %4368 = vmatpush.msra.mxu0 %v4337
        %4369 = vmatpush.msra.mxu0 %v4336
        %4370 = vmatpush.msra.mxu0 %v4335
        %4371 = vmatpush.msra.mxu0 %v4334
        %4372 = vmatmul.f32.gmra.mxu0 %v4345
        %v4373 = vpop.f32.mrf.mxu0
        %v4374 = vadd.f32 0.0, %v4373
        %4375 = vmatmul.f32.gmra.mxu0 %v4348
        %v4376 = vpop.f32.mrf.mxu0
        %v4377 = vadd.f32 0.0, %v4376
        %4378 = vmatmul.f32.gmra.mxu0 %v4351
        %v4379 = vpop.f32.mrf.mxu0
        %v4380 = vadd.f32 0.0, %v4379
        %4381 = vdwg.mxu0
        %v4382 = vld [vmem:[%s12] sm:$0xff]
        %v4383 = vld [vmem:[%s12 + $0x8] sm:$0xff]
        %v4384 = vld [vmem:[%s12 + $0x10] sm:$0x3f]
        %v4386 = vsel %vm4343, %v4382, 0
        %v4389 = vsel %vm4343, %v4383, 0
        %v4392 = vsel %vm4343, %v4384, 0
        %4394 = vmatpush.msra.mxu0 0.0
        %4395 = vmatpush.msra.mxu0 0.0
        %4396 = vmatpush.msra.mxu0 0.0
        %4397 = vmatpush.msra.mxu0 0.0
        %4398 = vmatpush.msra.mxu0 0.0
        %4399 = vmatpush.msra.mxu0 0.0
        %4400 = vmatpush.msra.mxu0 0.0
        %4401 = vmatpush.msra.mxu0 0.0
        %4402 = vmatpush.msra.mxu0 0.0
        %4403 = vmatpush.msra.mxu0 0.0
        %4404 = vmatpush.msra.mxu0 %v4354
        %4405 = vmatpush.msra.mxu0 %v4338
        %4406 = vmatpush.msra.mxu0 %v4337
        %4407 = vmatpush.msra.mxu0 %v4336
        %4408 = vmatpush.msra.mxu0 %v4335
        %4409 = vmatpush.msra.mxu0 %v4334
        %4410 = vmatmul.f32.gmra.mxu0 %v4386
        %v4411 = vpop.f32.mrf.mxu0
        %v4412 = vadd.f32 0.0, %v4411
        %4413 = vmatmul.f32.gmra.mxu0 %v4389
        %v4414 = vpop.f32.mrf.mxu0
        %v4415 = vadd.f32 0.0, %v4414
        %4416 = vmatmul.f32.gmra.mxu0 %v4392
        %v4417 = vpop.f32.mrf.mxu0
        %v4418 = vadd.f32 0.0, %v4417
        %4419 = vdwg.mxu0
        %v4420 = vmax.f32 %v4374, %v4412
        %v4421 = vmax.f32 %v4377, %v4415
        %v4422 = vmax.f32 %v4380, %v4418
        %4423 = vst [vmem:[%s490] sm:$0xff] %v4420
        %4424 = vst [vmem:[%s490 + $0x8] sm:$0xff] %v4421
        %4425 = vst [vmem:[%s490 + $0x10] sm:$0x3f] %v4422
        %p4426 = scmp.lt.s32.totalorder %s26, 1
        %s4427 = scalar_select %p4426, %s26, 1
        %s4428 = smul.addr %s4427, 3
        %s4429 = smul.addr %s4428, 8
        %s4430 = scalar_lea.vmem %s13, %s4429
        // Predicated region
        $region85: #{my_cnn_forward.2} parent=71 // pred_check
          %p4431 = pneg %p322
        $region86: #{my_cnn_forward.2} parent=71 // pred_check_branch
          %4433 = sbr.rel (%p4431) target = $region88
        $region87: #{my_cnn_forward.2} parent=71 // pred_region
          _
        $region88: #{my_cnn_forward.2} parent=71 // pred_fallthru
          _
      $region72: #{my_cnn_forward.2} parent=5 // pred_fallthru
        _
      %p4434 = scmp.le.s32.totalorder 2, %s21
      // Predicated region
      $region89: #{my_cnn_forward.2} parent=5 // pred_check
        %p4435 = pneg %p4434
      $region90: #{my_cnn_forward.2} parent=5 // pred_check_branch
        %4437 = sbr.rel (%p4435) target = $region92
      $region91: #{my_cnn_forward.2} parent=5 // pred_region
        %s4438 = ssub.s32 %s21, 2
        // Predicated region
        $region93: #{my_cnn_forward.2} parent=91 // pred_check
          %p4439 = pneg %p328
        $region94: #{my_cnn_forward.2} parent=91 // pred_check_branch
          %4441 = sbr.rel (%p4439) target = $region96
        $region95: #{my_cnn_forward.2} parent=91 // pred_region
          %p4442 = scmp.lt.s32.totalorder %s27, 1
          %s4443 = scalar_select %p4442, %s27, 1
          %s4444 = smul.addr %s4443, 3
          %s4445 = smul.addr %s4444, 8
          %s4446 = scalar_lea.vmem %s13, %s4445
        $region96: #{my_cnn_forward.2} parent=91 // pred_fallthru
          _
      $region92: #{my_cnn_forward.2} parent=5 // pred_fallthru
        _
    $region6: #{my_cnn_forward.2} parent=1 // loop_footer
      %s25 = sadd.s32 1, %s21
    $region7: #{my_cnn_forward.2} parent=1 // loop_footer_branch
      %20 = sbr.rel target = $region3
    $region8: #{my_cnn_forward.2} parent=1 // loop_exit
      _
    %4447 = vsyncpa [#allocation4], 1
    %s4448 = scalar_lea.sflag [#allocation4], 1
    %4449 = vsyncpa %s4448, 1
    %4450 = vsyncpa [#allocation6], 1

</llo_original>
